<compile_context>
chip_gen: v6e
topology: v6e:2x2x1
jax: 0.10.0
libtpu: 0.0.40
codegen_flags: <defaults>
</compile_context>

<pallas_src>
import math
import jax
import jax.numpy as jnp
from jax.experimental import pallas as pl
from jax.experimental.pallas import tpu as pltpu

D_MODEL = 32
N_HEADS = 4
D_K = D_MODEL // N_HEADS
D_FF = 64
N_LAYERS = 2
EPS = 1e-5


def _tensorcores_per_device() -> int:
    """Best-effort count of fused TensorCores behind one JAX device (megacore)."""
    try:
        kind = jax.devices()[0].device_kind.lower()
    except Exception:
        return 1
    # v4 / v5p are megacore; v7x has 2 TCs per chip.  v5e/v6e/v2/v3 -> 1.
    if any(tag in kind for tag in ("v4", "v5p", "7")):
        return 2
    return 1


def pack_params(layer_params, norm_gamma, norm_beta):
    """Stack per-layer parameters into a handful of tensors (fewer DMA refs)."""
    wq = jnp.stack([p[0] for p in layer_params])   # (N, D, D)
    wk = jnp.stack([p[2] for p in layer_params])   # (N, D, D)
    wv = jnp.stack([p[4] for p in layer_params])   # (N, D, D)
    wo = jnp.stack([p[6] for p in layer_params])   # (N, D, D)
    w1 = jnp.stack([p[8] for p in layer_params])   # (N, D, D_FF)
    w2 = jnp.stack([p[10] for p in layer_params])  # (N, D_FF, D)

    rows = []
    for (Wq, bq, Wk, bk, Wv, bv, Wo, bo, W1, b1, W2, b2, g1, be1, g2, be2) in layer_params:
        rows += [bq, bk, bv, bo, b2, g1, be1, g2, be2]   # 9 rows of (1, D) per layer
    rows += [norm_gamma, norm_beta]                      # final Decoder LayerNorm
    vecD = jnp.concatenate(rows, axis=0)                 # (9N+2, D)
    vecF = jnp.concatenate([p[9] for p in layer_params], axis=0)   # (N, D_FF) = b1 rows
    return wq, wk, wv, wo, w1, w2, vecD, vecF


def decoder_forward(x, m, layer_params, norm_gamma, norm_beta):
    B, Sq, D = x.shape
    _, Sk, _ = m.shape
    n_layers = len(layer_params)
    H, Dk = N_HEADS, D_K
    assert D == D_MODEL and n_layers >= 1

    # Megacore sharding: split the batch across TensorCores where there are 2 of
    # them; otherwise keep the whole problem in a single grid step.
    tc = _tensorcores_per_device()
    G = tc if (tc > 1 and B % tc == 0) else 1
    Bg = B // G

    x2 = x.reshape(B * Sq, D)           # flatten batch: one matmul over all rows
    m2 = m.reshape(B * Sk, D)
    # head selection mask (H, D): mask[h, d] = 1 iff lane d belongs to head h.
    headmask = (jnp.arange(D, dtype=jnp.int32)[None, :] // Dk
                == jnp.arange(H, dtype=jnp.int32)[:, None]).astype(jnp.float32)

    wq_s, wk_s, wv_s, wo_s, w1_s, w2_s, vecD, vecF = pack_params(
        layer_params, norm_gamma, norm_beta)
    nrows = vecD.shape[0]
    scale = 1.0 / math.sqrt(Dk)

    def kernel(x_ref, m_ref, mask_ref, wq_ref, wk_ref, wv_ref, wo_ref,
               w1_ref, w2_ref, vecD_ref, vecF_ref, out_ref, attn_ref):

        def row(ref, i):                   # (1, width) static row of a bias/LN slab
            return ref[i:i + 1, :]

        def layernorm(t, g, b):
            n = t.shape[-1]
            mean = jnp.mean(t, axis=-1, keepdims=True)
            var = jnp.sum((t - mean) ** 2, axis=-1, keepdims=True) / (n - 1)
            return g * (t - mean) / (jnp.sqrt(var) + EPS) + b   # torch (std + eps)

        xr = x_ref[...]                    # (Bg*Sq, D)
        mr = m_ref[...]                    # (Bg*Sk, D)
        mask4 = mask_ref[...][None, :, None, :]   # (1, H, 1, D)

        p4 = None
        # TODO(synk): for deep stacks move this static unroll onto an "arbitrary"
        # grid axis (residual carried in VMEM scratch) so per-layer weights stream.
        for l in range(n_layers):          # static unroll (N=2)
            wq, wk, wv, wo = wq_ref[l], wk_ref[l], wv_ref[l], wo_ref[l]
            w1, w2 = w1_ref[l], w2_ref[l]
            r = 9 * l
            bq, bk, bv = row(vecD_ref, r + 0), row(vecD_ref, r + 1), row(vecD_ref, r + 2)
            bo, b2 = row(vecD_ref, r + 3), row(vecD_ref, r + 4)
            ln1g, ln1b = row(vecD_ref, r + 5), row(vecD_ref, r + 6)
            ln2g, ln2b = row(vecD_ref, r + 7), row(vecD_ref, r + 8)
            b1 = row(vecF_ref, l)

            # ---- sublayer 0: x + src_attn(LN(x), m, m) ----
            xn = layernorm(xr, ln1g, ln1b)
            q = jnp.dot(xn, wq, preferred_element_type=jnp.float32) + bq   # (Bg*Sq, D)
            k = jnp.dot(mr, wk, preferred_element_type=jnp.float32) + bk   # (Bg*Sk, D)
            v = jnp.dot(mr, wv, preferred_element_type=jnp.float32) + bv   # (Bg*Sk, D)

            q3 = q.reshape(Bg, Sq, D)      # leading-dim splits only (cheap)
            k3 = k.reshape(Bg, Sk, D)
            v3 = v.reshape(Bg, Sk, D)

            # Per-head scores WITHOUT lane slicing: zero the lanes outside each
            # head on Q (mask along the contraction axis), merge (h, q) into one
            # fat row dim, and run plain 3-D batched matmuls.
            qm = (q3[:, None, :, :] * mask4).reshape(Bg, H * Sq, D)        # (Bg, H*Sq, D)
            s = jnp.einsum('bqd,bkd->bqk', qm, k3,
                           preferred_element_type=jnp.float32) * scale     # (Bg, H*Sq, Sk)
            s = s - jnp.max(s, axis=-1, keepdims=True)
            e = jnp.exp(s)
            p = e / jnp.sum(e, axis=-1, keepdims=True)                      # exact softmax

            ctxh = jnp.einsum('bqk,bkd->bqd', p, v3,
                              preferred_element_type=jnp.float32)           # (Bg, H*Sq, D)
            # keep only head-h's output lanes and combine the heads (mask lanes
            # are disjoint, so the sum over h is the per-head concatenation).
            ctx = jnp.sum(ctxh.reshape(Bg, H, Sq, D) * mask4, axis=1)        # (Bg, Sq, D)
            ctx = ctx.reshape(Bg * Sq, D)
            xr = xr + jnp.dot(ctx, wo, preferred_element_type=jnp.float32) + bo
            p4 = p.reshape(Bg, H, Sq, Sk)   # last layer's attention probabilities

            # ---- sublayer 1: x + FeedForward(LN(x)) ----
            xn2 = layernorm(xr, ln2g, ln2b)
            h1 = jnp.maximum(
                jnp.dot(xn2, w1, preferred_element_type=jnp.float32) + b1, 0.0)
            xr = xr + jnp.dot(h1, w2, preferred_element_type=jnp.float32) + b2

        # ---- final Decoder LayerNorm ----
        out_ref[...] = layernorm(xr, row(vecD_ref, 9 * n_layers),
                                 row(vecD_ref, 9 * n_layers + 1))
        attn_ref[...] = p4

    in_specs = [
        pl.BlockSpec((Bg * Sq, D), lambda g: (g, 0)),            # x2 (per batch group)
        pl.BlockSpec((Bg * Sk, D), lambda g: (g, 0)),            # m2 (per batch group)
        pl.BlockSpec((H, D), lambda g: (0, 0)),                  # head mask
        pl.BlockSpec((n_layers, D, D), lambda g: (0, 0, 0)),     # Wq stack
        pl.BlockSpec((n_layers, D, D), lambda g: (0, 0, 0)),     # Wk stack
        pl.BlockSpec((n_layers, D, D), lambda g: (0, 0, 0)),     # Wv stack
        pl.BlockSpec((n_layers, D, D), lambda g: (0, 0, 0)),     # Wo stack
        pl.BlockSpec((n_layers, D, D_FF), lambda g: (0, 0, 0)),  # W1 stack
        pl.BlockSpec((n_layers, D_FF, D), lambda g: (0, 0, 0)),  # W2 stack
        pl.BlockSpec((nrows, D), lambda g: (0, 0)),              # bias / LN slab (D wide)
        pl.BlockSpec((n_layers, D_FF), lambda g: (0, 0)),        # b1 slab (D_FF wide)
    ]
    out_specs = [
        pl.BlockSpec((Bg * Sq, D), lambda g: (g, 0)),
        pl.BlockSpec((Bg, H, Sq, Sk), lambda g: (g, 0, 0, 0)),
    ]
    out_shape = [
        jax.ShapeDtypeStruct((B * Sq, D), jnp.float32),
        jax.ShapeDtypeStruct((B, H, Sq, Sk), jnp.float32),
    ]

    # NOTE: at real sequence lengths, tile Sq/Sk through the grid (double-buffered
    # BlockSpecs) and set vmem_limit_bytes; at this toy size everything fits.
    out, attn = pl.pallas_call(
        kernel,
        out_shape=out_shape,
        grid_spec=pltpu.PrefetchScalarGridSpec(
            num_scalar_prefetch=0,
            grid=(G,),
            in_specs=in_specs,
            out_specs=out_specs,
        ),
        compiler_params=pltpu.CompilerParams(dimension_semantics=("parallel",)),
    )(x2, m2, headmask, wq_s, wk_s, wv_s, wo_s, w1_s, w2_s, vecD, vecF)

    return out.reshape(B, Sq, D), attn


def reference(x, m, layer_params, norm_gamma, norm_beta):
    def ln(t, g, b):
        mean = t.mean(-1, keepdims=True)
        var = ((t - mean) ** 2).sum(-1, keepdims=True) / (t.shape[-1] - 1)
        return g * (t - mean) / (jnp.sqrt(var) + EPS) + b

    B, Sq, D = x.shape
    Sk = m.shape[1]
    p = None
    for (wq, bq, wk, bk, wv, bv, wo, bo, w1, b1, w2, b2, g1, be1, g2, be2) in layer_params:
        xn = ln(x, g1, be1)
        q = (xn @ wq + bq).reshape(B, Sq, N_HEADS, D_K).transpose(0, 2, 1, 3)
        k = (m @ wk + bk).reshape(B, Sk, N_HEADS, D_K).transpose(0, 2, 1, 3)
        v = (m @ wv + bv).reshape(B, Sk, N_HEADS, D_K).transpose(0, 2, 1, 3)
        s = jnp.einsum('bhqd,bhkd->bhqk', q, k) / math.sqrt(D_K)
        p = jax.nn.softmax(s, axis=-1)
        ctx = jnp.einsum('bhqk,bhkd->bhqd', p, v).transpose(0, 2, 1, 3).reshape(B, Sq, D)
        x = x + ctx @ wo + bo
        xn2 = ln(x, g2, be2)
        x = x + jnp.maximum(xn2 @ w1 + b1, 0.0) @ w2 + b2
    return ln(x, norm_gamma, norm_beta), p


if __name__ == "__main__":
    key = jax.random.PRNGKey(0)
    kx, km, kp, kg, kb = jax.random.split(key, 5)

    B, Sq, Sk = 2, 8, 8
    x = jax.random.normal(kx, (B, Sq, D_MODEL), jnp.float32)
    m = jax.random.normal(km, (B, Sk, D_MODEL), jnp.float32)

    def w(k, shape, scale=0.1):
        return scale * jax.random.normal(k, shape, jnp.float32)

    layer_params = []
    for lk in jax.random.split(kp, N_LAYERS):
        ks = jax.random.split(lk, 16)
        layer_params.append((
            w(ks[0], (D_MODEL, D_MODEL)), w(ks[1], (1, D_MODEL)),      # Wq, bq
            w(ks[2], (D_MODEL, D_MODEL)), w(ks[3], (1, D_MODEL)),      # Wk, bk
            w(ks[4], (D_MODEL, D_MODEL)), w(ks[5], (1, D_MODEL)),      # Wv, bv
            w(ks[6], (D_MODEL, D_MODEL)), w(ks[7], (1, D_MODEL)),      # Wo, bo
            w(ks[8], (D_MODEL, D_FF)),    w(ks[9], (1, D_FF)),         # FF W1, b1
            w(ks[10], (D_FF, D_MODEL)),   w(ks[11], (1, D_MODEL)),     # FF W2, b2
            1.0 + w(ks[12], (1, D_MODEL)), w(ks[13], (1, D_MODEL)),    # LN1 gamma, beta
            1.0 + w(ks[14], (1, D_MODEL)), w(ks[15], (1, D_MODEL)),    # LN2 gamma, beta
        ))
    norm_gamma = 1.0 + w(kg, (1, D_MODEL))                             # final Decoder LN
    norm_beta = w(kb, (1, D_MODEL))

    out, attn = decoder_forward(x, m, layer_params, norm_gamma, norm_beta)
    jax.block_until_ready((out, attn))

    ref_out, ref_attn = reference(x, m, layer_params, norm_gamma, norm_beta)
    assert jnp.allclose(out, ref_out, atol=1e-3, rtol=1e-3), "output mismatch"
    assert jnp.allclose(attn, ref_attn, atol=1e-3, rtol=1e-3), "attn mismatch"

    print("KERNEL_OK")
</pallas_src>

<mosaic_0001>
module attributes {stable_mosaic.version = 11 : i64} {
  func.func @kernel(%arg0: i32, %arg1: memref<16x32xf32, #tpu.memory_space<vmem>>, %arg2: memref<16x32xf32, #tpu.memory_space<vmem>>, %arg3: memref<4x32xf32, #tpu.memory_space<vmem>>, %arg4: memref<2x32x32xf32, #tpu.memory_space<vmem>>, %arg5: memref<2x32x32xf32, #tpu.memory_space<vmem>>, %arg6: memref<2x32x32xf32, #tpu.memory_space<vmem>>, %arg7: memref<2x32x32xf32, #tpu.memory_space<vmem>>, %arg8: memref<2x32x64xf32, #tpu.memory_space<vmem>>, %arg9: memref<2x64x32xf32, #tpu.memory_space<vmem>>, %arg10: memref<20x32xf32, #tpu.memory_space<vmem>>, %arg11: memref<2x64xf32, #tpu.memory_space<vmem>>, %arg12: memref<16x32xf32, #tpu.memory_space<vmem>>, %arg13: memref<2x4x8x8xf32, #tpu.memory_space<vmem>>) attributes {dimension_semantics = [#tpu.dimension_semantics<parallel>], iteration_bounds = array<i64: 1>, scalar_prefetch = 0 : i64, scratch_operands = 0 : i64, tpu.core_type = #tpu.core_type<tc>, window_params = [{transform_indices = @transform_0, window_bounds = array<i64: 16, 32>}, {transform_indices = @transform_1, window_bounds = array<i64: 16, 32>}, {pipeline_mode = #tpu.pipeline_mode<synchronous>, transform_indices = @transform_2, window_bounds = array<i64: 4, 32>}, {pipeline_mode = #tpu.pipeline_mode<synchronous>, transform_indices = @transform_3, window_bounds = array<i64: 2, 32, 32>}, {pipeline_mode = #tpu.pipeline_mode<synchronous>, transform_indices = @transform_4, window_bounds = array<i64: 2, 32, 32>}, {pipeline_mode = #tpu.pipeline_mode<synchronous>, transform_indices = @transform_5, window_bounds = array<i64: 2, 32, 32>}, {pipeline_mode = #tpu.pipeline_mode<synchronous>, transform_indices = @transform_6, window_bounds = array<i64: 2, 32, 32>}, {pipeline_mode = #tpu.pipeline_mode<synchronous>, transform_indices = @transform_7, window_bounds = array<i64: 2, 32, 64>}, {pipeline_mode = #tpu.pipeline_mode<synchronous>, transform_indices = @transform_8, window_bounds = array<i64: 2, 64, 32>}, {pipeline_mode = #tpu.pipeline_mode<synchronous>, transform_indices = @transform_9, window_bounds = array<i64: 20, 32>}, {pipeline_mode = #tpu.pipeline_mode<synchronous>, transform_indices = @transform_10, window_bounds = array<i64: 2, 64>}, {transform_indices = @transform_11, window_bounds = array<i64: 16, 32>}, {transform_indices = @transform_12, window_bounds = array<i64: 2, 4, 8, 8>}]} {
    %c0 = arith.constant 0 : index
    %c0_0 = arith.constant 0 : index
    %0 = vector.load %arg1[%c0, %c0_0] : memref<16x32xf32, #tpu.memory_space<vmem>>, vector<16x32xf32>
    %c0_1 = arith.constant 0 : index
    %c0_2 = arith.constant 0 : index
    %1 = vector.load %arg2[%c0_1, %c0_2] : memref<16x32xf32, #tpu.memory_space<vmem>>, vector<16x32xf32>
    %c0_3 = arith.constant 0 : index
    %c0_4 = arith.constant 0 : index
    %2 = vector.load %arg3[%c0_3, %c0_4] : memref<4x32xf32, #tpu.memory_space<vmem>>, vector<4x32xf32>
    %3 = vector.shape_cast %2 : vector<4x32xf32> to vector<1x4x1x32xf32>
    %c0_5 = arith.constant 0 : index
    %c0_6 = arith.constant 0 : index
    %c0_7 = arith.constant 0 : index
    %4 = vector.load %arg4[%c0_5, %c0_6, %c0_7] : memref<2x32x32xf32, #tpu.memory_space<vmem>>, vector<1x32x32xf32>
    %5 = vector.shape_cast %4 : vector<1x32x32xf32> to vector<32x32xf32>
    %c0_8 = arith.constant 0 : index
    %c0_9 = arith.constant 0 : index
    %c0_10 = arith.constant 0 : index
    %6 = vector.load %arg5[%c0_8, %c0_9, %c0_10] : memref<2x32x32xf32, #tpu.memory_space<vmem>>, vector<1x32x32xf32>
    %7 = vector.shape_cast %6 : vector<1x32x32xf32> to vector<32x32xf32>
    %c0_11 = arith.constant 0 : index
    %c0_12 = arith.constant 0 : index
    %c0_13 = arith.constant 0 : index
    %8 = vector.load %arg6[%c0_11, %c0_12, %c0_13] : memref<2x32x32xf32, #tpu.memory_space<vmem>>, vector<1x32x32xf32>
    %9 = vector.shape_cast %8 : vector<1x32x32xf32> to vector<32x32xf32>
    %c0_14 = arith.constant 0 : index
    %c0_15 = arith.constant 0 : index
    %c0_16 = arith.constant 0 : index
    %10 = vector.load %arg7[%c0_14, %c0_15, %c0_16] : memref<2x32x32xf32, #tpu.memory_space<vmem>>, vector<1x32x32xf32>
    %11 = vector.shape_cast %10 : vector<1x32x32xf32> to vector<32x32xf32>
    %c0_17 = arith.constant 0 : index
    %c0_18 = arith.constant 0 : index
    %c0_19 = arith.constant 0 : index
    %12 = vector.load %arg8[%c0_17, %c0_18, %c0_19] : memref<2x32x64xf32, #tpu.memory_space<vmem>>, vector<1x32x64xf32>
    %13 = vector.shape_cast %12 : vector<1x32x64xf32> to vector<32x64xf32>
    %c0_20 = arith.constant 0 : index
    %c0_21 = arith.constant 0 : index
    %c0_22 = arith.constant 0 : index
    %14 = vector.load %arg9[%c0_20, %c0_21, %c0_22] : memref<2x64x32xf32, #tpu.memory_space<vmem>>, vector<1x64x32xf32>
    %15 = vector.shape_cast %14 : vector<1x64x32xf32> to vector<64x32xf32>
    %c0_23 = arith.constant 0 : index
    %c0_24 = arith.constant 0 : index
    %16 = vector.load %arg10[%c0_23, %c0_24] : memref<20x32xf32, #tpu.memory_space<vmem>>, vector<1x32xf32>
    %c1 = arith.constant 1 : index
    %c0_25 = arith.constant 0 : index
    %17 = vector.load %arg10[%c1, %c0_25] : memref<20x32xf32, #tpu.memory_space<vmem>>, vector<1x32xf32>
    %c2 = arith.constant 2 : index
    %c0_26 = arith.constant 0 : index
    %18 = vector.load %arg10[%c2, %c0_26] : memref<20x32xf32, #tpu.memory_space<vmem>>, vector<1x32xf32>
    %c3 = arith.constant 3 : index
    %c0_27 = arith.constant 0 : index
    %19 = vector.load %arg10[%c3, %c0_27] : memref<20x32xf32, #tpu.memory_space<vmem>>, vector<1x32xf32>
    %c4 = arith.constant 4 : index
    %c0_28 = arith.constant 0 : index
    %20 = vector.load %arg10[%c4, %c0_28] : memref<20x32xf32, #tpu.memory_space<vmem>>, vector<1x32xf32>
    %c5 = arith.constant 5 : index
    %c0_29 = arith.constant 0 : index
    %21 = vector.load %arg10[%c5, %c0_29] : memref<20x32xf32, #tpu.memory_space<vmem>>, vector<1x32xf32>
    %c6 = arith.constant 6 : index
    %c0_30 = arith.constant 0 : index
    %22 = vector.load %arg10[%c6, %c0_30] : memref<20x32xf32, #tpu.memory_space<vmem>>, vector<1x32xf32>
    %c7 = arith.constant 7 : index
    %c0_31 = arith.constant 0 : index
    %23 = vector.load %arg10[%c7, %c0_31] : memref<20x32xf32, #tpu.memory_space<vmem>>, vector<1x32xf32>
    %c8 = arith.constant 8 : index
    %c0_32 = arith.constant 0 : index
    %24 = vector.load %arg10[%c8, %c0_32] : memref<20x32xf32, #tpu.memory_space<vmem>>, vector<1x32xf32>
    %c0_33 = arith.constant 0 : index
    %c0_34 = arith.constant 0 : index
    %25 = vector.load %arg11[%c0_33, %c0_34] : memref<2x64xf32, #tpu.memory_space<vmem>>, vector<1x64xf32>
    %cst = arith.constant dense<0.000000e+00> : vector<16xf32>
    %26 = vector.multi_reduction <add>, %0, %cst [1] : vector<16x32xf32> to vector<16xf32>
    %27 = vector.shape_cast %26 : vector<16xf32> to vector<16x1xf32>
    %cst_35 = arith.constant 3.200000e+01 : f32
    %28 = vector.broadcast %cst_35 : f32 to vector<16x1xf32>
    %29 = arith.divf %27, %28 : vector<16x1xf32>
    %30 = vector.broadcast %29 : vector<16x1xf32> to vector<16x32xf32>
    %31 = arith.subf %0, %30 : vector<16x32xf32>
    %32 = arith.mulf %31, %31 : vector<16x32xf32>
    %cst_36 = arith.constant dense<0.000000e+00> : vector<16xf32>
    %33 = vector.multi_reduction <add>, %32, %cst_36 [1] : vector<16x32xf32> to vector<16xf32>
    %34 = vector.shape_cast %33 : vector<16xf32> to vector<16x1xf32>
    %cst_37 = arith.constant 3.100000e+01 : f32
    %35 = vector.broadcast %cst_37 : f32 to vector<16x1xf32>
    %36 = arith.divf %34, %35 : vector<16x1xf32>
    %37 = vector.broadcast %29 : vector<16x1xf32> to vector<16x32xf32>
    %38 = arith.subf %0, %37 : vector<16x32xf32>
    %39 = vector.broadcast %21 : vector<1x32xf32> to vector<16x32xf32>
    %40 = arith.mulf %39, %38 : vector<16x32xf32>
    %41 = math.sqrt %36 : vector<16x1xf32>
    %cst_38 = arith.constant 9.99999974E-6 : f32
    %42 = vector.broadcast %cst_38 : f32 to vector<16x1xf32>
    %43 = arith.addf %41, %42 : vector<16x1xf32>
    %44 = vector.broadcast %43 : vector<16x1xf32> to vector<16x32xf32>
    %45 = arith.divf %40, %44 : vector<16x32xf32>
    %46 = vector.broadcast %22 : vector<1x32xf32> to vector<16x32xf32>
    %47 = arith.addf %45, %46 : vector<16x32xf32>
    %cst_39 = arith.constant dense<0.000000e+00> : vector<16x32xf32>
    %48 = tpu.matmul %47, %5, %cst_39 {dimension_numbers = #tpu.dot_dimension_numbers<[1], [0], [0], [1], [0, 0, 1, 1], [], []>} : vector<16x32xf32>, vector<32x32xf32>, vector<16x32xf32> -> vector<16x32xf32>
    %49 = vector.broadcast %16 : vector<1x32xf32> to vector<16x32xf32>
    %50 = arith.addf %48, %49 : vector<16x32xf32>
    %cst_40 = arith.constant dense<0.000000e+00> : vector<16x32xf32>
    %51 = tpu.matmul %1, %7, %cst_40 {dimension_numbers = #tpu.dot_dimension_numbers<[1], [0], [0], [1], [0, 0, 1, 1], [], []>} : vector<16x32xf32>, vector<32x32xf32>, vector<16x32xf32> -> vector<16x32xf32>
    %52 = vector.broadcast %17 : vector<1x32xf32> to vector<16x32xf32>
    %53 = arith.addf %51, %52 : vector<16x32xf32>
    %cst_41 = arith.constant dense<0.000000e+00> : vector<16x32xf32>
    %54 = tpu.matmul %1, %9, %cst_41 {dimension_numbers = #tpu.dot_dimension_numbers<[1], [0], [0], [1], [0, 0, 1, 1], [], []>} : vector<16x32xf32>, vector<32x32xf32>, vector<16x32xf32> -> vector<16x32xf32>
    %55 = vector.broadcast %18 : vector<1x32xf32> to vector<16x32xf32>
    %56 = arith.addf %54, %55 : vector<16x32xf32>
    %57 = vector.shape_cast %50 : vector<16x32xf32> to vector<2x8x32xf32>
    %58 = vector.shape_cast %53 : vector<16x32xf32> to vector<2x8x32xf32>
    %59 = vector.shape_cast %56 : vector<16x32xf32> to vector<2x8x32xf32>
    %60 = vector.shape_cast %57 : vector<2x8x32xf32> to vector<2x1x8x32xf32>
    %61 = vector.broadcast %60 : vector<2x1x8x32xf32> to vector<2x4x8x32xf32>
    %62 = vector.broadcast %3 : vector<1x4x1x32xf32> to vector<2x4x8x32xf32>
    %63 = arith.mulf %61, %62 : vector<2x4x8x32xf32>
    %64 = vector.shape_cast %63 : vector<2x4x8x32xf32> to vector<2x32x32xf32>
    "tpu.trace_start"() <{level = 10 : i32, message = "bqd,bkd->bqk"}> : () -> ()
    %cst_42 = arith.constant dense<0.000000e+00> : vector<2x32x8xf32>
    %65 = tpu.matmul %64, %58, %cst_42 {dimension_numbers = #tpu.dot_dimension_numbers<[2], [2], [1], [1], [0, 0, 0, 1, 1, 1], [0], [0]>} : vector<2x32x32xf32>, vector<2x8x32xf32>, vector<2x32x8xf32> -> vector<2x32x8xf32>
    "tpu.trace_stop"() : () -> ()
    %cst_43 = arith.constant 0.353553385 : f32
    %66 = vector.broadcast %cst_43 : f32 to vector<2x32x8xf32>
    %67 = arith.mulf %65, %66 : vector<2x32x8xf32>
    %cst_44 = arith.constant dense<0xFF800000> : vector<2x32xf32>
    %68 = vector.multi_reduction <maximumf>, %67, %cst_44 [2] : vector<2x32x8xf32> to vector<2x32xf32>
    %69 = vector.shape_cast %68 : vector<2x32xf32> to vector<2x32x1xf32>
    %70 = vector.broadcast %69 : vector<2x32x1xf32> to vector<2x32x8xf32>
    %71 = arith.subf %67, %70 : vector<2x32x8xf32>
    %72 = math.exp %71 : vector<2x32x8xf32>
    %cst_45 = arith.constant dense<0.000000e+00> : vector<2x32xf32>
    %73 = vector.multi_reduction <add>, %72, %cst_45 [2] : vector<2x32x8xf32> to vector<2x32xf32>
    %74 = vector.shape_cast %73 : vector<2x32xf32> to vector<2x32x1xf32>
    %75 = vector.broadcast %74 : vector<2x32x1xf32> to vector<2x32x8xf32>
    %76 = arith.divf %72, %75 : vector<2x32x8xf32>
    "tpu.trace_start"() <{level = 10 : i32, message = "bqk,bkd->bqd"}> : () -> ()
    %cst_46 = arith.constant dense<0.000000e+00> : vector<2x32x32xf32>
    %77 = tpu.matmul %76, %59, %cst_46 {dimension_numbers = #tpu.dot_dimension_numbers<[2], [1], [1], [2], [0, 0, 0, 1, 1, 2], [0], [0]>} : vector<2x32x8xf32>, vector<2x8x32xf32>, vector<2x32x32xf32> -> vector<2x32x32xf32>
    "tpu.trace_stop"() : () -> ()
    %78 = vector.shape_cast %77 : vector<2x32x32xf32> to vector<2x4x8x32xf32>
    %79 = vector.broadcast %3 : vector<1x4x1x32xf32> to vector<2x4x8x32xf32>
    %80 = arith.mulf %78, %79 : vector<2x4x8x32xf32>
    %cst_47 = arith.constant dense<0.000000e+00> : vector<2x8x32xf32>
    %81 = vector.multi_reduction <add>, %80, %cst_47 [1] : vector<2x4x8x32xf32> to vector<2x8x32xf32>
    %82 = vector.shape_cast %81 : vector<2x8x32xf32> to vector<16x32xf32>
    %cst_48 = arith.constant dense<0.000000e+00> : vector<16x32xf32>
    %83 = tpu.matmul %82, %11, %cst_48 {dimension_numbers = #tpu.dot_dimension_numbers<[1], [0], [0], [1], [0, 0, 1, 1], [], []>} : vector<16x32xf32>, vector<32x32xf32>, vector<16x32xf32> -> vector<16x32xf32>
    %84 = arith.addf %0, %83 : vector<16x32xf32>
    %85 = vector.broadcast %19 : vector<1x32xf32> to vector<16x32xf32>
    %86 = arith.addf %84, %85 : vector<16x32xf32>
    %cst_49 = arith.constant dense<0.000000e+00> : vector<16xf32>
    %87 = vector.multi_reduction <add>, %86, %cst_49 [1] : vector<16x32xf32> to vector<16xf32>
    %88 = vector.shape_cast %87 : vector<16xf32> to vector<16x1xf32>
    %cst_50 = arith.constant 3.200000e+01 : f32
    %89 = vector.broadcast %cst_50 : f32 to vector<16x1xf32>
    %90 = arith.divf %88, %89 : vector<16x1xf32>
    %91 = vector.broadcast %90 : vector<16x1xf32> to vector<16x32xf32>
    %92 = arith.subf %86, %91 : vector<16x32xf32>
    %93 = arith.mulf %92, %92 : vector<16x32xf32>
    %cst_51 = arith.constant dense<0.000000e+00> : vector<16xf32>
    %94 = vector.multi_reduction <add>, %93, %cst_51 [1] : vector<16x32xf32> to vector<16xf32>
    %95 = vector.shape_cast %94 : vector<16xf32> to vector<16x1xf32>
    %cst_52 = arith.constant 3.100000e+01 : f32
    %96 = vector.broadcast %cst_52 : f32 to vector<16x1xf32>
    %97 = arith.divf %95, %96 : vector<16x1xf32>
    %98 = vector.broadcast %90 : vector<16x1xf32> to vector<16x32xf32>
    %99 = arith.subf %86, %98 : vector<16x32xf32>
    %100 = vector.broadcast %23 : vector<1x32xf32> to vector<16x32xf32>
    %101 = arith.mulf %100, %99 : vector<16x32xf32>
    %102 = math.sqrt %97 : vector<16x1xf32>
    %cst_53 = arith.constant 9.99999974E-6 : f32
    %103 = vector.broadcast %cst_53 : f32 to vector<16x1xf32>
    %104 = arith.addf %102, %103 : vector<16x1xf32>
    %105 = vector.broadcast %104 : vector<16x1xf32> to vector<16x32xf32>
    %106 = arith.divf %101, %105 : vector<16x32xf32>
    %107 = vector.broadcast %24 : vector<1x32xf32> to vector<16x32xf32>
    %108 = arith.addf %106, %107 : vector<16x32xf32>
    %cst_54 = arith.constant dense<0.000000e+00> : vector<16x64xf32>
    %109 = tpu.matmul %108, %13, %cst_54 {dimension_numbers = #tpu.dot_dimension_numbers<[1], [0], [0], [1], [0, 0, 1, 1], [], []>} : vector<16x32xf32>, vector<32x64xf32>, vector<16x64xf32> -> vector<16x64xf32>
    %110 = vector.broadcast %25 : vector<1x64xf32> to vector<16x64xf32>
    %111 = arith.addf %109, %110 : vector<16x64xf32>
    %cst_55 = arith.constant 0.000000e+00 : f32
    %112 = vector.broadcast %cst_55 : f32 to vector<16x64xf32>
    %113 = arith.maximumf %111, %112 : vector<16x64xf32>
    %cst_56 = arith.constant dense<0.000000e+00> : vector<16x32xf32>
    %114 = tpu.matmul %113, %15, %cst_56 {dimension_numbers = #tpu.dot_dimension_numbers<[1], [0], [0], [1], [0, 0, 1, 1], [], []>} : vector<16x64xf32>, vector<64x32xf32>, vector<16x32xf32> -> vector<16x32xf32>
    %115 = arith.addf %86, %114 : vector<16x32xf32>
    %116 = vector.broadcast %20 : vector<1x32xf32> to vector<16x32xf32>
    %117 = arith.addf %115, %116 : vector<16x32xf32>
    %c1_57 = arith.constant 1 : index
    %c0_58 = arith.constant 0 : index
    %c0_59 = arith.constant 0 : index
    %118 = vector.load %arg4[%c1_57, %c0_58, %c0_59] : memref<2x32x32xf32, #tpu.memory_space<vmem>>, vector<1x32x32xf32>
    %119 = vector.shape_cast %118 : vector<1x32x32xf32> to vector<32x32xf32>
    %c1_60 = arith.constant 1 : index
    %c0_61 = arith.constant 0 : index
    %c0_62 = arith.constant 0 : index
    %120 = vector.load %arg5[%c1_60, %c0_61, %c0_62] : memref<2x32x32xf32, #tpu.memory_space<vmem>>, vector<1x32x32xf32>
    %121 = vector.shape_cast %120 : vector<1x32x32xf32> to vector<32x32xf32>
    %c1_63 = arith.constant 1 : index
    %c0_64 = arith.constant 0 : index
    %c0_65 = arith.constant 0 : index
    %122 = vector.load %arg6[%c1_63, %c0_64, %c0_65] : memref<2x32x32xf32, #tpu.memory_space<vmem>>, vector<1x32x32xf32>
    %123 = vector.shape_cast %122 : vector<1x32x32xf32> to vector<32x32xf32>
    %c1_66 = arith.constant 1 : index
    %c0_67 = arith.constant 0 : index
    %c0_68 = arith.constant 0 : index
    %124 = vector.load %arg7[%c1_66, %c0_67, %c0_68] : memref<2x32x32xf32, #tpu.memory_space<vmem>>, vector<1x32x32xf32>
    %125 = vector.shape_cast %124 : vector<1x32x32xf32> to vector<32x32xf32>
    %c1_69 = arith.constant 1 : index
    %c0_70 = arith.constant 0 : index
    %c0_71 = arith.constant 0 : index
    %126 = vector.load %arg8[%c1_69, %c0_70, %c0_71] : memref<2x32x64xf32, #tpu.memory_space<vmem>>, vector<1x32x64xf32>
    %127 = vector.shape_cast %126 : vector<1x32x64xf32> to vector<32x64xf32>
    %c1_72 = arith.constant 1 : index
    %c0_73 = arith.constant 0 : index
    %c0_74 = arith.constant 0 : index
    %128 = vector.load %arg9[%c1_72, %c0_73, %c0_74] : memref<2x64x32xf32, #tpu.memory_space<vmem>>, vector<1x64x32xf32>
    %129 = vector.shape_cast %128 : vector<1x64x32xf32> to vector<64x32xf32>
    %c9 = arith.constant 9 : index
    %c0_75 = arith.constant 0 : index
    %130 = vector.load %arg10[%c9, %c0_75] : memref<20x32xf32, #tpu.memory_space<vmem>>, vector<1x32xf32>
    %c10 = arith.constant 10 : index
    %c0_76 = arith.constant 0 : index
    %131 = vector.load %arg10[%c10, %c0_76] : memref<20x32xf32, #tpu.memory_space<vmem>>, vector<1x32xf32>
    %c11 = arith.constant 11 : index
    %c0_77 = arith.constant 0 : index
    %132 = vector.load %arg10[%c11, %c0_77] : memref<20x32xf32, #tpu.memory_space<vmem>>, vector<1x32xf32>
    %c12 = arith.constant 12 : index
    %c0_78 = arith.constant 0 : index
    %133 = vector.load %arg10[%c12, %c0_78] : memref<20x32xf32, #tpu.memory_space<vmem>>, vector<1x32xf32>
    %c13 = arith.constant 13 : index
    %c0_79 = arith.constant 0 : index
    %134 = vector.load %arg10[%c13, %c0_79] : memref<20x32xf32, #tpu.memory_space<vmem>>, vector<1x32xf32>
    %c14 = arith.constant 14 : index
    %c0_80 = arith.constant 0 : index
    %135 = vector.load %arg10[%c14, %c0_80] : memref<20x32xf32, #tpu.memory_space<vmem>>, vector<1x32xf32>
    %c15 = arith.constant 15 : index
    %c0_81 = arith.constant 0 : index
    %136 = vector.load %arg10[%c15, %c0_81] : memref<20x32xf32, #tpu.memory_space<vmem>>, vector<1x32xf32>
    %c16 = arith.constant 16 : index
    %c0_82 = arith.constant 0 : index
    %137 = vector.load %arg10[%c16, %c0_82] : memref<20x32xf32, #tpu.memory_space<vmem>>, vector<1x32xf32>
    %c17 = arith.constant 17 : index
    %c0_83 = arith.constant 0 : index
    %138 = vector.load %arg10[%c17, %c0_83] : memref<20x32xf32, #tpu.memory_space<vmem>>, vector<1x32xf32>
    %c1_84 = arith.constant 1 : index
    %c0_85 = arith.constant 0 : index
    %139 = vector.load %arg11[%c1_84, %c0_85] : memref<2x64xf32, #tpu.memory_space<vmem>>, vector<1x64xf32>
    %cst_86 = arith.constant dense<0.000000e+00> : vector<16xf32>
    %140 = vector.multi_reduction <add>, %117, %cst_86 [1] : vector<16x32xf32> to vector<16xf32>
    %141 = vector.shape_cast %140 : vector<16xf32> to vector<16x1xf32>
    %cst_87 = arith.constant 3.200000e+01 : f32
    %142 = vector.broadcast %cst_87 : f32 to vector<16x1xf32>
    %143 = arith.divf %141, %142 : vector<16x1xf32>
    %144 = vector.broadcast %143 : vector<16x1xf32> to vector<16x32xf32>
    %145 = arith.subf %117, %144 : vector<16x32xf32>
    %146 = arith.mulf %145, %145 : vector<16x32xf32>
    %cst_88 = arith.constant dense<0.000000e+00> : vector<16xf32>
    %147 = vector.multi_reduction <add>, %146, %cst_88 [1] : vector<16x32xf32> to vector<16xf32>
    %148 = vector.shape_cast %147 : vector<16xf32> to vector<16x1xf32>
    %cst_89 = arith.constant 3.100000e+01 : f32
    %149 = vector.broadcast %cst_89 : f32 to vector<16x1xf32>
    %150 = arith.divf %148, %149 : vector<16x1xf32>
    %151 = vector.broadcast %143 : vector<16x1xf32> to vector<16x32xf32>
    %152 = arith.subf %117, %151 : vector<16x32xf32>
    %153 = vector.broadcast %135 : vector<1x32xf32> to vector<16x32xf32>
    %154 = arith.mulf %153, %152 : vector<16x32xf32>
    %155 = math.sqrt %150 : vector<16x1xf32>
    %cst_90 = arith.constant 9.99999974E-6 : f32
    %156 = vector.broadcast %cst_90 : f32 to vector<16x1xf32>
    %157 = arith.addf %155, %156 : vector<16x1xf32>
    %158 = vector.broadcast %157 : vector<16x1xf32> to vector<16x32xf32>
    %159 = arith.divf %154, %158 : vector<16x32xf32>
    %160 = vector.broadcast %136 : vector<1x32xf32> to vector<16x32xf32>
    %161 = arith.addf %159, %160 : vector<16x32xf32>
    %cst_91 = arith.constant dense<0.000000e+00> : vector<16x32xf32>
    %162 = tpu.matmul %161, %119, %cst_91 {dimension_numbers = #tpu.dot_dimension_numbers<[1], [0], [0], [1], [0, 0, 1, 1], [], []>} : vector<16x32xf32>, vector<32x32xf32>, vector<16x32xf32> -> vector<16x32xf32>
    %163 = vector.broadcast %130 : vector<1x32xf32> to vector<16x32xf32>
    %164 = arith.addf %162, %163 : vector<16x32xf32>
    %cst_92 = arith.constant dense<0.000000e+00> : vector<16x32xf32>
    %165 = tpu.matmul %1, %121, %cst_92 {dimension_numbers = #tpu.dot_dimension_numbers<[1], [0], [0], [1], [0, 0, 1, 1], [], []>} : vector<16x32xf32>, vector<32x32xf32>, vector<16x32xf32> -> vector<16x32xf32>
    %166 = vector.broadcast %131 : vector<1x32xf32> to vector<16x32xf32>
    %167 = arith.addf %165, %166 : vector<16x32xf32>
    %cst_93 = arith.constant dense<0.000000e+00> : vector<16x32xf32>
    %168 = tpu.matmul %1, %123, %cst_93 {dimension_numbers = #tpu.dot_dimension_numbers<[1], [0], [0], [1], [0, 0, 1, 1], [], []>} : vector<16x32xf32>, vector<32x32xf32>, vector<16x32xf32> -> vector<16x32xf32>
    %169 = vector.broadcast %132 : vector<1x32xf32> to vector<16x32xf32>
    %170 = arith.addf %168, %169 : vector<16x32xf32>
    %171 = vector.shape_cast %164 : vector<16x32xf32> to vector<2x8x32xf32>
    %172 = vector.shape_cast %167 : vector<16x32xf32> to vector<2x8x32xf32>
    %173 = vector.shape_cast %170 : vector<16x32xf32> to vector<2x8x32xf32>
    %174 = vector.shape_cast %171 : vector<2x8x32xf32> to vector<2x1x8x32xf32>
    %175 = vector.broadcast %174 : vector<2x1x8x32xf32> to vector<2x4x8x32xf32>
    %176 = vector.broadcast %3 : vector<1x4x1x32xf32> to vector<2x4x8x32xf32>
    %177 = arith.mulf %175, %176 : vector<2x4x8x32xf32>
    %178 = vector.shape_cast %177 : vector<2x4x8x32xf32> to vector<2x32x32xf32>
    "tpu.trace_start"() <{level = 10 : i32, message = "bqd,bkd->bqk"}> : () -> ()
    %cst_94 = arith.constant dense<0.000000e+00> : vector<2x32x8xf32>
    %179 = tpu.matmul %178, %172, %cst_94 {dimension_numbers = #tpu.dot_dimension_numbers<[2], [2], [1], [1], [0, 0, 0, 1, 1, 1], [0], [0]>} : vector<2x32x32xf32>, vector<2x8x32xf32>, vector<2x32x8xf32> -> vector<2x32x8xf32>
    "tpu.trace_stop"() : () -> ()
    %cst_95 = arith.constant 0.353553385 : f32
    %180 = vector.broadcast %cst_95 : f32 to vector<2x32x8xf32>
    %181 = arith.mulf %179, %180 : vector<2x32x8xf32>
    %cst_96 = arith.constant dense<0xFF800000> : vector<2x32xf32>
    %182 = vector.multi_reduction <maximumf>, %181, %cst_96 [2] : vector<2x32x8xf32> to vector<2x32xf32>
    %183 = vector.shape_cast %182 : vector<2x32xf32> to vector<2x32x1xf32>
    %184 = vector.broadcast %183 : vector<2x32x1xf32> to vector<2x32x8xf32>
    %185 = arith.subf %181, %184 : vector<2x32x8xf32>
    %186 = math.exp %185 : vector<2x32x8xf32>
    %cst_97 = arith.constant dense<0.000000e+00> : vector<2x32xf32>
    %187 = vector.multi_reduction <add>, %186, %cst_97 [2] : vector<2x32x8xf32> to vector<2x32xf32>
    %188 = vector.shape_cast %187 : vector<2x32xf32> to vector<2x32x1xf32>
    %189 = vector.broadcast %188 : vector<2x32x1xf32> to vector<2x32x8xf32>
    %190 = arith.divf %186, %189 : vector<2x32x8xf32>
    "tpu.trace_start"() <{level = 10 : i32, message = "bqk,bkd->bqd"}> : () -> ()
    %cst_98 = arith.constant dense<0.000000e+00> : vector<2x32x32xf32>
    %191 = tpu.matmul %190, %173, %cst_98 {dimension_numbers = #tpu.dot_dimension_numbers<[2], [1], [1], [2], [0, 0, 0, 1, 1, 2], [0], [0]>} : vector<2x32x8xf32>, vector<2x8x32xf32>, vector<2x32x32xf32> -> vector<2x32x32xf32>
    "tpu.trace_stop"() : () -> ()
    %192 = vector.shape_cast %191 : vector<2x32x32xf32> to vector<2x4x8x32xf32>
    %193 = vector.broadcast %3 : vector<1x4x1x32xf32> to vector<2x4x8x32xf32>
    %194 = arith.mulf %192, %193 : vector<2x4x8x32xf32>
    %cst_99 = arith.constant dense<0.000000e+00> : vector<2x8x32xf32>
    %195 = vector.multi_reduction <add>, %194, %cst_99 [1] : vector<2x4x8x32xf32> to vector<2x8x32xf32>
    %196 = vector.shape_cast %195 : vector<2x8x32xf32> to vector<16x32xf32>
    %cst_100 = arith.constant dense<0.000000e+00> : vector<16x32xf32>
    %197 = tpu.matmul %196, %125, %cst_100 {dimension_numbers = #tpu.dot_dimension_numbers<[1], [0], [0], [1], [0, 0, 1, 1], [], []>} : vector<16x32xf32>, vector<32x32xf32>, vector<16x32xf32> -> vector<16x32xf32>
    %198 = arith.addf %117, %197 : vector<16x32xf32>
    %199 = vector.broadcast %133 : vector<1x32xf32> to vector<16x32xf32>
    %200 = arith.addf %198, %199 : vector<16x32xf32>
    %201 = vector.shape_cast %190 : vector<2x32x8xf32> to vector<2x4x8x8xf32>
    %cst_101 = arith.constant dense<0.000000e+00> : vector<16xf32>
    %202 = vector.multi_reduction <add>, %200, %cst_101 [1] : vector<16x32xf32> to vector<16xf32>
    %203 = vector.shape_cast %202 : vector<16xf32> to vector<16x1xf32>
    %cst_102 = arith.constant 3.200000e+01 : f32
    %204 = vector.broadcast %cst_102 : f32 to vector<16x1xf32>
    %205 = arith.divf %203, %204 : vector<16x1xf32>
    %206 = vector.broadcast %205 : vector<16x1xf32> to vector<16x32xf32>
    %207 = arith.subf %200, %206 : vector<16x32xf32>
    %208 = arith.mulf %207, %207 : vector<16x32xf32>
    %cst_103 = arith.constant dense<0.000000e+00> : vector<16xf32>
    %209 = vector.multi_reduction <add>, %208, %cst_103 [1] : vector<16x32xf32> to vector<16xf32>
    %210 = vector.shape_cast %209 : vector<16xf32> to vector<16x1xf32>
    %cst_104 = arith.constant 3.100000e+01 : f32
    %211 = vector.broadcast %cst_104 : f32 to vector<16x1xf32>
    %212 = arith.divf %210, %211 : vector<16x1xf32>
    %213 = vector.broadcast %205 : vector<16x1xf32> to vector<16x32xf32>
    %214 = arith.subf %200, %213 : vector<16x32xf32>
    %215 = vector.broadcast %137 : vector<1x32xf32> to vector<16x32xf32>
    %216 = arith.mulf %215, %214 : vector<16x32xf32>
    %217 = math.sqrt %212 : vector<16x1xf32>
    %cst_105 = arith.constant 9.99999974E-6 : f32
    %218 = vector.broadcast %cst_105 : f32 to vector<16x1xf32>
    %219 = arith.addf %217, %218 : vector<16x1xf32>
    %220 = vector.broadcast %219 : vector<16x1xf32> to vector<16x32xf32>
    %221 = arith.divf %216, %220 : vector<16x32xf32>
    %222 = vector.broadcast %138 : vector<1x32xf32> to vector<16x32xf32>
    %223 = arith.addf %221, %222 : vector<16x32xf32>
    %cst_106 = arith.constant dense<0.000000e+00> : vector<16x64xf32>
    %224 = tpu.matmul %223, %127, %cst_106 {dimension_numbers = #tpu.dot_dimension_numbers<[1], [0], [0], [1], [0, 0, 1, 1], [], []>} : vector<16x32xf32>, vector<32x64xf32>, vector<16x64xf32> -> vector<16x64xf32>
    %225 = vector.broadcast %139 : vector<1x64xf32> to vector<16x64xf32>
    %226 = arith.addf %224, %225 : vector<16x64xf32>
    %cst_107 = arith.constant 0.000000e+00 : f32
    %227 = vector.broadcast %cst_107 : f32 to vector<16x64xf32>
    %228 = arith.maximumf %226, %227 : vector<16x64xf32>
    %cst_108 = arith.constant dense<0.000000e+00> : vector<16x32xf32>
    %229 = tpu.matmul %228, %129, %cst_108 {dimension_numbers = #tpu.dot_dimension_numbers<[1], [0], [0], [1], [0, 0, 1, 1], [], []>} : vector<16x64xf32>, vector<64x32xf32>, vector<16x32xf32> -> vector<16x32xf32>
    %230 = arith.addf %200, %229 : vector<16x32xf32>
    %231 = vector.broadcast %134 : vector<1x32xf32> to vector<16x32xf32>
    %232 = arith.addf %230, %231 : vector<16x32xf32>
    %c18 = arith.constant 18 : index
    %c0_109 = arith.constant 0 : index
    %233 = vector.load %arg10[%c18, %c0_109] : memref<20x32xf32, #tpu.memory_space<vmem>>, vector<1x32xf32>
    %c19 = arith.constant 19 : index
    %c0_110 = arith.constant 0 : index
    %234 = vector.load %arg10[%c19, %c0_110] : memref<20x32xf32, #tpu.memory_space<vmem>>, vector<1x32xf32>
    %cst_111 = arith.constant dense<0.000000e+00> : vector<16xf32>
    %235 = vector.multi_reduction <add>, %232, %cst_111 [1] : vector<16x32xf32> to vector<16xf32>
    %236 = vector.shape_cast %235 : vector<16xf32> to vector<16x1xf32>
    %cst_112 = arith.constant 3.200000e+01 : f32
    %237 = vector.broadcast %cst_112 : f32 to vector<16x1xf32>
    %238 = arith.divf %236, %237 : vector<16x1xf32>
    %239 = vector.broadcast %238 : vector<16x1xf32> to vector<16x32xf32>
    %240 = arith.subf %232, %239 : vector<16x32xf32>
    %241 = arith.mulf %240, %240 : vector<16x32xf32>
    %cst_113 = arith.constant dense<0.000000e+00> : vector<16xf32>
    %242 = vector.multi_reduction <add>, %241, %cst_113 [1] : vector<16x32xf32> to vector<16xf32>
    %243 = vector.shape_cast %242 : vector<16xf32> to vector<16x1xf32>
    %cst_114 = arith.constant 3.100000e+01 : f32
    %244 = vector.broadcast %cst_114 : f32 to vector<16x1xf32>
    %245 = arith.divf %243, %244 : vector<16x1xf32>
    %246 = vector.broadcast %238 : vector<16x1xf32> to vector<16x32xf32>
    %247 = arith.subf %232, %246 : vector<16x32xf32>
    %248 = vector.broadcast %233 : vector<1x32xf32> to vector<16x32xf32>
    %249 = arith.mulf %248, %247 : vector<16x32xf32>
    %250 = math.sqrt %245 : vector<16x1xf32>
    %cst_115 = arith.constant 9.99999974E-6 : f32
    %251 = vector.broadcast %cst_115 : f32 to vector<16x1xf32>
    %252 = arith.addf %250, %251 : vector<16x1xf32>
    %253 = vector.broadcast %252 : vector<16x1xf32> to vector<16x32xf32>
    %254 = arith.divf %249, %253 : vector<16x32xf32>
    %255 = vector.broadcast %234 : vector<1x32xf32> to vector<16x32xf32>
    %256 = arith.addf %254, %255 : vector<16x32xf32>
    %c0_116 = arith.constant 0 : index
    %c0_117 = arith.constant 0 : index
    %257 = vector.load %arg12[%c0_116, %c0_117] : memref<16x32xf32, #tpu.memory_space<vmem>>, vector<16x32xf32>
    tpu.vector_store %arg12[%c0_116, %c0_117], %256 {strides = array<i32>} : memref<16x32xf32, #tpu.memory_space<vmem>>, vector<16x32xf32>,
    %c0_118 = arith.constant 0 : index
    %c0_119 = arith.constant 0 : index
    %c0_120 = arith.constant 0 : index
    %c0_121 = arith.constant 0 : index
    %258 = vector.load %arg13[%c0_118, %c0_119, %c0_120, %c0_121] : memref<2x4x8x8xf32, #tpu.memory_space<vmem>>, vector<2x4x8x8xf32>
    tpu.vector_store %arg13[%c0_118, %c0_119, %c0_120, %c0_121], %201 {strides = array<i32>} : memref<2x4x8x8xf32, #tpu.memory_space<vmem>>, vector<2x4x8x8xf32>,
    return
  }
  func.func @transform_0(%arg0: i32) -> (i32, i32) {
    %c0_i32 = arith.constant 0 : i32
    %c0_i32_0 = arith.constant 0 : i32
    return %arg0, %c0_i32 : i32, i32
  }
  func.func @transform_1(%arg0: i32) -> (i32, i32) {
    %c0_i32 = arith.constant 0 : i32
    %c0_i32_0 = arith.constant 0 : i32
    return %arg0, %c0_i32 : i32, i32
  }
  func.func @transform_2(%arg0: i32) -> (i32, i32) {
    %c0_i32 = arith.constant 0 : i32
    %c0_i32_0 = arith.constant 0 : i32
    %c0_i32_1 = arith.constant 0 : i32
    return %c0_i32, %c0_i32_0 : i32, i32
  }
  func.func @transform_3(%arg0: i32) -> (i32, i32, i32) {
    %c0_i32 = arith.constant 0 : i32
    %c0_i32_0 = arith.constant 0 : i32
    %c0_i32_1 = arith.constant 0 : i32
    %c0_i32_2 = arith.constant 0 : i32
    return %c0_i32, %c0_i32_0, %c0_i32_1 : i32, i32, i32
  }
  func.func @transform_4(%arg0: i32) -> (i32, i32, i32) {
    %c0_i32 = arith.constant 0 : i32
    %c0_i32_0 = arith.constant 0 : i32
    %c0_i32_1 = arith.constant 0 : i32
    %c0_i32_2 = arith.constant 0 : i32
    return %c0_i32, %c0_i32_0, %c0_i32_1 : i32, i32, i32
  }
  func.func @transform_5(%arg0: i32) -> (i32, i32, i32) {
    %c0_i32 = arith.constant 0 : i32
    %c0_i32_0 = arith.constant 0 : i32
    %c0_i32_1 = arith.constant 0 : i32
    %c0_i32_2 = arith.constant 0 : i32
    return %c0_i32, %c0_i32_0, %c0_i32_1 : i32, i32, i32
  }
  func.func @transform_6(%arg0: i32) -> (i32, i32, i32) {
    %c0_i32 = arith.constant 0 : i32
    %c0_i32_0 = arith.constant 0 : i32
    %c0_i32_1 = arith.constant 0 : i32
    %c0_i32_2 = arith.constant 0 : i32
    return %c0_i32, %c0_i32_0, %c0_i32_1 : i32, i32, i32
  }
  func.func @transform_7(%arg0: i32) -> (i32, i32, i32) {
    %c0_i32 = arith.constant 0 : i32
    %c0_i32_0 = arith.constant 0 : i32
    %c0_i32_1 = arith.constant 0 : i32
    %c0_i32_2 = arith.constant 0 : i32
    return %c0_i32, %c0_i32_0, %c0_i32_1 : i32, i32, i32
  }
  func.func @transform_8(%arg0: i32) -> (i32, i32, i32) {
    %c0_i32 = arith.constant 0 : i32
    %c0_i32_0 = arith.constant 0 : i32
    %c0_i32_1 = arith.constant 0 : i32
    %c0_i32_2 = arith.constant 0 : i32
    return %c0_i32, %c0_i32_0, %c0_i32_1 : i32, i32, i32
  }
  func.func @transform_9(%arg0: i32) -> (i32, i32) {
    %c0_i32 = arith.constant 0 : i32
    %c0_i32_0 = arith.constant 0 : i32
    %c0_i32_1 = arith.constant 0 : i32
    return %c0_i32, %c0_i32_0 : i32, i32
  }
  func.func @transform_10(%arg0: i32) -> (i32, i32) {
    %c0_i32 = arith.constant 0 : i32
    %c0_i32_0 = arith.constant 0 : i32
    %c0_i32_1 = arith.constant 0 : i32
    return %c0_i32, %c0_i32_0 : i32, i32
  }
  func.func @transform_11(%arg0: i32) -> (i32, i32) {
    %c0_i32 = arith.constant 0 : i32
    %c0_i32_0 = arith.constant 0 : i32
    return %arg0, %c0_i32 : i32, i32
  }
  func.func @transform_12(%arg0: i32) -> (i32, i32, i32, i32) {
    %c0_i32 = arith.constant 0 : i32
    %c0_i32_0 = arith.constant 0 : i32
    %c0_i32_1 = arith.constant 0 : i32
    %c0_i32_2 = arith.constant 0 : i32
    return %arg0, %c0_i32, %c0_i32_0, %c0_i32_1 : i32, i32, i32, i32
  }
}

</mosaic_0001>

<llo_original>
// kernel: tpu_custom_call.1
$region0: #{tpu_custom_call.1}
  #allocation0 [shape = 'u32[]', space=smem, size = 0x4, offset = 0x4, fixed_abs, tag = 'smem constant byte address 0x4 - core index']
  #allocation1 [shape = 'u32[144,128]{1,0:T(1,128)}', space=vmem, size = 0x12000, scoped, tag = 'internal scratch']
  %s0 = inlined_call_operand.hbm [shape: f32[16,32], index: 0, kind: input, shape index: {}]
  %s1 = inlined_call_operand.hbm [shape: f32[16,32], index: 1, kind: input, shape index: {}]
  %s2 = inlined_call_operand.hbm [shape: f32[4,32], index: 2, kind: input, shape index: {}]
  %s3 = inlined_call_operand.vmem [shape: f32[2,32,32], index: 3, kind: input, shape index: {}]
  %s4 = inlined_call_operand.vmem [shape: f32[2,32,32], index: 4, kind: input, shape index: {}]
  %s5 = inlined_call_operand.vmem [shape: f32[2,32,32], index: 5, kind: input, shape index: {}]
  %s6 = inlined_call_operand.hbm [shape: f32[2,32,32], index: 6, kind: input, shape index: {}]
  %s7 = inlined_call_operand.hbm [shape: f32[2,32,64], index: 7, kind: input, shape index: {}]
  %s8 = inlined_call_operand.vmem [shape: f32[2,64,32], index: 8, kind: input, shape index: {}]
  %s9 = inlined_call_operand.hbm [shape: f32[20,32], index: 9, kind: input, shape index: {}]
  %s10 = inlined_call_operand.vmem [shape: f32[2,64], index: 10, kind: input, shape index: {}]
  %s11 = inlined_call_operand.hbm [shape: f32[16,32], index: 11, kind: output, shape index: {0}]
  %s12 = inlined_call_operand.hbm [shape: f32[2,4,8,8], index: 12, kind: output, shape index: {1}]
  %13 = xla_tuple %s11, %s12
  %s14 = sld [smem:[#allocation0]]
  $region86: #{tpu_custom_call.1} parent=0
    _
  %s16 = ssub.s32 1, %s14
  %s17 = scalar_select 0, %s16, %s14
  $region1: #{tpu_custom_call.1} parent=0
    #allocation2 [shape = 'u8[8192]{0}', space=vmem, size = 0x2000, scoped, tag = 'input window, operand 0, single buffered']
    #allocation3 [shape = 's32[1]{0}', space=sflag, size = 0x4, scoped, tag = 'scoped memory for tpu_custom_call.1']
    #allocation4 [shape = 's32[1]{0}', space=sflag, size = 0x4, scoped, tag = 'scoped memory for tpu_custom_call.1']
    #allocation5 [shape = 'u8[8192]{0}', space=vmem, size = 0x2000, scoped, tag = 'input window, operand 1, single buffered']
    #allocation6 [shape = 's32[1]{0}', space=sflag, size = 0x4, scoped, tag = 'scoped memory for tpu_custom_call.1']
    #allocation7 [shape = 'u8[2048]{0}', space=vmem, size = 0x800, scoped, tag = 'input window, operand 2, single buffered']
    #allocation8 [shape = 'u8[32768]{0}', space=vmem, size = 0x8000, scoped, tag = 'input window, operand 6, single buffered']
    #allocation9 [shape = 's32[1]{0}', space=sflag, size = 0x4, scoped, tag = 'scoped memory for tpu_custom_call.1']
    #allocation10 [shape = 'u8[32768]{0}', space=vmem, size = 0x8000, scoped, tag = 'input window, operand 7, single buffered']
    #allocation11 [shape = 'u8[12288]{0}', space=vmem, size = 0x3000, scoped, tag = 'input window, operand 9, single buffered']
    #allocation12 [shape = 's32[1]{0}', space=sflag, size = 0x4, scoped, tag = 'scoped memory for tpu_custom_call.1']
    #allocation13 [shape = 'u8[8192]{0}', space=vmem, size = 0x2000, scoped, tag = 'output window, operand 0, single buffered']
    #allocation14 [shape = 'u8[32768]{0}', space=vmem, size = 0x8000, scoped, tag = 'output window, operand 1, single buffered']
    #allocation15 [shape = 's32[1]{0}', space=sflag, size = 0x4, scoped, tag = 'scoped memory for tpu_custom_call.1']
    %18 = vsyncpa [#allocation3], 0
    %19 = vsyncpa [#allocation6], 0
    %20 = vsyncpa [#allocation9], 0
    %21 = vsyncpa [#allocation12], 0
    %22 = vsyncpa [#allocation4], 0
    %23 = vsyncpa [#allocation15], 0
    // Predicated region
    $region2: #{tpu_custom_call.1} parent=1 // pred_check
      _
    $region3: #{tpu_custom_call.1} parent=1 // pred_check_branch
      %25 = sbr.rel (0) target = $region5
    $region4: #{tpu_custom_call.1} parent=1 // pred_region
      %s27 = ssub.s32 256, 256
      %28 = vsyncadd [#allocation3], %s27
      %s29 = sshll.u32 [#allocation2], 4
      %s30 = int_to_ptr.vmem [resolvable:$true] %s29
      %35 = dma.hbm_to_vmem [thread:$0]  %s0, 256, %s30, [#allocation3], 128, 128, 8
    $region5: #{tpu_custom_call.1} parent=1 // pred_fallthru
      _
    // Predicated region
    $region6: #{tpu_custom_call.1} parent=1 // pred_check
      _
    $region7: #{tpu_custom_call.1} parent=1 // pred_check_branch
      %37 = sbr.rel (0) target = $region9
    $region8: #{tpu_custom_call.1} parent=1 // pred_region
      %s39 = ssub.s32 256, 256
      %40 = vsyncadd [#allocation6], %s39
      %s41 = sshll.u32 [#allocation5], 4
      %s42 = int_to_ptr.vmem [resolvable:$true] %s41
      %47 = dma.hbm_to_vmem [thread:$0]  %s1, 256, %s42, [#allocation6], 128, 128, 8
    $region9: #{tpu_custom_call.1} parent=1 // pred_fallthru
      _
    // Predicated region
    $region10: #{tpu_custom_call.1} parent=1 // pred_check
      _
    $region11: #{tpu_custom_call.1} parent=1 // pred_check_branch
      %49 = sbr.rel (0) target = $region13
    $region12: #{tpu_custom_call.1} parent=1 // pred_region
      %s51 = ssub.s32 64, 64
      %52 = vsyncadd [#allocation6], %s51
      %s54 = sshll.u32 [#allocation7], 4
      %s55 = int_to_ptr.vmem [resolvable:$true] %s54
      %57 = dma.hbm_to_vmem [thread:$0]  %s2, 64, %s55, [#allocation6]
    $region13: #{tpu_custom_call.1} parent=1 // pred_fallthru
      _
    // Predicated region
    $region14: #{tpu_custom_call.1} parent=1 // pred_check
      _
    $region15: #{tpu_custom_call.1} parent=1 // pred_check_branch
      %59 = sbr.rel (0) target = $region17
    $region16: #{tpu_custom_call.1} parent=1 // pred_region
      _
    $region17: #{tpu_custom_call.1} parent=1 // pred_fallthru
      _
    // Predicated region
    $region18: #{tpu_custom_call.1} parent=1 // pred_check
      _
    $region19: #{tpu_custom_call.1} parent=1 // pred_check_branch
      %61 = sbr.rel (0) target = $region21
    $region20: #{tpu_custom_call.1} parent=1 // pred_region
      _
    $region21: #{tpu_custom_call.1} parent=1 // pred_fallthru
      _
    // Predicated region
    $region22: #{tpu_custom_call.1} parent=1 // pred_check
      _
    $region23: #{tpu_custom_call.1} parent=1 // pred_check_branch
      %63 = sbr.rel (0) target = $region25
    $region24: #{tpu_custom_call.1} parent=1 // pred_region
      _
    $region25: #{tpu_custom_call.1} parent=1 // pred_fallthru
      _
    // Predicated region
    $region26: #{tpu_custom_call.1} parent=1 // pred_check
      _
    $region27: #{tpu_custom_call.1} parent=1 // pred_check_branch
      %65 = sbr.rel (0) target = $region29
    $region28: #{tpu_custom_call.1} parent=1 // pred_region
      %s67 = ssub.s32 1024, 1024
      %68 = vsyncadd [#allocation9], %s67
      %s69 = sshll.u32 [#allocation8], 4
      %s70 = int_to_ptr.vmem [resolvable:$true] %s69
      %75 = dma.hbm_to_vmem [thread:$0]  %s6, 1024, %s70, [#allocation9], 128, 128, 8
    $region29: #{tpu_custom_call.1} parent=1 // pred_fallthru
      _
    // Predicated region
    $region30: #{tpu_custom_call.1} parent=1 // pred_check
      _
    $region31: #{tpu_custom_call.1} parent=1 // pred_check_branch
      %77 = sbr.rel (0) target = $region33
    $region32: #{tpu_custom_call.1} parent=1 // pred_region
      %s79 = ssub.s32 1024, 1024
      %80 = vsyncadd [#allocation9], %s79
      %s81 = sshll.u32 [#allocation10], 4
      %s82 = int_to_ptr.vmem [resolvable:$true] %s81
      %87 = dma.hbm_to_vmem [thread:$0]  %s7, 1024, %s82, [#allocation9], 128, 128, 8
    $region33: #{tpu_custom_call.1} parent=1 // pred_fallthru
      _
    // Predicated region
    $region34: #{tpu_custom_call.1} parent=1 // pred_check
      _
    $region35: #{tpu_custom_call.1} parent=1 // pred_check_branch
      %89 = sbr.rel (0) target = $region37
    $region36: #{tpu_custom_call.1} parent=1 // pred_region
      _
    $region37: #{tpu_custom_call.1} parent=1 // pred_fallthru
      _
    // Predicated region
    $region38: #{tpu_custom_call.1} parent=1 // pred_check
      _
    $region39: #{tpu_custom_call.1} parent=1 // pred_check_branch
      %91 = sbr.rel (0) target = $region41
    $region40: #{tpu_custom_call.1} parent=1 // pred_region
      %s93 = ssub.s32 384, 384
      %94 = vsyncadd [#allocation12], %s93
      %s95 = sshll.u32 [#allocation11], 4
      %s96 = int_to_ptr.vmem [resolvable:$true] %s95
      %101 = dma.hbm_to_vmem [thread:$0]  %s9, 384, %s96, [#allocation12], 128, 128, 8
    $region41: #{tpu_custom_call.1} parent=1 // pred_fallthru
      _
    // Predicated region
    $region42: #{tpu_custom_call.1} parent=1 // pred_check
      _
    $region43: #{tpu_custom_call.1} parent=1 // pred_check_branch
      %103 = sbr.rel (0) target = $region45
    $region44: #{tpu_custom_call.1} parent=1 // pred_region
      _
    $region45: #{tpu_custom_call.1} parent=1 // pred_fallthru
      _
    // Predicated region
    $region46: #{tpu_custom_call.1} parent=1 // pred_check
      _
    $region47: #{tpu_custom_call.1} parent=1 // pred_check_branch
      %105 = sbr.rel (0) target = $region49
    $region48: #{tpu_custom_call.1} parent=1 // pred_region
      %106 = dma.done [#allocation3], 256
    $region49: #{tpu_custom_call.1} parent=1 // pred_fallthru
      _
    // Predicated region
    $region50: #{tpu_custom_call.1} parent=1 // pred_check
      _
    $region51: #{tpu_custom_call.1} parent=1 // pred_check_branch
      %108 = sbr.rel (0) target = $region53
    $region52: #{tpu_custom_call.1} parent=1 // pred_region
      %109 = dma.done [#allocation6], 256
    $region53: #{tpu_custom_call.1} parent=1 // pred_fallthru
      _
    // Predicated region
    $region54: #{tpu_custom_call.1} parent=1 // pred_check
      _
    $region55: #{tpu_custom_call.1} parent=1 // pred_check_branch
      %111 = sbr.rel (0) target = $region57
    $region56: #{tpu_custom_call.1} parent=1 // pred_region
      %112 = dma.done [#allocation6], 64
    $region57: #{tpu_custom_call.1} parent=1 // pred_fallthru
      _
    // Predicated region
    $region58: #{tpu_custom_call.1} parent=1 // pred_check
      _
    $region59: #{tpu_custom_call.1} parent=1 // pred_check_branch
      %114 = sbr.rel (0) target = $region61
    $region60: #{tpu_custom_call.1} parent=1 // pred_region
      %115 = dma.done [#allocation9], 1024
    $region61: #{tpu_custom_call.1} parent=1 // pred_fallthru
      _
    // Predicated region
    $region62: #{tpu_custom_call.1} parent=1 // pred_check
      _
    $region63: #{tpu_custom_call.1} parent=1 // pred_check_branch
      %117 = sbr.rel (0) target = $region65
    $region64: #{tpu_custom_call.1} parent=1 // pred_region
      %118 = dma.done [#allocation9], 1024
    $region65: #{tpu_custom_call.1} parent=1 // pred_fallthru
      _
    // Predicated region
    $region66: #{tpu_custom_call.1} parent=1 // pred_check
      _
    $region67: #{tpu_custom_call.1} parent=1 // pred_check_branch
      %120 = sbr.rel (0) target = $region69
    $region68: #{tpu_custom_call.1} parent=1 // pred_region
      %121 = dma.done [#allocation12], 384
    $region69: #{tpu_custom_call.1} parent=1 // pred_fallthru
      _
    %v122 = vld [vmem:[#allocation2] sm:$0xff]
    %v123 = vld [vmem:[#allocation2 + $0x8] sm:$0xff]
    %v124 = vld [vmem:[#allocation5] sm:$0xff]
    %v125 = vld [vmem:[#allocation5 + $0x8] sm:$0xff]
    %v126 = vld [vmem:[#allocation7] sm:$0xf]
    %v129 = vunpack.c.l.s4 1966171168
    %v130 = vunpack.c.0.s8 %v129
    %v131 = vlaneseq
    %v132 = vshrl.u32 %v131, 7
    %v133 = vsub.s32 %v130, %v132
    %v134 = vrot.slane %v126, %v133
    %v135 = vcombine.high %v134, %v134
    %v137 = vunpack.c.l.s4 1966171168
    %v138 = vunpack.c.0.s8 %v137
    %v139 = vlaneseq
    %v140 = vshrl.u32 %v139, 7
    %v141 = vsub.s32 %v138, %v140
    %v142 = vrot.slane %v134, %v141
    %v144 = vunpack.c.l.s4 1966171168
    %v145 = vunpack.c.0.s8 %v144
    %v146 = vlaneseq
    %v147 = vshrl.u32 %v146, 7
    %v148 = vsub.s32 %v145, %v147
    %v149 = vrot.slane %v135, %v148
    %v150 = vcombine.high %v142, %v142
    %v151 = vcombine.high %v149, %v149
    %v152 = vld [vmem:[%s3] sm:$0xff]
    %v153 = vld [vmem:[%s3 + $0x8] sm:$0xff]
    %v154 = vld [vmem:[%s3 + $0x10] sm:$0xff]
    %v155 = vld [vmem:[%s3 + $0x18] sm:$0xff]
    %v156 = vld [vmem:[%s4] sm:$0xff]
    %v157 = vld [vmem:[%s4 + $0x8] sm:$0xff]
    %v158 = vld [vmem:[%s4 + $0x10] sm:$0xff]
    %v159 = vld [vmem:[%s4 + $0x18] sm:$0xff]
    %v160 = vld [vmem:[%s5] sm:$0xff]
    %v161 = vld [vmem:[%s5 + $0x8] sm:$0xff]
    %v162 = vld [vmem:[%s5 + $0x10] sm:$0xff]
    %v163 = vld [vmem:[%s5 + $0x18] sm:$0xff]
    %v164 = vld [vmem:[#allocation8] sm:$0xff]
    %v165 = vld [vmem:[#allocation8 + $0x8] sm:$0xff]
    %v166 = vld [vmem:[#allocation8 + $0x10] sm:$0xff]
    %v167 = vld [vmem:[#allocation8 + $0x18] sm:$0xff]
    %v168 = vld [vmem:[#allocation10] sm:$0xff]
    %v169 = vld [vmem:[#allocation10 + $0x8] sm:$0xff]
    %v170 = vld [vmem:[#allocation10 + $0x10] sm:$0xff]
    %v171 = vld [vmem:[#allocation10 + $0x18] sm:$0xff]
    %v172 = vld [vmem:[%s8] sm:$0xff]
    %v173 = vld [vmem:[%s8 + $0x8] sm:$0xff]
    %v174 = vld [vmem:[%s8 + $0x10] sm:$0xff]
    %v175 = vld [vmem:[%s8 + $0x18] sm:$0xff]
    %v176 = vld [vmem:[%s8 + $0x20] sm:$0xff]
    %v177 = vld [vmem:[%s8 + $0x28] sm:$0xff]
    %v178 = vld [vmem:[%s8 + $0x30] sm:$0xff]
    %v179 = vld [vmem:[%s8 + $0x38] sm:$0xff]
    %v180 = vld [vmem:[#allocation11] sm:$0x1]
    %v181 = vld [vmem:[#allocation11 + $0x1] sm:$0x1]
    %v182 = vld [vmem:[#allocation11 + $0x2] sm:$0x1]
    %v183 = vld [vmem:[#allocation11 + $0x3] sm:$0x1]
    %v184 = vld [vmem:[#allocation11 + $0x4] sm:$0x1]
    %v185 = vld [vmem:[#allocation11 + $0x5] sm:$0x1]
    %v186 = vld [vmem:[#allocation11 + $0x6] sm:$0x1]
    %v187 = vld [vmem:[#allocation11 + $0x7] sm:$0x1]
    %v188 = vld [vmem:[#allocation11 + $0x8] sm:$0x1]
    %v189 = vld [vmem:[%s10] sm:$0x1]
    %vm190 = vcmask 261120
    %v191 = vsel %vm190, %v122, 0.0
    %192 = vadd.xlane.f32.xlu0 %v191
    %v193 = vpop.xlane.xlu0 %192
    %v194 = vsel %vm190, %v123, 0.0
    %195 = vadd.xlane.f32.xlu0 %v194
    %v196 = vpop.xlane.xlu0 %195
    %v197 = vrcp.pop 32.0
    %v198 = vmul.f32 %v193, %v197
    %v199 = vmul.f32 %v196, %v197
    %v200 = vsub.f32 %v122, %v198
    %v201 = vsub.f32 %v123, %v199
    %v202 = vmul.f32 %v200, %v200
    %v203 = vmul.f32 %v201, %v201
    %v204 = vsel %vm190, %v202, 0.0
    %205 = vadd.xlane.f32.xlu0 %v204
    %v206 = vpop.xlane.xlu0 %205
    %v207 = vsel %vm190, %v203, 0.0
    %208 = vadd.xlane.f32.xlu0 %v207
    %v209 = vpop.xlane.xlu0 %208
    %v210 = vrcp.pop 31.0
    %v211 = vmul.f32 %v206, %v210
    %v212 = vmul.f32 %v209, %v210
    %v213 = vlaneseq
    %v214 = vshrl.u32 %v213, 7
    %v215 = vsub.s32 0, %v214
    %v216 = vrot.slane %v185, %v215
    %v217 = vmul.f32 %v216, %v200
    %v218 = vmul.f32 %v216, %v201
    %v219 = vrsqrt.pop %v211
    %v220 = vmul.f32 %v211, %v219
    %vm221 = vcmp.eq.f32.partialorder %v211, inf
    %v222 = vsel %vm221, %v211, %v220
    %vm223 = vcmp.eq.f32.partialorder %v211, 0.0
    %v224 = vand.u32 %v211, 2147483648
    %v225 = vsel %vm223, %v224, %v222
    %v226 = vrsqrt.pop %v212
    %v227 = vmul.f32 %v212, %v226
    %vm228 = vcmp.eq.f32.partialorder %v212, inf
    %v229 = vsel %vm228, %v212, %v227
    %vm230 = vcmp.eq.f32.partialorder %v212, 0.0
    %v231 = vand.u32 %v212, 2147483648
    %v232 = vsel %vm230, %v231, %v229
    %v233 = vadd.f32 %v225, 1e-05
    %v234 = vadd.f32 %v232, 1e-05
    %v235 = vrcp.pop %v233
    %v236 = vmul.f32 %v217, %v235
    %v237 = vrcp.pop %v234
    %v238 = vmul.f32 %v218, %v237
    %v239 = vlaneseq
    %v240 = vshrl.u32 %v239, 7
    %v241 = vsub.s32 0, %v240
    %v242 = vrot.slane %v186, %v241
    %v243 = vadd.f32 %v236, %v242
    %v244 = vadd.f32 %v238, %v242
    %v245 = vlaneseq
    %v246 = vshrl.u32 %v245, 7
    %v247 = vsub.s32 0, %v246
    %v248 = vrot.slane %v180, %v247
    %v250 = vsel %vm190, %v243, 0
    %v253 = vsel %vm190, %v244, 0
    %255 = vmatprep.subr.mxu0 0.0
    %256 = vmatpush1.msra.mxu0 0.0
    %257 = vmatprep.subr.mxu0 0.0
    %258 = vmatpush1.msra.mxu0 0.0
    %259 = vmatprep.subr.mxu0 0.0
    %260 = vmatpush1.msra.mxu0 0.0
    %261 = vmatprep.subr.mxu0 0.0
    %262 = vmatpush1.msra.mxu0 0.0
    %263 = vmatprep.subr.mxu0 0.0
    %264 = vmatpush1.msra.mxu0 0.0
    %265 = vmatprep.subr.mxu0 0.0
    %266 = vmatpush1.msra.mxu0 0.0
    %267 = vmatprep.subr.mxu0 0.0
    %268 = vmatpush1.msra.mxu0 0.0
    %269 = vmatprep.subr.mxu0 0.0
    %270 = vmatpush1.msra.mxu0 0.0
    %271 = vmatprep.subr.mxu0 0.0
    %272 = vmatpush1.msra.mxu0 0.0
    %273 = vmatprep.subr.mxu0 0.0
    %274 = vmatpush1.msra.mxu0 0.0
    %275 = vmatprep.subr.mxu0 0.0
    %276 = vmatpush1.msra.mxu0 0.0
    %277 = vmatprep.subr.mxu0 0.0
    %278 = vmatpush1.msra.mxu0 0.0
    %279 = vmatprep.subr.mxu0 0.0
    %280 = vmatpush1.msra.mxu0 %v155
    %281 = vmatprep.subr.mxu0 0.0
    %282 = vmatpush1.msra.mxu0 %v154
    %283 = vmatprep.subr.mxu0 0.0
    %284 = vmatpush1.msra.mxu0 %v153
    %285 = vmatprep.subr.mxu0 0.0
    %286 = vmatpush1.msra.mxu0 %v152
    %287 = vmatprep.subr.mxu0 0.0
    %288 = vmatpush2.msra.mxu0 0.0
    %289 = vmatprep.subr.mxu0 0.0
    %290 = vmatpush2.msra.mxu0 0.0
    %291 = vmatprep.subr.mxu0 0.0
    %292 = vmatpush2.msra.mxu0 0.0
    %293 = vmatprep.subr.mxu0 0.0
    %294 = vmatpush2.msra.mxu0 0.0
    %295 = vmatprep.subr.mxu0 0.0
    %296 = vmatpush2.msra.mxu0 0.0
    %297 = vmatprep.subr.mxu0 0.0
    %298 = vmatpush2.msra.mxu0 0.0
    %299 = vmatprep.subr.mxu0 0.0
    %300 = vmatpush2.msra.mxu0 0.0
    %301 = vmatprep.subr.mxu0 0.0
    %302 = vmatpush2.msra.mxu0 0.0
    %303 = vmatprep.subr.mxu0 0.0
    %304 = vmatpush2.msra.mxu0 0.0
    %305 = vmatprep.subr.mxu0 0.0
    %306 = vmatpush2.msra.mxu0 0.0
    %307 = vmatprep.subr.mxu0 0.0
    %308 = vmatpush2.msra.mxu0 0.0
    %309 = vmatprep.subr.mxu0 0.0
    %310 = vmatpush2.msra.mxu0 0.0
    %311 = vmatprep.subr.mxu0 0.0
    %312 = vmatpush2.msra.mxu0 0.0
    %313 = vmatprep.subr.mxu0 0.0
    %314 = vmatpush2.msra.mxu0 0.0
    %315 = vmatprep.subr.mxu0 0.0
    %316 = vmatpush2.msra.mxu0 0.0
    %317 = vmatprep.subr.mxu0 0.0
    %318 = vmatpush2.msra.mxu0 0.0
    %319 = vmatprep.mubr.f32.mxu0 0.0
    %320 = vmatmul.mubr.f32.gmra.mxu0 %v250
    %v321 = vpop.f32.mrf.mxu0
    %v322 = vadd.f32 %v248, %v321
    %v323 = vpop.f32.mrf.mxu0
    %324 = vmatprep.mubr.f32.mxu0 0.0
    %325 = vmatmul.mubr.f32.gmra.mxu0 %v253
    %v326 = vpop.f32.mrf.mxu0
    %v327 = vadd.f32 %v248, %v326
    %v328 = vpop.f32.mrf.mxu0
    %329 = vdwg.mxu0
    %v330 = vlaneseq
    %v331 = vshrl.u32 %v330, 7
    %v332 = vsub.s32 0, %v331
    %v333 = vrot.slane %v181, %v332
    %v335 = vsel %vm190, %v124, 0
    %v338 = vsel %vm190, %v125, 0
    %340 = vmatprep.subr.mxu0 0.0
    %341 = vmatpush1.msra.mxu0 0.0
    %342 = vmatprep.subr.mxu0 0.0
    %343 = vmatpush1.msra.mxu0 0.0
    %344 = vmatprep.subr.mxu0 0.0
    %345 = vmatpush1.msra.mxu0 0.0
    %346 = vmatprep.subr.mxu0 0.0
    %347 = vmatpush1.msra.mxu0 0.0
    %348 = vmatprep.subr.mxu0 0.0
    %349 = vmatpush1.msra.mxu0 0.0
    %350 = vmatprep.subr.mxu0 0.0
    %351 = vmatpush1.msra.mxu0 0.0
    %352 = vmatprep.subr.mxu0 0.0
    %353 = vmatpush1.msra.mxu0 0.0
    %354 = vmatprep.subr.mxu0 0.0
    %355 = vmatpush1.msra.mxu0 0.0
    %356 = vmatprep.subr.mxu0 0.0
    %357 = vmatpush1.msra.mxu0 0.0
    %358 = vmatprep.subr.mxu0 0.0
    %359 = vmatpush1.msra.mxu0 0.0
    %360 = vmatprep.subr.mxu0 0.0
    %361 = vmatpush1.msra.mxu0 0.0
    %362 = vmatprep.subr.mxu0 0.0
    %363 = vmatpush1.msra.mxu0 0.0
    %364 = vmatprep.subr.mxu0 0.0
    %365 = vmatpush1.msra.mxu0 %v159
    %366 = vmatprep.subr.mxu0 0.0
    %367 = vmatpush1.msra.mxu0 %v158
    %368 = vmatprep.subr.mxu0 0.0
    %369 = vmatpush1.msra.mxu0 %v157
    %370 = vmatprep.subr.mxu0 0.0
    %371 = vmatpush1.msra.mxu0 %v156
    %372 = vmatprep.subr.mxu0 0.0
    %373 = vmatpush2.msra.mxu0 0.0
    %374 = vmatprep.subr.mxu0 0.0
    %375 = vmatpush2.msra.mxu0 0.0
    %376 = vmatprep.subr.mxu0 0.0
    %377 = vmatpush2.msra.mxu0 0.0
    %378 = vmatprep.subr.mxu0 0.0
    %379 = vmatpush2.msra.mxu0 0.0
    %380 = vmatprep.subr.mxu0 0.0
    %381 = vmatpush2.msra.mxu0 0.0
    %382 = vmatprep.subr.mxu0 0.0
    %383 = vmatpush2.msra.mxu0 0.0
    %384 = vmatprep.subr.mxu0 0.0
    %385 = vmatpush2.msra.mxu0 0.0
    %386 = vmatprep.subr.mxu0 0.0
    %387 = vmatpush2.msra.mxu0 0.0
    %388 = vmatprep.subr.mxu0 0.0
    %389 = vmatpush2.msra.mxu0 0.0
    %390 = vmatprep.subr.mxu0 0.0
    %391 = vmatpush2.msra.mxu0 0.0
    %392 = vmatprep.subr.mxu0 0.0
    %393 = vmatpush2.msra.mxu0 0.0
    %394 = vmatprep.subr.mxu0 0.0
    %395 = vmatpush2.msra.mxu0 0.0
    %396 = vmatprep.subr.mxu0 0.0
    %397 = vmatpush2.msra.mxu0 0.0
    %398 = vmatprep.subr.mxu0 0.0
    %399 = vmatpush2.msra.mxu0 0.0
    %400 = vmatprep.subr.mxu0 0.0
    %401 = vmatpush2.msra.mxu0 0.0
    %402 = vmatprep.subr.mxu0 0.0
    %403 = vmatpush2.msra.mxu0 0.0
    %404 = vmatprep.mubr.f32.mxu0 0.0
    %405 = vmatmul.mubr.f32.gmra.mxu0 %v335
    %v406 = vpop.f32.mrf.mxu0
    %v407 = vadd.f32 %v333, %v406
    %v408 = vpop.f32.mrf.mxu0
    %409 = vmatprep.mubr.f32.mxu0 0.0
    %410 = vmatmul.mubr.f32.gmra.mxu0 %v338
    %v411 = vpop.f32.mrf.mxu0
    %v412 = vadd.f32 %v333, %v411
    %v413 = vpop.f32.mrf.mxu0
    %414 = vdwg.mxu0
    %v415 = vlaneseq
    %v416 = vshrl.u32 %v415, 7
    %v417 = vsub.s32 0, %v416
    %v418 = vrot.slane %v182, %v417
    %419 = vmatprep.subr.mxu0 0.0
    %420 = vmatpush1.msra.mxu0 0.0
    %421 = vmatprep.subr.mxu0 0.0
    %422 = vmatpush1.msra.mxu0 0.0
    %423 = vmatprep.subr.mxu0 0.0
    %424 = vmatpush1.msra.mxu0 0.0
    %425 = vmatprep.subr.mxu0 0.0
    %426 = vmatpush1.msra.mxu0 0.0
    %427 = vmatprep.subr.mxu0 0.0
    %428 = vmatpush1.msra.mxu0 0.0
    %429 = vmatprep.subr.mxu0 0.0
    %430 = vmatpush1.msra.mxu0 0.0
    %431 = vmatprep.subr.mxu0 0.0
    %432 = vmatpush1.msra.mxu0 0.0
    %433 = vmatprep.subr.mxu0 0.0
    %434 = vmatpush1.msra.mxu0 0.0
    %435 = vmatprep.subr.mxu0 0.0
    %436 = vmatpush1.msra.mxu0 0.0
    %437 = vmatprep.subr.mxu0 0.0
    %438 = vmatpush1.msra.mxu0 0.0
    %439 = vmatprep.subr.mxu0 0.0
    %440 = vmatpush1.msra.mxu0 0.0
    %441 = vmatprep.subr.mxu0 0.0
    %442 = vmatpush1.msra.mxu0 0.0
    %443 = vmatprep.subr.mxu0 0.0
    %444 = vmatpush1.msra.mxu0 %v163
    %445 = vmatprep.subr.mxu0 0.0
    %446 = vmatpush1.msra.mxu0 %v162
    %447 = vmatprep.subr.mxu0 0.0
    %448 = vmatpush1.msra.mxu0 %v161
    %449 = vmatprep.subr.mxu0 0.0
    %450 = vmatpush1.msra.mxu0 %v160
    %451 = vmatprep.subr.mxu0 0.0
    %452 = vmatpush2.msra.mxu0 0.0
    %453 = vmatprep.subr.mxu0 0.0
    %454 = vmatpush2.msra.mxu0 0.0
    %455 = vmatprep.subr.mxu0 0.0
    %456 = vmatpush2.msra.mxu0 0.0
    %457 = vmatprep.subr.mxu0 0.0
    %458 = vmatpush2.msra.mxu0 0.0
    %459 = vmatprep.subr.mxu0 0.0
    %460 = vmatpush2.msra.mxu0 0.0
    %461 = vmatprep.subr.mxu0 0.0
    %462 = vmatpush2.msra.mxu0 0.0
    %463 = vmatprep.subr.mxu0 0.0
    %464 = vmatpush2.msra.mxu0 0.0
    %465 = vmatprep.subr.mxu0 0.0
    %466 = vmatpush2.msra.mxu0 0.0
    %467 = vmatprep.subr.mxu0 0.0
    %468 = vmatpush2.msra.mxu0 0.0
    %469 = vmatprep.subr.mxu0 0.0
    %470 = vmatpush2.msra.mxu0 0.0
    %471 = vmatprep.subr.mxu0 0.0
    %472 = vmatpush2.msra.mxu0 0.0
    %473 = vmatprep.subr.mxu0 0.0
    %474 = vmatpush2.msra.mxu0 0.0
    %475 = vmatprep.subr.mxu0 0.0
    %476 = vmatpush2.msra.mxu0 0.0
    %477 = vmatprep.subr.mxu0 0.0
    %478 = vmatpush2.msra.mxu0 0.0
    %479 = vmatprep.subr.mxu0 0.0
    %480 = vmatpush2.msra.mxu0 0.0
    %481 = vmatprep.subr.mxu0 0.0
    %482 = vmatpush2.msra.mxu0 0.0
    %483 = vmatprep.mubr.f32.mxu0 0.0
    %484 = vmatmul.mubr.f32.gmra.mxu0 %v335
    %v485 = vpop.f32.mrf.mxu0
    %v486 = vadd.f32 %v418, %v485
    %v487 = vpop.f32.mrf.mxu0
    %488 = vmatprep.mubr.f32.mxu0 0.0
    %489 = vmatmul.mubr.f32.gmra.mxu0 %v338
    %v490 = vpop.f32.mrf.mxu0
    %v491 = vadd.f32 %v418, %v490
    %v492 = vpop.f32.mrf.mxu0
    %493 = vdwg.mxu0
    %v494 = vlaneseq
    %v495 = vshrl.u32 %v494, 7
    %v496 = vsub.s32 0, %v495
    %v497 = vrot.slane %v142, %v496
    %v498 = vlaneseq
    %v499 = vshrl.u32 %v498, 7
    %v500 = vsub.s32 0, %v499
    %v501 = vrot.slane %v149, %v500
    %v502 = vlaneseq
    %v503 = vshrl.u32 %v502, 7
    %v504 = vsub.s32 0, %v503
    %v505 = vrot.slane %v150, %v504
    %v506 = vlaneseq
    %v507 = vshrl.u32 %v506, 7
    %v508 = vsub.s32 0, %v507
    %v509 = vrot.slane %v151, %v508
    %v514 = vmul.f32 %v322, %v497
    %v515 = vmul.f32 %v322, %v501
    %v516 = vmul.f32 %v322, %v505
    %v517 = vmul.f32 %v322, %v509
    %v518 = vmul.f32 %v327, %v497
    %v519 = vmul.f32 %v327, %v501
    %v520 = vmul.f32 %v327, %v505
    %v521 = vmul.f32 %v327, %v509
    %v523 = vsel %vm190, %v514, 0
    %v526 = vsel %vm190, %v515, 0
    %v529 = vsel %vm190, %v516, 0
    %v532 = vsel %vm190, %v517, 0
    %v535 = vsel %vm190, %v407, 0
    %537 = vmatprep.subr.mxu0 0.0
    %538 = vmatpush1.xpose.msra.mxu0 0.0
    %539 = vmatprep.subr.mxu0 0.0
    %540 = vmatpush1.xpose.msra.mxu0 0.0
    %541 = vmatprep.subr.mxu0 0.0
    %542 = vmatpush1.xpose.msra.mxu0 0.0
    %543 = vmatprep.subr.mxu0 0.0
    %544 = vmatpush1.xpose.msra.mxu0 0.0
    %545 = vmatprep.subr.mxu0 0.0
    %546 = vmatpush1.xpose.msra.mxu0 0.0
    %547 = vmatprep.subr.mxu0 0.0
    %548 = vmatpush1.xpose.msra.mxu0 0.0
    %549 = vmatprep.subr.mxu0 0.0
    %550 = vmatpush1.xpose.msra.mxu0 0.0
    %551 = vmatprep.subr.mxu0 0.0
    %552 = vmatpush1.xpose.msra.mxu0 0.0
    %553 = vmatprep.subr.mxu0 0.0
    %554 = vmatpush1.xpose.msra.mxu0 0.0
    %555 = vmatprep.subr.mxu0 0.0
    %556 = vmatpush1.xpose.msra.mxu0 0.0
    %557 = vmatprep.subr.mxu0 0.0
    %558 = vmatpush1.xpose.msra.mxu0 0.0
    %559 = vmatprep.subr.mxu0 0.0
    %560 = vmatpush1.xpose.msra.mxu0 0.0
    %561 = vmatprep.subr.mxu0 0.0
    %562 = vmatpush1.xpose.msra.mxu0 0.0
    %563 = vmatprep.subr.mxu0 0.0
    %564 = vmatpush1.xpose.msra.mxu0 0.0
    %565 = vmatprep.subr.mxu0 0.0
    %566 = vmatpush1.xpose.msra.mxu0 0.0
    %567 = vmatprep.subr.mxu0 0.0
    %568 = vmatpush1.xpose.msra.mxu0 %v535
    %569 = vmatprep.subr.mxu0 0.0
    %570 = vmatpush2.xpose.msra.mxu0 0.0
    %571 = vmatprep.subr.mxu0 0.0
    %572 = vmatpush2.xpose.msra.mxu0 0.0
    %573 = vmatprep.subr.mxu0 0.0
    %574 = vmatpush2.xpose.msra.mxu0 0.0
    %575 = vmatprep.subr.mxu0 0.0
    %576 = vmatpush2.xpose.msra.mxu0 0.0
    %577 = vmatprep.subr.mxu0 0.0
    %578 = vmatpush2.xpose.msra.mxu0 0.0
    %579 = vmatprep.subr.mxu0 0.0
    %580 = vmatpush2.xpose.msra.mxu0 0.0
    %581 = vmatprep.subr.mxu0 0.0
    %582 = vmatpush2.xpose.msra.mxu0 0.0
    %583 = vmatprep.subr.mxu0 0.0
    %584 = vmatpush2.xpose.msra.mxu0 0.0
    %585 = vmatprep.subr.mxu0 0.0
    %586 = vmatpush2.xpose.msra.mxu0 0.0
    %587 = vmatprep.subr.mxu0 0.0
    %588 = vmatpush2.xpose.msra.mxu0 0.0
    %589 = vmatprep.subr.mxu0 0.0
    %590 = vmatpush2.xpose.msra.mxu0 0.0
    %591 = vmatprep.subr.mxu0 0.0
    %592 = vmatpush2.xpose.msra.mxu0 0.0
    %593 = vmatprep.subr.mxu0 0.0
    %594 = vmatpush2.xpose.msra.mxu0 0.0
    %595 = vmatprep.subr.mxu0 0.0
    %596 = vmatpush2.xpose.msra.mxu0 0.0
    %597 = vmatprep.subr.mxu0 0.0
    %598 = vmatpush2.xpose.msra.mxu0 0.0
    %599 = vmatprep.subr.mxu0 0.0
    %600 = vmatpush2.xpose.msra.mxu0 0.0
    %601 = vmatprep.mubr.f32.mxu0 0.0
    %602 = vmatmul.mubr.f32.gmra.mxu0 %v523
    %v603 = vpop.f32.mrf.mxu0
    %v604 = vadd.f32 0.0, %v603
    %v605 = vpop.f32.mrf.mxu0
    %606 = vmatprep.mubr.f32.mxu0 0.0
    %607 = vmatmul.mubr.f32.gmra.mxu0 %v526
    %v608 = vpop.f32.mrf.mxu0
    %v609 = vadd.f32 0.0, %v608
    %v610 = vpop.f32.mrf.mxu0
    %611 = vmatprep.mubr.f32.mxu0 0.0
    %612 = vmatmul.mubr.f32.gmra.mxu0 %v529
    %v613 = vpop.f32.mrf.mxu0
    %v614 = vadd.f32 0.0, %v613
    %v615 = vpop.f32.mrf.mxu0
    %616 = vmatprep.mubr.f32.mxu0 0.0
    %617 = vmatmul.mubr.f32.gmra.mxu0 %v532
    %v618 = vpop.f32.mrf.mxu0
    %v619 = vadd.f32 0.0, %v618
    %v620 = vpop.f32.mrf.mxu0
    %621 = vdwg.mxu0
    %v623 = vsel %vm190, %v518, 0
    %v626 = vsel %vm190, %v519, 0
    %v629 = vsel %vm190, %v520, 0
    %v632 = vsel %vm190, %v521, 0
    %v635 = vsel %vm190, %v412, 0
    %637 = vmatprep.subr.mxu0 0.0
    %638 = vmatpush1.xpose.msra.mxu0 0.0
    %639 = vmatprep.subr.mxu0 0.0
    %640 = vmatpush1.xpose.msra.mxu0 0.0
    %641 = vmatprep.subr.mxu0 0.0
    %642 = vmatpush1.xpose.msra.mxu0 0.0
    %643 = vmatprep.subr.mxu0 0.0
    %644 = vmatpush1.xpose.msra.mxu0 0.0
    %645 = vmatprep.subr.mxu0 0.0
    %646 = vmatpush1.xpose.msra.mxu0 0.0
    %647 = vmatprep.subr.mxu0 0.0
    %648 = vmatpush1.xpose.msra.mxu0 0.0
    %649 = vmatprep.subr.mxu0 0.0
    %650 = vmatpush1.xpose.msra.mxu0 0.0
    %651 = vmatprep.subr.mxu0 0.0
    %652 = vmatpush1.xpose.msra.mxu0 0.0
    %653 = vmatprep.subr.mxu0 0.0
    %654 = vmatpush1.xpose.msra.mxu0 0.0
    %655 = vmatprep.subr.mxu0 0.0
    %656 = vmatpush1.xpose.msra.mxu0 0.0
    %657 = vmatprep.subr.mxu0 0.0
    %658 = vmatpush1.xpose.msra.mxu0 0.0
    %659 = vmatprep.subr.mxu0 0.0
    %660 = vmatpush1.xpose.msra.mxu0 0.0
    %661 = vmatprep.subr.mxu0 0.0
    %662 = vmatpush1.xpose.msra.mxu0 0.0
    %663 = vmatprep.subr.mxu0 0.0
    %664 = vmatpush1.xpose.msra.mxu0 0.0
    %665 = vmatprep.subr.mxu0 0.0
    %666 = vmatpush1.xpose.msra.mxu0 0.0
    %667 = vmatprep.subr.mxu0 0.0
    %668 = vmatpush1.xpose.msra.mxu0 %v635
    %669 = vmatprep.subr.mxu0 0.0
    %670 = vmatpush2.xpose.msra.mxu0 0.0
    %671 = vmatprep.subr.mxu0 0.0
    %672 = vmatpush2.xpose.msra.mxu0 0.0
    %673 = vmatprep.subr.mxu0 0.0
    %674 = vmatpush2.xpose.msra.mxu0 0.0
    %675 = vmatprep.subr.mxu0 0.0
    %676 = vmatpush2.xpose.msra.mxu0 0.0
    %677 = vmatprep.subr.mxu0 0.0
    %678 = vmatpush2.xpose.msra.mxu0 0.0
    %679 = vmatprep.subr.mxu0 0.0
    %680 = vmatpush2.xpose.msra.mxu0 0.0
    %681 = vmatprep.subr.mxu0 0.0
    %682 = vmatpush2.xpose.msra.mxu0 0.0
    %683 = vmatprep.subr.mxu0 0.0
    %684 = vmatpush2.xpose.msra.mxu0 0.0
    %685 = vmatprep.subr.mxu0 0.0
    %686 = vmatpush2.xpose.msra.mxu0 0.0
    %687 = vmatprep.subr.mxu0 0.0
    %688 = vmatpush2.xpose.msra.mxu0 0.0
    %689 = vmatprep.subr.mxu0 0.0
    %690 = vmatpush2.xpose.msra.mxu0 0.0
    %691 = vmatprep.subr.mxu0 0.0
    %692 = vmatpush2.xpose.msra.mxu0 0.0
    %693 = vmatprep.subr.mxu0 0.0
    %694 = vmatpush2.xpose.msra.mxu0 0.0
    %695 = vmatprep.subr.mxu0 0.0
    %696 = vmatpush2.xpose.msra.mxu0 0.0
    %697 = vmatprep.subr.mxu0 0.0
    %698 = vmatpush2.xpose.msra.mxu0 0.0
    %699 = vmatprep.subr.mxu0 0.0
    %700 = vmatpush2.xpose.msra.mxu0 0.0
    %701 = vmatprep.mubr.f32.mxu0 0.0
    %702 = vmatmul.mubr.f32.gmra.mxu0 %v623
    %v703 = vpop.f32.mrf.mxu0
    %v704 = vadd.f32 0.0, %v703
    %v705 = vpop.f32.mrf.mxu0
    %706 = vmatprep.mubr.f32.mxu0 0.0
    %707 = vmatmul.mubr.f32.gmra.mxu0 %v626
    %v708 = vpop.f32.mrf.mxu0
    %v709 = vadd.f32 0.0, %v708
    %v710 = vpop.f32.mrf.mxu0
    %711 = vmatprep.mubr.f32.mxu0 0.0
    %712 = vmatmul.mubr.f32.gmra.mxu0 %v629
    %v713 = vpop.f32.mrf.mxu0
    %v714 = vadd.f32 0.0, %v713
    %v715 = vpop.f32.mrf.mxu0
    %716 = vmatprep.mubr.f32.mxu0 0.0
    %717 = vmatmul.mubr.f32.gmra.mxu0 %v632
    %v718 = vpop.f32.mrf.mxu0
    %v719 = vadd.f32 0.0, %v718
    %v720 = vpop.f32.mrf.mxu0
    %721 = vdwg.mxu0
    %v722 = vmul.f32 %v604, 0.35355338
    %v723 = vmul.f32 %v609, 0.35355338
    %v724 = vmul.f32 %v614, 0.35355338
    %v725 = vmul.f32 %v619, 0.35355338
    %v726 = vmul.f32 %v704, 0.35355338
    %v727 = vmul.f32 %v709, 0.35355338
    %v728 = vmul.f32 %v714, 0.35355338
    %v729 = vmul.f32 %v719, 0.35355338
    %vm730 = vcmask 64512
    %v731 = vsel %vm730, %v722, -inf
    %732 = vmax.xlane.f32.xlu0 %v731
    %v733 = vpop.xlane.xlu0 %732
    %v734 = vsel %vm730, %v723, -inf
    %735 = vmax.xlane.f32.xlu0 %v734
    %v736 = vpop.xlane.xlu0 %735
    %v737 = vsel %vm730, %v724, -inf
    %738 = vmax.xlane.f32.xlu0 %v737
    %v739 = vpop.xlane.xlu0 %738
    %v740 = vsel %vm730, %v725, -inf
    %741 = vmax.xlane.f32.xlu0 %v740
    %v742 = vpop.xlane.xlu0 %741
    %v743 = vsel %vm730, %v726, -inf
    %744 = vmax.xlane.f32.xlu0 %v743
    %v745 = vpop.xlane.xlu0 %744
    %v746 = vsel %vm730, %v727, -inf
    %747 = vmax.xlane.f32.xlu0 %v746
    %v748 = vpop.xlane.xlu0 %747
    %v749 = vsel %vm730, %v728, -inf
    %750 = vmax.xlane.f32.xlu0 %v749
    %v751 = vpop.xlane.xlu0 %750
    %v752 = vsel %vm730, %v729, -inf
    %753 = vmax.xlane.f32.xlu0 %v752
    %v754 = vpop.xlane.xlu0 %753
    %v755 = vsub.f32 %v722, %v733
    %v756 = vsub.f32 %v723, %v736
    %v757 = vsub.f32 %v724, %v739
    %v758 = vsub.f32 %v725, %v742
    %v759 = vsub.f32 %v726, %v745
    %v760 = vsub.f32 %v727, %v748
    %v761 = vsub.f32 %v728, %v751
    %v762 = vsub.f32 %v729, %v754
    %v763 = vmul.f32 %v755, 1.442695
    %v764 = vpow.pop %v763
    %v765 = vmul.f32 %v756, 1.442695
    %v766 = vpow.pop %v765
    %v767 = vmul.f32 %v757, 1.442695
    %v768 = vpow.pop %v767
    %v769 = vmul.f32 %v758, 1.442695
    %v770 = vpow.pop %v769
    %v771 = vmul.f32 %v759, 1.442695
    %v772 = vpow.pop %v771
    %v773 = vmul.f32 %v760, 1.442695
    %v774 = vpow.pop %v773
    %v775 = vmul.f32 %v761, 1.442695
    %v776 = vpow.pop %v775
    %v777 = vmul.f32 %v762, 1.442695
    %v778 = vpow.pop %v777
    %v779 = vsel %vm730, %v764, 0.0
    %780 = vadd.xlane.f32.xlu0 %v779
    %v781 = vpop.xlane.xlu0 %780
    %v782 = vsel %vm730, %v766, 0.0
    %783 = vadd.xlane.f32.xlu0 %v782
    %v784 = vpop.xlane.xlu0 %783
    %v785 = vsel %vm730, %v768, 0.0
    %786 = vadd.xlane.f32.xlu0 %v785
    %v787 = vpop.xlane.xlu0 %786
    %v788 = vsel %vm730, %v770, 0.0
    %789 = vadd.xlane.f32.xlu0 %v788
    %v790 = vpop.xlane.xlu0 %789
    %v791 = vsel %vm730, %v772, 0.0
    %792 = vadd.xlane.f32.xlu0 %v791
    %v793 = vpop.xlane.xlu0 %792
    %v794 = vsel %vm730, %v774, 0.0
    %795 = vadd.xlane.f32.xlu0 %v794
    %v796 = vpop.xlane.xlu0 %795
    %v797 = vsel %vm730, %v776, 0.0
    %798 = vadd.xlane.f32.xlu0 %v797
    %v799 = vpop.xlane.xlu0 %798
    %v800 = vsel %vm730, %v778, 0.0
    %801 = vadd.xlane.f32.xlu0 %v800
    %v802 = vpop.xlane.xlu0 %801
    %v803 = vrcp.pop %v781
    %v804 = vmul.f32 %v764, %v803
    %v805 = vrcp.pop %v784
    %v806 = vmul.f32 %v766, %v805
    %v807 = vrcp.pop %v787
    %v808 = vmul.f32 %v768, %v807
    %v809 = vrcp.pop %v790
    %v810 = vmul.f32 %v770, %v809
    %v811 = vrcp.pop %v793
    %v812 = vmul.f32 %v772, %v811
    %v813 = vrcp.pop %v796
    %v814 = vmul.f32 %v774, %v813
    %v815 = vrcp.pop %v799
    %v816 = vmul.f32 %v776, %v815
    %v817 = vrcp.pop %v802
    %v818 = vmul.f32 %v778, %v817
    %v820 = vsel %vm730, %v804, 0
    %v823 = vsel %vm730, %v806, 0
    %v826 = vsel %vm730, %v808, 0
    %v829 = vsel %vm730, %v810, 0
    %831 = vmatprep.subr.mxu0 0.0
    %832 = vmatpush1.msra.mxu0 0.0
    %833 = vmatprep.subr.mxu0 0.0
    %834 = vmatpush1.msra.mxu0 0.0
    %835 = vmatprep.subr.mxu0 0.0
    %836 = vmatpush1.msra.mxu0 0.0
    %837 = vmatprep.subr.mxu0 0.0
    %838 = vmatpush1.msra.mxu0 0.0
    %839 = vmatprep.subr.mxu0 0.0
    %840 = vmatpush1.msra.mxu0 0.0
    %841 = vmatprep.subr.mxu0 0.0
    %842 = vmatpush1.msra.mxu0 0.0
    %843 = vmatprep.subr.mxu0 0.0
    %844 = vmatpush1.msra.mxu0 0.0
    %845 = vmatprep.subr.mxu0 0.0
    %846 = vmatpush1.msra.mxu0 0.0
    %847 = vmatprep.subr.mxu0 0.0
    %848 = vmatpush1.msra.mxu0 0.0
    %849 = vmatprep.subr.mxu0 0.0
    %850 = vmatpush1.msra.mxu0 0.0
    %851 = vmatprep.subr.mxu0 0.0
    %852 = vmatpush1.msra.mxu0 0.0
    %853 = vmatprep.subr.mxu0 0.0
    %854 = vmatpush1.msra.mxu0 0.0
    %855 = vmatprep.subr.mxu0 0.0
    %856 = vmatpush1.msra.mxu0 0.0
    %857 = vmatprep.subr.mxu0 0.0
    %858 = vmatpush1.msra.mxu0 0.0
    %859 = vmatprep.subr.mxu0 0.0
    %860 = vmatpush1.msra.mxu0 0.0
    %861 = vmatprep.subr.mxu0 0.0
    %862 = vmatpush1.msra.mxu0 %v486
    %863 = vmatprep.subr.mxu0 0.0
    %864 = vmatpush2.msra.mxu0 0.0
    %865 = vmatprep.subr.mxu0 0.0
    %866 = vmatpush2.msra.mxu0 0.0
    %867 = vmatprep.subr.mxu0 0.0
    %868 = vmatpush2.msra.mxu0 0.0
    %869 = vmatprep.subr.mxu0 0.0
    %870 = vmatpush2.msra.mxu0 0.0
    %871 = vmatprep.subr.mxu0 0.0
    %872 = vmatpush2.msra.mxu0 0.0
    %873 = vmatprep.subr.mxu0 0.0
    %874 = vmatpush2.msra.mxu0 0.0
    %875 = vmatprep.subr.mxu0 0.0
    %876 = vmatpush2.msra.mxu0 0.0
    %877 = vmatprep.subr.mxu0 0.0
    %878 = vmatpush2.msra.mxu0 0.0
    %879 = vmatprep.subr.mxu0 0.0
    %880 = vmatpush2.msra.mxu0 0.0
    %881 = vmatprep.subr.mxu0 0.0
    %882 = vmatpush2.msra.mxu0 0.0
    %883 = vmatprep.subr.mxu0 0.0
    %884 = vmatpush2.msra.mxu0 0.0
    %885 = vmatprep.subr.mxu0 0.0
    %886 = vmatpush2.msra.mxu0 0.0
    %887 = vmatprep.subr.mxu0 0.0
    %888 = vmatpush2.msra.mxu0 0.0
    %889 = vmatprep.subr.mxu0 0.0
    %890 = vmatpush2.msra.mxu0 0.0
    %891 = vmatprep.subr.mxu0 0.0
    %892 = vmatpush2.msra.mxu0 0.0
    %893 = vmatprep.subr.mxu0 0.0
    %894 = vmatpush2.msra.mxu0 0.0
    %895 = vmatprep.mubr.f32.mxu0 0.0
    %896 = vmatmul.mubr.f32.gmra.mxu0 %v820
    %v897 = vpop.f32.mrf.mxu0
    %v898 = vadd.f32 0.0, %v897
    %v899 = vpop.f32.mrf.mxu0
    %900 = vmatprep.mubr.f32.mxu0 0.0
    %901 = vmatmul.mubr.f32.gmra.mxu0 %v823
    %v902 = vpop.f32.mrf.mxu0
    %v903 = vadd.f32 0.0, %v902
    %v904 = vpop.f32.mrf.mxu0
    %905 = vmatprep.mubr.f32.mxu0 0.0
    %906 = vmatmul.mubr.f32.gmra.mxu0 %v826
    %v907 = vpop.f32.mrf.mxu0
    %v908 = vadd.f32 0.0, %v907
    %v909 = vpop.f32.mrf.mxu0
    %910 = vmatprep.mubr.f32.mxu0 0.0
    %911 = vmatmul.mubr.f32.gmra.mxu0 %v829
    %v912 = vpop.f32.mrf.mxu0
    %v913 = vadd.f32 0.0, %v912
    %v914 = vpop.f32.mrf.mxu0
    %915 = vdwg.mxu0
    %v917 = vsel %vm730, %v812, 0
    %v920 = vsel %vm730, %v814, 0
    %v923 = vsel %vm730, %v816, 0
    %v926 = vsel %vm730, %v818, 0
    %928 = vmatprep.subr.mxu0 0.0
    %929 = vmatpush1.msra.mxu0 0.0
    %930 = vmatprep.subr.mxu0 0.0
    %931 = vmatpush1.msra.mxu0 0.0
    %932 = vmatprep.subr.mxu0 0.0
    %933 = vmatpush1.msra.mxu0 0.0
    %934 = vmatprep.subr.mxu0 0.0
    %935 = vmatpush1.msra.mxu0 0.0
    %936 = vmatprep.subr.mxu0 0.0
    %937 = vmatpush1.msra.mxu0 0.0
    %938 = vmatprep.subr.mxu0 0.0
    %939 = vmatpush1.msra.mxu0 0.0
    %940 = vmatprep.subr.mxu0 0.0
    %941 = vmatpush1.msra.mxu0 0.0
    %942 = vmatprep.subr.mxu0 0.0
    %943 = vmatpush1.msra.mxu0 0.0
    %944 = vmatprep.subr.mxu0 0.0
    %945 = vmatpush1.msra.mxu0 0.0
    %946 = vmatprep.subr.mxu0 0.0
    %947 = vmatpush1.msra.mxu0 0.0
    %948 = vmatprep.subr.mxu0 0.0
    %949 = vmatpush1.msra.mxu0 0.0
    %950 = vmatprep.subr.mxu0 0.0
    %951 = vmatpush1.msra.mxu0 0.0
    %952 = vmatprep.subr.mxu0 0.0
    %953 = vmatpush1.msra.mxu0 0.0
    %954 = vmatprep.subr.mxu0 0.0
    %955 = vmatpush1.msra.mxu0 0.0
    %956 = vmatprep.subr.mxu0 0.0
    %957 = vmatpush1.msra.mxu0 0.0
    %958 = vmatprep.subr.mxu0 0.0
    %959 = vmatpush1.msra.mxu0 %v491
    %960 = vmatprep.subr.mxu0 0.0
    %961 = vmatpush2.msra.mxu0 0.0
    %962 = vmatprep.subr.mxu0 0.0
    %963 = vmatpush2.msra.mxu0 0.0
    %964 = vmatprep.subr.mxu0 0.0
    %965 = vmatpush2.msra.mxu0 0.0
    %966 = vmatprep.subr.mxu0 0.0
    %967 = vmatpush2.msra.mxu0 0.0
    %968 = vmatprep.subr.mxu0 0.0
    %969 = vmatpush2.msra.mxu0 0.0
    %970 = vmatprep.subr.mxu0 0.0
    %971 = vmatpush2.msra.mxu0 0.0
    %972 = vmatprep.subr.mxu0 0.0
    %973 = vmatpush2.msra.mxu0 0.0
    %974 = vmatprep.subr.mxu0 0.0
    %975 = vmatpush2.msra.mxu0 0.0
    %976 = vmatprep.subr.mxu0 0.0
    %977 = vmatpush2.msra.mxu0 0.0
    %978 = vmatprep.subr.mxu0 0.0
    %979 = vmatpush2.msra.mxu0 0.0
    %980 = vmatprep.subr.mxu0 0.0
    %981 = vmatpush2.msra.mxu0 0.0
    %982 = vmatprep.subr.mxu0 0.0
    %983 = vmatpush2.msra.mxu0 0.0
    %984 = vmatprep.subr.mxu0 0.0
    %985 = vmatpush2.msra.mxu0 0.0
    %986 = vmatprep.subr.mxu0 0.0
    %987 = vmatpush2.msra.mxu0 0.0
    %988 = vmatprep.subr.mxu0 0.0
    %989 = vmatpush2.msra.mxu0 0.0
    %990 = vmatprep.subr.mxu0 0.0
    %991 = vmatpush2.msra.mxu0 0.0
    %992 = vmatprep.mubr.f32.mxu0 0.0
    %993 = vmatmul.mubr.f32.gmra.mxu0 %v917
    %v994 = vpop.f32.mrf.mxu0
    %v995 = vadd.f32 0.0, %v994
    %v996 = vpop.f32.mrf.mxu0
    %997 = vmatprep.mubr.f32.mxu0 0.0
    %998 = vmatmul.mubr.f32.gmra.mxu0 %v920
    %v999 = vpop.f32.mrf.mxu0
    %v1000 = vadd.f32 0.0, %v999
    %v1001 = vpop.f32.mrf.mxu0
    %1002 = vmatprep.mubr.f32.mxu0 0.0
    %1003 = vmatmul.mubr.f32.gmra.mxu0 %v923
    %v1004 = vpop.f32.mrf.mxu0
    %v1005 = vadd.f32 0.0, %v1004
    %v1006 = vpop.f32.mrf.mxu0
    %1007 = vmatprep.mubr.f32.mxu0 0.0
    %1008 = vmatmul.mubr.f32.gmra.mxu0 %v926
    %v1009 = vpop.f32.mrf.mxu0
    %v1010 = vadd.f32 0.0, %v1009
    %v1011 = vpop.f32.mrf.mxu0
    %1012 = vdwg.mxu0
    %v1013 = vmul.f32 %v898, %v497
    %v1014 = vmul.f32 %v903, %v501
    %v1015 = vmul.f32 %v908, %v505
    %v1016 = vmul.f32 %v913, %v509
    %v1017 = vmul.f32 %v995, %v497
    %v1018 = vmul.f32 %v1000, %v501
    %v1019 = vmul.f32 %v1005, %v505
    %v1020 = vmul.f32 %v1010, %v509
    %v1021 = vsel %vm190, %v1013, 0.0
    %v1022 = vsel %vm190, %v1014, 0.0
    %v1023 = vadd.f32 %v1021, %v1022
    %v1024 = vsel %vm190, %v1015, 0.0
    %v1025 = vadd.f32 %v1023, %v1024
    %v1026 = vsel %vm190, %v1016, 0.0
    %v1027 = vadd.f32 %v1025, %v1026
    %v1028 = vsel %vm190, %v1017, 0.0
    %v1029 = vsel %vm190, %v1018, 0.0
    %v1030 = vadd.f32 %v1028, %v1029
    %v1031 = vsel %vm190, %v1019, 0.0
    %v1032 = vadd.f32 %v1030, %v1031
    %v1033 = vsel %vm190, %v1020, 0.0
    %v1034 = vadd.f32 %v1032, %v1033
    %v1036 = vsel %vm190, %v1027, 0
    %v1039 = vsel %vm190, %v1034, 0
    %1041 = vmatprep.subr.mxu0 0.0
    %1042 = vmatpush1.msra.mxu0 0.0
    %1043 = vmatprep.subr.mxu0 0.0
    %1044 = vmatpush1.msra.mxu0 0.0
    %1045 = vmatprep.subr.mxu0 0.0
    %1046 = vmatpush1.msra.mxu0 0.0
    %1047 = vmatprep.subr.mxu0 0.0
    %1048 = vmatpush1.msra.mxu0 0.0
    %1049 = vmatprep.subr.mxu0 0.0
    %1050 = vmatpush1.msra.mxu0 0.0
    %1051 = vmatprep.subr.mxu0 0.0
    %1052 = vmatpush1.msra.mxu0 0.0
    %1053 = vmatprep.subr.mxu0 0.0
    %1054 = vmatpush1.msra.mxu0 0.0
    %1055 = vmatprep.subr.mxu0 0.0
    %1056 = vmatpush1.msra.mxu0 0.0
    %1057 = vmatprep.subr.mxu0 0.0
    %1058 = vmatpush1.msra.mxu0 0.0
    %1059 = vmatprep.subr.mxu0 0.0
    %1060 = vmatpush1.msra.mxu0 0.0
    %1061 = vmatprep.subr.mxu0 0.0
    %1062 = vmatpush1.msra.mxu0 0.0
    %1063 = vmatprep.subr.mxu0 0.0
    %1064 = vmatpush1.msra.mxu0 0.0
    %1065 = vmatprep.subr.mxu0 0.0
    %1066 = vmatpush1.msra.mxu0 %v167
    %1067 = vmatprep.subr.mxu0 0.0
    %1068 = vmatpush1.msra.mxu0 %v166
    %1069 = vmatprep.subr.mxu0 0.0
    %1070 = vmatpush1.msra.mxu0 %v165
    %1071 = vmatprep.subr.mxu0 0.0
    %1072 = vmatpush1.msra.mxu0 %v164
    %1073 = vmatprep.subr.mxu0 0.0
    %1074 = vmatpush2.msra.mxu0 0.0
    %1075 = vmatprep.subr.mxu0 0.0
    %1076 = vmatpush2.msra.mxu0 0.0
    %1077 = vmatprep.subr.mxu0 0.0
    %1078 = vmatpush2.msra.mxu0 0.0
    %1079 = vmatprep.subr.mxu0 0.0
    %1080 = vmatpush2.msra.mxu0 0.0
    %1081 = vmatprep.subr.mxu0 0.0
    %1082 = vmatpush2.msra.mxu0 0.0
    %1083 = vmatprep.subr.mxu0 0.0
    %1084 = vmatpush2.msra.mxu0 0.0
    %1085 = vmatprep.subr.mxu0 0.0
    %1086 = vmatpush2.msra.mxu0 0.0
    %1087 = vmatprep.subr.mxu0 0.0
    %1088 = vmatpush2.msra.mxu0 0.0
    %1089 = vmatprep.subr.mxu0 0.0
    %1090 = vmatpush2.msra.mxu0 0.0
    %1091 = vmatprep.subr.mxu0 0.0
    %1092 = vmatpush2.msra.mxu0 0.0
    %1093 = vmatprep.subr.mxu0 0.0
    %1094 = vmatpush2.msra.mxu0 0.0
    %1095 = vmatprep.subr.mxu0 0.0
    %1096 = vmatpush2.msra.mxu0 0.0
    %1097 = vmatprep.subr.mxu0 0.0
    %1098 = vmatpush2.msra.mxu0 0.0
    %1099 = vmatprep.subr.mxu0 0.0
    %1100 = vmatpush2.msra.mxu0 0.0
    %1101 = vmatprep.subr.mxu0 0.0
    %1102 = vmatpush2.msra.mxu0 0.0
    %1103 = vmatprep.subr.mxu0 0.0
    %1104 = vmatpush2.msra.mxu0 0.0
    %1105 = vmatprep.mubr.f32.mxu0 0.0
    %1106 = vmatmul.mubr.f32.gmra.mxu0 %v1036
    %v1107 = vpop.f32.mrf.mxu0
    %v1108 = vadd.f32 0.0, %v1107
    %v1109 = vpop.f32.mrf.mxu0
    %1110 = vmatprep.mubr.f32.mxu0 0.0
    %1111 = vmatmul.mubr.f32.gmra.mxu0 %v1039
    %v1112 = vpop.f32.mrf.mxu0
    %v1113 = vadd.f32 0.0, %v1112
    %v1114 = vpop.f32.mrf.mxu0
    %1115 = vdwg.mxu0
    %v1116 = vadd.f32 %v122, %v1108
    %v1117 = vadd.f32 %v123, %v1113
    %v1118 = vlaneseq
    %v1119 = vshrl.u32 %v1118, 7
    %v1120 = vsub.s32 0, %v1119
    %v1121 = vrot.slane %v183, %v1120
    %v1122 = vadd.f32 %v1116, %v1121
    %v1123 = vadd.f32 %v1117, %v1121
    %v1124 = vsel %vm190, %v1122, 0.0
    %1125 = vadd.xlane.f32.xlu0 %v1124
    %v1126 = vpop.xlane.xlu0 %1125
    %v1127 = vsel %vm190, %v1123, 0.0
    %1128 = vadd.xlane.f32.xlu0 %v1127
    %v1129 = vpop.xlane.xlu0 %1128
    %v1130 = vmul.f32 %v1126, %v197
    %v1131 = vmul.f32 %v1129, %v197
    %v1132 = vsub.f32 %v1122, %v1130
    %v1133 = vsub.f32 %v1123, %v1131
    %v1134 = vmul.f32 %v1132, %v1132
    %v1135 = vmul.f32 %v1133, %v1133
    %v1136 = vsel %vm190, %v1134, 0.0
    %1137 = vadd.xlane.f32.xlu0 %v1136
    %v1138 = vpop.xlane.xlu0 %1137
    %v1139 = vsel %vm190, %v1135, 0.0
    %1140 = vadd.xlane.f32.xlu0 %v1139
    %v1141 = vpop.xlane.xlu0 %1140
    %v1142 = vmul.f32 %v1138, %v210
    %v1143 = vmul.f32 %v1141, %v210
    %v1144 = vlaneseq
    %v1145 = vshrl.u32 %v1144, 7
    %v1146 = vsub.s32 0, %v1145
    %v1147 = vrot.slane %v187, %v1146
    %v1148 = vmul.f32 %v1147, %v1132
    %v1149 = vmul.f32 %v1147, %v1133
    %v1150 = vrsqrt.pop %v1142
    %v1151 = vmul.f32 %v1142, %v1150
    %vm1152 = vcmp.eq.f32.partialorder %v1142, inf
    %v1153 = vsel %vm1152, %v1142, %v1151
    %vm1154 = vcmp.eq.f32.partialorder %v1142, 0.0
    %v1155 = vand.u32 %v1142, 2147483648
    %v1156 = vsel %vm1154, %v1155, %v1153
    %v1157 = vrsqrt.pop %v1143
    %v1158 = vmul.f32 %v1143, %v1157
    %vm1159 = vcmp.eq.f32.partialorder %v1143, inf
    %v1160 = vsel %vm1159, %v1143, %v1158
    %vm1161 = vcmp.eq.f32.partialorder %v1143, 0.0
    %v1162 = vand.u32 %v1143, 2147483648
    %v1163 = vsel %vm1161, %v1162, %v1160
    %v1164 = vadd.f32 %v1156, 1e-05
    %v1165 = vadd.f32 %v1163, 1e-05
    %v1166 = vrcp.pop %v1164
    %v1167 = vmul.f32 %v1148, %v1166
    %v1168 = vrcp.pop %v1165
    %v1169 = vmul.f32 %v1149, %v1168
    %v1170 = vlaneseq
    %v1171 = vshrl.u32 %v1170, 7
    %v1172 = vsub.s32 0, %v1171
    %v1173 = vrot.slane %v188, %v1172
    %v1174 = vadd.f32 %v1167, %v1173
    %v1175 = vadd.f32 %v1169, %v1173
    %v1176 = vlaneseq
    %v1177 = vshrl.u32 %v1176, 7
    %v1178 = vsub.s32 0, %v1177
    %v1179 = vrot.slane %v189, %v1178
    %v1181 = vsel %vm190, %v1174, 0
    %v1184 = vsel %vm190, %v1175, 0
    %1186 = vmatprep.subr.mxu0 0.0
    %1187 = vmatpush1.msra.mxu0 0.0
    %1188 = vmatprep.subr.mxu0 0.0
    %1189 = vmatpush1.msra.mxu0 0.0
    %1190 = vmatprep.subr.mxu0 0.0
    %1191 = vmatpush1.msra.mxu0 0.0
    %1192 = vmatprep.subr.mxu0 0.0
    %1193 = vmatpush1.msra.mxu0 0.0
    %1194 = vmatprep.subr.mxu0 0.0
    %1195 = vmatpush1.msra.mxu0 0.0
    %1196 = vmatprep.subr.mxu0 0.0
    %1197 = vmatpush1.msra.mxu0 0.0
    %1198 = vmatprep.subr.mxu0 0.0
    %1199 = vmatpush1.msra.mxu0 0.0
    %1200 = vmatprep.subr.mxu0 0.0
    %1201 = vmatpush1.msra.mxu0 0.0
    %1202 = vmatprep.subr.mxu0 0.0
    %1203 = vmatpush1.msra.mxu0 0.0
    %1204 = vmatprep.subr.mxu0 0.0
    %1205 = vmatpush1.msra.mxu0 0.0
    %1206 = vmatprep.subr.mxu0 0.0
    %1207 = vmatpush1.msra.mxu0 0.0
    %1208 = vmatprep.subr.mxu0 0.0
    %1209 = vmatpush1.msra.mxu0 0.0
    %1210 = vmatprep.subr.mxu0 0.0
    %1211 = vmatpush1.msra.mxu0 %v171
    %1212 = vmatprep.subr.mxu0 0.0
    %1213 = vmatpush1.msra.mxu0 %v170
    %1214 = vmatprep.subr.mxu0 0.0
    %1215 = vmatpush1.msra.mxu0 %v169
    %1216 = vmatprep.subr.mxu0 0.0
    %1217 = vmatpush1.msra.mxu0 %v168
    %1218 = vmatprep.subr.mxu0 0.0
    %1219 = vmatpush2.msra.mxu0 0.0
    %1220 = vmatprep.subr.mxu0 0.0
    %1221 = vmatpush2.msra.mxu0 0.0
    %1222 = vmatprep.subr.mxu0 0.0
    %1223 = vmatpush2.msra.mxu0 0.0
    %1224 = vmatprep.subr.mxu0 0.0
    %1225 = vmatpush2.msra.mxu0 0.0
    %1226 = vmatprep.subr.mxu0 0.0
    %1227 = vmatpush2.msra.mxu0 0.0
    %1228 = vmatprep.subr.mxu0 0.0
    %1229 = vmatpush2.msra.mxu0 0.0
    %1230 = vmatprep.subr.mxu0 0.0
    %1231 = vmatpush2.msra.mxu0 0.0
    %1232 = vmatprep.subr.mxu0 0.0
    %1233 = vmatpush2.msra.mxu0 0.0
    %1234 = vmatprep.subr.mxu0 0.0
    %1235 = vmatpush2.msra.mxu0 0.0
    %1236 = vmatprep.subr.mxu0 0.0
    %1237 = vmatpush2.msra.mxu0 0.0
    %1238 = vmatprep.subr.mxu0 0.0
    %1239 = vmatpush2.msra.mxu0 0.0
    %1240 = vmatprep.subr.mxu0 0.0
    %1241 = vmatpush2.msra.mxu0 0.0
    %1242 = vmatprep.subr.mxu0 0.0
    %1243 = vmatpush2.msra.mxu0 0.0
    %1244 = vmatprep.subr.mxu0 0.0
    %1245 = vmatpush2.msra.mxu0 0.0
    %1246 = vmatprep.subr.mxu0 0.0
    %1247 = vmatpush2.msra.mxu0 0.0
    %1248 = vmatprep.subr.mxu0 0.0
    %1249 = vmatpush2.msra.mxu0 0.0
    %1250 = vmatprep.mubr.f32.mxu0 0.0
    %1251 = vmatmul.mubr.f32.gmra.mxu0 %v1181
    %v1252 = vpop.f32.mrf.mxu0
    %v1253 = vadd.f32 %v1179, %v1252
    %v1254 = vpop.f32.mrf.mxu0
    %1255 = vmatprep.mubr.f32.mxu0 0.0
    %1256 = vmatmul.mubr.f32.gmra.mxu0 %v1184
    %v1257 = vpop.f32.mrf.mxu0
    %v1258 = vadd.f32 %v1179, %v1257
    %v1259 = vpop.f32.mrf.mxu0
    %1260 = vdwg.mxu0
    %v1261 = vmax.f32 %v1253, 0.0
    %v1262 = vmax.f32 %v1258, 0.0
    %vm1263 = vcmask 523264
    %v1265 = vsel %vm1263, %v1261, 0
    %v1268 = vsel %vm1263, %v1262, 0
    %1270 = vmatprep.subr.mxu0 0.0
    %1271 = vmatpush1.msra.mxu0 0.0
    %1272 = vmatprep.subr.mxu0 0.0
    %1273 = vmatpush1.msra.mxu0 0.0
    %1274 = vmatprep.subr.mxu0 0.0
    %1275 = vmatpush1.msra.mxu0 0.0
    %1276 = vmatprep.subr.mxu0 0.0
    %1277 = vmatpush1.msra.mxu0 0.0
    %1278 = vmatprep.subr.mxu0 0.0
    %1279 = vmatpush1.msra.mxu0 0.0
    %1280 = vmatprep.subr.mxu0 0.0
    %1281 = vmatpush1.msra.mxu0 0.0
    %1282 = vmatprep.subr.mxu0 0.0
    %1283 = vmatpush1.msra.mxu0 0.0
    %1284 = vmatprep.subr.mxu0 0.0
    %1285 = vmatpush1.msra.mxu0 0.0
    %1286 = vmatprep.subr.mxu0 0.0
    %1287 = vmatpush1.msra.mxu0 %v179
    %1288 = vmatprep.subr.mxu0 0.0
    %1289 = vmatpush1.msra.mxu0 %v178
    %1290 = vmatprep.subr.mxu0 0.0
    %1291 = vmatpush1.msra.mxu0 %v177
    %1292 = vmatprep.subr.mxu0 0.0
    %1293 = vmatpush1.msra.mxu0 %v176
    %1294 = vmatprep.subr.mxu0 0.0
    %1295 = vmatpush1.msra.mxu0 %v175
    %1296 = vmatprep.subr.mxu0 0.0
    %1297 = vmatpush1.msra.mxu0 %v174
    %1298 = vmatprep.subr.mxu0 0.0
    %1299 = vmatpush1.msra.mxu0 %v173
    %1300 = vmatprep.subr.mxu0 0.0
    %1301 = vmatpush1.msra.mxu0 %v172
    %1302 = vmatprep.subr.mxu0 0.0
    %1303 = vmatpush2.msra.mxu0 0.0
    %1304 = vmatprep.subr.mxu0 0.0
    %1305 = vmatpush2.msra.mxu0 0.0
    %1306 = vmatprep.subr.mxu0 0.0
    %1307 = vmatpush2.msra.mxu0 0.0
    %1308 = vmatprep.subr.mxu0 0.0
    %1309 = vmatpush2.msra.mxu0 0.0
    %1310 = vmatprep.subr.mxu0 0.0
    %1311 = vmatpush2.msra.mxu0 0.0
    %1312 = vmatprep.subr.mxu0 0.0
    %1313 = vmatpush2.msra.mxu0 0.0
    %1314 = vmatprep.subr.mxu0 0.0
    %1315 = vmatpush2.msra.mxu0 0.0
    %1316 = vmatprep.subr.mxu0 0.0
    %1317 = vmatpush2.msra.mxu0 0.0
    %1318 = vmatprep.subr.mxu0 0.0
    %1319 = vmatpush2.msra.mxu0 0.0
    %1320 = vmatprep.subr.mxu0 0.0
    %1321 = vmatpush2.msra.mxu0 0.0
    %1322 = vmatprep.subr.mxu0 0.0
    %1323 = vmatpush2.msra.mxu0 0.0
    %1324 = vmatprep.subr.mxu0 0.0
    %1325 = vmatpush2.msra.mxu0 0.0
    %1326 = vmatprep.subr.mxu0 0.0
    %1327 = vmatpush2.msra.mxu0 0.0
    %1328 = vmatprep.subr.mxu0 0.0
    %1329 = vmatpush2.msra.mxu0 0.0
    %1330 = vmatprep.subr.mxu0 0.0
    %1331 = vmatpush2.msra.mxu0 0.0
    %1332 = vmatprep.subr.mxu0 0.0
    %1333 = vmatpush2.msra.mxu0 0.0
    %1334 = vmatprep.mubr.f32.mxu0 0.0
    %1335 = vmatmul.mubr.f32.gmra.mxu0 %v1265
    %v1336 = vpop.f32.mrf.mxu0
    %v1337 = vadd.f32 0.0, %v1336
    %v1338 = vpop.f32.mrf.mxu0
    %1339 = vmatprep.mubr.f32.mxu0 0.0
    %1340 = vmatmul.mubr.f32.gmra.mxu0 %v1268
    %v1341 = vpop.f32.mrf.mxu0
    %v1342 = vadd.f32 0.0, %v1341
    %v1343 = vpop.f32.mrf.mxu0
    %1344 = vdwg.mxu0
    %v1345 = vadd.f32 %v1122, %v1337
    %v1346 = vadd.f32 %v1123, %v1342
    %v1347 = vlaneseq
    %v1348 = vshrl.u32 %v1347, 7
    %v1349 = vsub.s32 0, %v1348
    %v1350 = vrot.slane %v184, %v1349
    %v1351 = vadd.f32 %v1345, %v1350
    %v1352 = vadd.f32 %v1346, %v1350
    %s1353 = scalar_lea.vmem %s3, 32
    %v1354 = vld [vmem:[%s1353] sm:$0xff]
    %v1355 = vld [vmem:[%s1353 + $0x8] sm:$0xff]
    %v1356 = vld [vmem:[%s1353 + $0x10] sm:$0xff]
    %v1357 = vld [vmem:[%s1353 + $0x18] sm:$0xff]
    %s1358 = scalar_lea.vmem %s4, 32
    %v1359 = vld [vmem:[%s1358] sm:$0xff]
    %v1360 = vld [vmem:[%s1358 + $0x8] sm:$0xff]
    %v1361 = vld [vmem:[%s1358 + $0x10] sm:$0xff]
    %v1362 = vld [vmem:[%s1358 + $0x18] sm:$0xff]
    %s1363 = scalar_lea.vmem %s5, 32
    %v1364 = vld [vmem:[%s1363] sm:$0xff]
    %v1365 = vld [vmem:[%s1363 + $0x8] sm:$0xff]
    %v1366 = vld [vmem:[%s1363 + $0x10] sm:$0xff]
    %v1367 = vld [vmem:[%s1363 + $0x18] sm:$0xff]
    %s1368 = scalar_lea.vmem [#allocation8], 32
    %v1369 = vld [vmem:[%s1368] sm:$0xff]
    %v1370 = vld [vmem:[%s1368 + $0x8] sm:$0xff]
    %v1371 = vld [vmem:[%s1368 + $0x10] sm:$0xff]
    %v1372 = vld [vmem:[%s1368 + $0x18] sm:$0xff]
    %s1373 = scalar_lea.vmem [#allocation10], 32
    %v1374 = vld [vmem:[%s1373] sm:$0xff]
    %v1375 = vld [vmem:[%s1373 + $0x8] sm:$0xff]
    %v1376 = vld [vmem:[%s1373 + $0x10] sm:$0xff]
    %v1377 = vld [vmem:[%s1373 + $0x18] sm:$0xff]
    %s1378 = scalar_lea.vmem %s8, 64
    %v1379 = vld [vmem:[%s1378] sm:$0xff]
    %v1380 = vld [vmem:[%s1378 + $0x8] sm:$0xff]
    %v1381 = vld [vmem:[%s1378 + $0x10] sm:$0xff]
    %v1382 = vld [vmem:[%s1378 + $0x18] sm:$0xff]
    %v1383 = vld [vmem:[%s1378 + $0x20] sm:$0xff]
    %v1384 = vld [vmem:[%s1378 + $0x28] sm:$0xff]
    %v1385 = vld [vmem:[%s1378 + $0x30] sm:$0xff]
    %v1386 = vld [vmem:[%s1378 + $0x38] sm:$0xff]
    %v1387 = vld [vmem:[#allocation11 + $0x9] sm:$0x1]
    %v1388 = vld [vmem:[#allocation11 + $0xa] sm:$0x1]
    %v1389 = vld [vmem:[#allocation11 + $0xb] sm:$0x1]
    %v1390 = vld [vmem:[#allocation11 + $0xc] sm:$0x1]
    %v1391 = vld [vmem:[#allocation11 + $0xd] sm:$0x1]
    %v1392 = vld [vmem:[#allocation11 + $0xe] sm:$0x1]
    %v1393 = vld [vmem:[#allocation11 + $0xf] sm:$0x1]
    %v1394 = vld [vmem:[#allocation11 + $0x10] sm:$0x1]
    %v1395 = vld [vmem:[#allocation11 + $0x11] sm:$0x1]
    %v1396 = vld [vmem:[%s10 + $0x1] sm:$0x1]
    %v1397 = vsel %vm190, %v1351, 0.0
    %1398 = vadd.xlane.f32.xlu0 %v1397
    %v1399 = vpop.xlane.xlu0 %1398
    %v1400 = vsel %vm190, %v1352, 0.0
    %1401 = vadd.xlane.f32.xlu0 %v1400
    %v1402 = vpop.xlane.xlu0 %1401
    %v1403 = vmul.f32 %v1399, %v197
    %v1404 = vmul.f32 %v1402, %v197
    %v1405 = vsub.f32 %v1351, %v1403
    %v1406 = vsub.f32 %v1352, %v1404
    %v1407 = vmul.f32 %v1405, %v1405
    %v1408 = vmul.f32 %v1406, %v1406
    %v1409 = vsel %vm190, %v1407, 0.0
    %1410 = vadd.xlane.f32.xlu0 %v1409
    %v1411 = vpop.xlane.xlu0 %1410
    %v1412 = vsel %vm190, %v1408, 0.0
    %1413 = vadd.xlane.f32.xlu0 %v1412
    %v1414 = vpop.xlane.xlu0 %1413
    %v1415 = vmul.f32 %v1411, %v210
    %v1416 = vmul.f32 %v1414, %v210
    %v1417 = vlaneseq
    %v1418 = vshrl.u32 %v1417, 7
    %v1419 = vsub.s32 0, %v1418
    %v1420 = vrot.slane %v1392, %v1419
    %v1421 = vmul.f32 %v1420, %v1405
    %v1422 = vmul.f32 %v1420, %v1406
    %v1423 = vrsqrt.pop %v1415
    %v1424 = vmul.f32 %v1415, %v1423
    %vm1425 = vcmp.eq.f32.partialorder %v1415, inf
    %v1426 = vsel %vm1425, %v1415, %v1424
    %vm1427 = vcmp.eq.f32.partialorder %v1415, 0.0
    %v1428 = vand.u32 %v1415, 2147483648
    %v1429 = vsel %vm1427, %v1428, %v1426
    %v1430 = vrsqrt.pop %v1416
    %v1431 = vmul.f32 %v1416, %v1430
    %vm1432 = vcmp.eq.f32.partialorder %v1416, inf
    %v1433 = vsel %vm1432, %v1416, %v1431
    %vm1434 = vcmp.eq.f32.partialorder %v1416, 0.0
    %v1435 = vand.u32 %v1416, 2147483648
    %v1436 = vsel %vm1434, %v1435, %v1433
    %v1437 = vadd.f32 %v1429, 1e-05
    %v1438 = vadd.f32 %v1436, 1e-05
    %v1439 = vrcp.pop %v1437
    %v1440 = vmul.f32 %v1421, %v1439
    %v1441 = vrcp.pop %v1438
    %v1442 = vmul.f32 %v1422, %v1441
    %v1443 = vlaneseq
    %v1444 = vshrl.u32 %v1443, 7
    %v1445 = vsub.s32 0, %v1444
    %v1446 = vrot.slane %v1393, %v1445
    %v1447 = vadd.f32 %v1440, %v1446
    %v1448 = vadd.f32 %v1442, %v1446
    %v1449 = vlaneseq
    %v1450 = vshrl.u32 %v1449, 7
    %v1451 = vsub.s32 0, %v1450
    %v1452 = vrot.slane %v1387, %v1451
    %v1454 = vsel %vm190, %v1447, 0
    %v1457 = vsel %vm190, %v1448, 0
    %1459 = vmatprep.subr.mxu0 0.0
    %1460 = vmatpush1.msra.mxu0 0.0
    %1461 = vmatprep.subr.mxu0 0.0
    %1462 = vmatpush1.msra.mxu0 0.0
    %1463 = vmatprep.subr.mxu0 0.0
    %1464 = vmatpush1.msra.mxu0 0.0
    %1465 = vmatprep.subr.mxu0 0.0
    %1466 = vmatpush1.msra.mxu0 0.0
    %1467 = vmatprep.subr.mxu0 0.0
    %1468 = vmatpush1.msra.mxu0 0.0
    %1469 = vmatprep.subr.mxu0 0.0
    %1470 = vmatpush1.msra.mxu0 0.0
    %1471 = vmatprep.subr.mxu0 0.0
    %1472 = vmatpush1.msra.mxu0 0.0
    %1473 = vmatprep.subr.mxu0 0.0
    %1474 = vmatpush1.msra.mxu0 0.0
    %1475 = vmatprep.subr.mxu0 0.0
    %1476 = vmatpush1.msra.mxu0 0.0
    %1477 = vmatprep.subr.mxu0 0.0
    %1478 = vmatpush1.msra.mxu0 0.0
    %1479 = vmatprep.subr.mxu0 0.0
    %1480 = vmatpush1.msra.mxu0 0.0
    %1481 = vmatprep.subr.mxu0 0.0
    %1482 = vmatpush1.msra.mxu0 0.0
    %1483 = vmatprep.subr.mxu0 0.0
    %1484 = vmatpush1.msra.mxu0 %v1357
    %1485 = vmatprep.subr.mxu0 0.0
    %1486 = vmatpush1.msra.mxu0 %v1356
    %1487 = vmatprep.subr.mxu0 0.0
    %1488 = vmatpush1.msra.mxu0 %v1355
    %1489 = vmatprep.subr.mxu0 0.0
    %1490 = vmatpush1.msra.mxu0 %v1354
    %1491 = vmatprep.subr.mxu0 0.0
    %1492 = vmatpush2.msra.mxu0 0.0
    %1493 = vmatprep.subr.mxu0 0.0
    %1494 = vmatpush2.msra.mxu0 0.0
    %1495 = vmatprep.subr.mxu0 0.0
    %1496 = vmatpush2.msra.mxu0 0.0
    %1497 = vmatprep.subr.mxu0 0.0
    %1498 = vmatpush2.msra.mxu0 0.0
    %1499 = vmatprep.subr.mxu0 0.0
    %1500 = vmatpush2.msra.mxu0 0.0
    %1501 = vmatprep.subr.mxu0 0.0
    %1502 = vmatpush2.msra.mxu0 0.0
    %1503 = vmatprep.subr.mxu0 0.0
    %1504 = vmatpush2.msra.mxu0 0.0
    %1505 = vmatprep.subr.mxu0 0.0
    %1506 = vmatpush2.msra.mxu0 0.0
    %1507 = vmatprep.subr.mxu0 0.0
    %1508 = vmatpush2.msra.mxu0 0.0
    %1509 = vmatprep.subr.mxu0 0.0
    %1510 = vmatpush2.msra.mxu0 0.0
    %1511 = vmatprep.subr.mxu0 0.0
    %1512 = vmatpush2.msra.mxu0 0.0
    %1513 = vmatprep.subr.mxu0 0.0
    %1514 = vmatpush2.msra.mxu0 0.0
    %1515 = vmatprep.subr.mxu0 0.0
    %1516 = vmatpush2.msra.mxu0 0.0
    %1517 = vmatprep.subr.mxu0 0.0
    %1518 = vmatpush2.msra.mxu0 0.0
    %1519 = vmatprep.subr.mxu0 0.0
    %1520 = vmatpush2.msra.mxu0 0.0
    %1521 = vmatprep.subr.mxu0 0.0
    %1522 = vmatpush2.msra.mxu0 0.0
    %1523 = vmatprep.mubr.f32.mxu0 0.0
    %1524 = vmatmul.mubr.f32.gmra.mxu0 %v1454
    %v1525 = vpop.f32.mrf.mxu0
    %v1526 = vadd.f32 %v1452, %v1525
    %v1527 = vpop.f32.mrf.mxu0
    %1528 = vmatprep.mubr.f32.mxu0 0.0
    %1529 = vmatmul.mubr.f32.gmra.mxu0 %v1457
    %v1530 = vpop.f32.mrf.mxu0
    %v1531 = vadd.f32 %v1452, %v1530
    %v1532 = vpop.f32.mrf.mxu0
    %1533 = vdwg.mxu0
    %v1534 = vlaneseq
    %v1535 = vshrl.u32 %v1534, 7
    %v1536 = vsub.s32 0, %v1535
    %v1537 = vrot.slane %v1388, %v1536
    %1538 = vmatprep.subr.mxu0 0.0
    %1539 = vmatpush1.msra.mxu0 0.0
    %1540 = vmatprep.subr.mxu0 0.0
    %1541 = vmatpush1.msra.mxu0 0.0
    %1542 = vmatprep.subr.mxu0 0.0
    %1543 = vmatpush1.msra.mxu0 0.0
    %1544 = vmatprep.subr.mxu0 0.0
    %1545 = vmatpush1.msra.mxu0 0.0
    %1546 = vmatprep.subr.mxu0 0.0
    %1547 = vmatpush1.msra.mxu0 0.0
    %1548 = vmatprep.subr.mxu0 0.0
    %1549 = vmatpush1.msra.mxu0 0.0
    %1550 = vmatprep.subr.mxu0 0.0
    %1551 = vmatpush1.msra.mxu0 0.0
    %1552 = vmatprep.subr.mxu0 0.0
    %1553 = vmatpush1.msra.mxu0 0.0
    %1554 = vmatprep.subr.mxu0 0.0
    %1555 = vmatpush1.msra.mxu0 0.0
    %1556 = vmatprep.subr.mxu0 0.0
    %1557 = vmatpush1.msra.mxu0 0.0
    %1558 = vmatprep.subr.mxu0 0.0
    %1559 = vmatpush1.msra.mxu0 0.0
    %1560 = vmatprep.subr.mxu0 0.0
    %1561 = vmatpush1.msra.mxu0 0.0
    %1562 = vmatprep.subr.mxu0 0.0
    %1563 = vmatpush1.msra.mxu0 %v1362
    %1564 = vmatprep.subr.mxu0 0.0
    %1565 = vmatpush1.msra.mxu0 %v1361
    %1566 = vmatprep.subr.mxu0 0.0
    %1567 = vmatpush1.msra.mxu0 %v1360
    %1568 = vmatprep.subr.mxu0 0.0
    %1569 = vmatpush1.msra.mxu0 %v1359
    %1570 = vmatprep.subr.mxu0 0.0
    %1571 = vmatpush2.msra.mxu0 0.0
    %1572 = vmatprep.subr.mxu0 0.0
    %1573 = vmatpush2.msra.mxu0 0.0
    %1574 = vmatprep.subr.mxu0 0.0
    %1575 = vmatpush2.msra.mxu0 0.0
    %1576 = vmatprep.subr.mxu0 0.0
    %1577 = vmatpush2.msra.mxu0 0.0
    %1578 = vmatprep.subr.mxu0 0.0
    %1579 = vmatpush2.msra.mxu0 0.0
    %1580 = vmatprep.subr.mxu0 0.0
    %1581 = vmatpush2.msra.mxu0 0.0
    %1582 = vmatprep.subr.mxu0 0.0
    %1583 = vmatpush2.msra.mxu0 0.0
    %1584 = vmatprep.subr.mxu0 0.0
    %1585 = vmatpush2.msra.mxu0 0.0
    %1586 = vmatprep.subr.mxu0 0.0
    %1587 = vmatpush2.msra.mxu0 0.0
    %1588 = vmatprep.subr.mxu0 0.0
    %1589 = vmatpush2.msra.mxu0 0.0
    %1590 = vmatprep.subr.mxu0 0.0
    %1591 = vmatpush2.msra.mxu0 0.0
    %1592 = vmatprep.subr.mxu0 0.0
    %1593 = vmatpush2.msra.mxu0 0.0
    %1594 = vmatprep.subr.mxu0 0.0
    %1595 = vmatpush2.msra.mxu0 0.0
    %1596 = vmatprep.subr.mxu0 0.0
    %1597 = vmatpush2.msra.mxu0 0.0
    %1598 = vmatprep.subr.mxu0 0.0
    %1599 = vmatpush2.msra.mxu0 0.0
    %1600 = vmatprep.subr.mxu0 0.0
    %1601 = vmatpush2.msra.mxu0 0.0
    %1602 = vmatprep.mubr.f32.mxu0 0.0
    %1603 = vmatmul.mubr.f32.gmra.mxu0 %v335
    %v1604 = vpop.f32.mrf.mxu0
    %v1605 = vadd.f32 %v1537, %v1604
    %v1606 = vpop.f32.mrf.mxu0
    %1607 = vmatprep.mubr.f32.mxu0 0.0
    %1608 = vmatmul.mubr.f32.gmra.mxu0 %v338
    %v1609 = vpop.f32.mrf.mxu0
    %v1610 = vadd.f32 %v1537, %v1609
    %v1611 = vpop.f32.mrf.mxu0
    %1612 = vdwg.mxu0
    %v1613 = vlaneseq
    %v1614 = vshrl.u32 %v1613, 7
    %v1615 = vsub.s32 0, %v1614
    %v1616 = vrot.slane %v1389, %v1615
    %1617 = vmatprep.subr.mxu0 0.0
    %1618 = vmatpush1.msra.mxu0 0.0
    %1619 = vmatprep.subr.mxu0 0.0
    %1620 = vmatpush1.msra.mxu0 0.0
    %1621 = vmatprep.subr.mxu0 0.0
    %1622 = vmatpush1.msra.mxu0 0.0
    %1623 = vmatprep.subr.mxu0 0.0
    %1624 = vmatpush1.msra.mxu0 0.0
    %1625 = vmatprep.subr.mxu0 0.0
    %1626 = vmatpush1.msra.mxu0 0.0
    %1627 = vmatprep.subr.mxu0 0.0
    %1628 = vmatpush1.msra.mxu0 0.0
    %1629 = vmatprep.subr.mxu0 0.0
    %1630 = vmatpush1.msra.mxu0 0.0
    %1631 = vmatprep.subr.mxu0 0.0
    %1632 = vmatpush1.msra.mxu0 0.0
    %1633 = vmatprep.subr.mxu0 0.0
    %1634 = vmatpush1.msra.mxu0 0.0
    %1635 = vmatprep.subr.mxu0 0.0
    %1636 = vmatpush1.msra.mxu0 0.0
    %1637 = vmatprep.subr.mxu0 0.0
    %1638 = vmatpush1.msra.mxu0 0.0
    %1639 = vmatprep.subr.mxu0 0.0
    %1640 = vmatpush1.msra.mxu0 0.0
    %1641 = vmatprep.subr.mxu0 0.0
    %1642 = vmatpush1.msra.mxu0 %v1367
    %1643 = vmatprep.subr.mxu0 0.0
    %1644 = vmatpush1.msra.mxu0 %v1366
    %1645 = vmatprep.subr.mxu0 0.0
    %1646 = vmatpush1.msra.mxu0 %v1365
    %1647 = vmatprep.subr.mxu0 0.0
    %1648 = vmatpush1.msra.mxu0 %v1364
    %1649 = vmatprep.subr.mxu0 0.0
    %1650 = vmatpush2.msra.mxu0 0.0
    %1651 = vmatprep.subr.mxu0 0.0
    %1652 = vmatpush2.msra.mxu0 0.0
    %1653 = vmatprep.subr.mxu0 0.0
    %1654 = vmatpush2.msra.mxu0 0.0
    %1655 = vmatprep.subr.mxu0 0.0
    %1656 = vmatpush2.msra.mxu0 0.0
    %1657 = vmatprep.subr.mxu0 0.0
    %1658 = vmatpush2.msra.mxu0 0.0
    %1659 = vmatprep.subr.mxu0 0.0
    %1660 = vmatpush2.msra.mxu0 0.0
    %1661 = vmatprep.subr.mxu0 0.0
    %1662 = vmatpush2.msra.mxu0 0.0
    %1663 = vmatprep.subr.mxu0 0.0
    %1664 = vmatpush2.msra.mxu0 0.0
    %1665 = vmatprep.subr.mxu0 0.0
    %1666 = vmatpush2.msra.mxu0 0.0
    %1667 = vmatprep.subr.mxu0 0.0
    %1668 = vmatpush2.msra.mxu0 0.0
    %1669 = vmatprep.subr.mxu0 0.0
    %1670 = vmatpush2.msra.mxu0 0.0
    %1671 = vmatprep.subr.mxu0 0.0
    %1672 = vmatpush2.msra.mxu0 0.0
    %1673 = vmatprep.subr.mxu0 0.0
    %1674 = vmatpush2.msra.mxu0 0.0
    %1675 = vmatprep.subr.mxu0 0.0
    %1676 = vmatpush2.msra.mxu0 0.0
    %1677 = vmatprep.subr.mxu0 0.0
    %1678 = vmatpush2.msra.mxu0 0.0
    %1679 = vmatprep.subr.mxu0 0.0
    %1680 = vmatpush2.msra.mxu0 0.0
    %1681 = vmatprep.mubr.f32.mxu0 0.0
    %1682 = vmatmul.mubr.f32.gmra.mxu0 %v335
    %v1683 = vpop.f32.mrf.mxu0
    %v1684 = vadd.f32 %v1616, %v1683
    %v1685 = vpop.f32.mrf.mxu0
    %1686 = vmatprep.mubr.f32.mxu0 0.0
    %1687 = vmatmul.mubr.f32.gmra.mxu0 %v338
    %v1688 = vpop.f32.mrf.mxu0
    %v1689 = vadd.f32 %v1616, %v1688
    %v1690 = vpop.f32.mrf.mxu0
    %1691 = vdwg.mxu0
    %v1692 = vmul.f32 %v1526, %v497
    %v1693 = vmul.f32 %v1526, %v501
    %v1694 = vmul.f32 %v1526, %v505
    %v1695 = vmul.f32 %v1526, %v509
    %v1696 = vmul.f32 %v1531, %v497
    %v1697 = vmul.f32 %v1531, %v501
    %v1698 = vmul.f32 %v1531, %v505
    %v1699 = vmul.f32 %v1531, %v509
    %v1701 = vsel %vm190, %v1692, 0
    %v1704 = vsel %vm190, %v1693, 0
    %v1707 = vsel %vm190, %v1694, 0
    %v1710 = vsel %vm190, %v1695, 0
    %v1713 = vsel %vm190, %v1605, 0
    %1715 = vmatprep.subr.mxu0 0.0
    %1716 = vmatpush1.xpose.msra.mxu0 0.0
    %1717 = vmatprep.subr.mxu0 0.0
    %1718 = vmatpush1.xpose.msra.mxu0 0.0
    %1719 = vmatprep.subr.mxu0 0.0
    %1720 = vmatpush1.xpose.msra.mxu0 0.0
    %1721 = vmatprep.subr.mxu0 0.0
    %1722 = vmatpush1.xpose.msra.mxu0 0.0
    %1723 = vmatprep.subr.mxu0 0.0
    %1724 = vmatpush1.xpose.msra.mxu0 0.0
    %1725 = vmatprep.subr.mxu0 0.0
    %1726 = vmatpush1.xpose.msra.mxu0 0.0
    %1727 = vmatprep.subr.mxu0 0.0
    %1728 = vmatpush1.xpose.msra.mxu0 0.0
    %1729 = vmatprep.subr.mxu0 0.0
    %1730 = vmatpush1.xpose.msra.mxu0 0.0
    %1731 = vmatprep.subr.mxu0 0.0
    %1732 = vmatpush1.xpose.msra.mxu0 0.0
    %1733 = vmatprep.subr.mxu0 0.0
    %1734 = vmatpush1.xpose.msra.mxu0 0.0
    %1735 = vmatprep.subr.mxu0 0.0
    %1736 = vmatpush1.xpose.msra.mxu0 0.0
    %1737 = vmatprep.subr.mxu0 0.0
    %1738 = vmatpush1.xpose.msra.mxu0 0.0
    %1739 = vmatprep.subr.mxu0 0.0
    %1740 = vmatpush1.xpose.msra.mxu0 0.0
    %1741 = vmatprep.subr.mxu0 0.0
    %1742 = vmatpush1.xpose.msra.mxu0 0.0
    %1743 = vmatprep.subr.mxu0 0.0
    %1744 = vmatpush1.xpose.msra.mxu0 0.0
    %1745 = vmatprep.subr.mxu0 0.0
    %1746 = vmatpush1.xpose.msra.mxu0 %v1713
    %1747 = vmatprep.subr.mxu0 0.0
    %1748 = vmatpush2.xpose.msra.mxu0 0.0
    %1749 = vmatprep.subr.mxu0 0.0
    %1750 = vmatpush2.xpose.msra.mxu0 0.0
    %1751 = vmatprep.subr.mxu0 0.0
    %1752 = vmatpush2.xpose.msra.mxu0 0.0
    %1753 = vmatprep.subr.mxu0 0.0
    %1754 = vmatpush2.xpose.msra.mxu0 0.0
    %1755 = vmatprep.subr.mxu0 0.0
    %1756 = vmatpush2.xpose.msra.mxu0 0.0
    %1757 = vmatprep.subr.mxu0 0.0
    %1758 = vmatpush2.xpose.msra.mxu0 0.0
    %1759 = vmatprep.subr.mxu0 0.0
    %1760 = vmatpush2.xpose.msra.mxu0 0.0
    %1761 = vmatprep.subr.mxu0 0.0
    %1762 = vmatpush2.xpose.msra.mxu0 0.0
    %1763 = vmatprep.subr.mxu0 0.0
    %1764 = vmatpush2.xpose.msra.mxu0 0.0
    %1765 = vmatprep.subr.mxu0 0.0
    %1766 = vmatpush2.xpose.msra.mxu0 0.0
    %1767 = vmatprep.subr.mxu0 0.0
    %1768 = vmatpush2.xpose.msra.mxu0 0.0
    %1769 = vmatprep.subr.mxu0 0.0
    %1770 = vmatpush2.xpose.msra.mxu0 0.0
    %1771 = vmatprep.subr.mxu0 0.0
    %1772 = vmatpush2.xpose.msra.mxu0 0.0
    %1773 = vmatprep.subr.mxu0 0.0
    %1774 = vmatpush2.xpose.msra.mxu0 0.0
    %1775 = vmatprep.subr.mxu0 0.0
    %1776 = vmatpush2.xpose.msra.mxu0 0.0
    %1777 = vmatprep.subr.mxu0 0.0
    %1778 = vmatpush2.xpose.msra.mxu0 0.0
    %1779 = vmatprep.mubr.f32.mxu0 0.0
    %1780 = vmatmul.mubr.f32.gmra.mxu0 %v1701
    %v1781 = vpop.f32.mrf.mxu0
    %v1782 = vadd.f32 0.0, %v1781
    %v1783 = vpop.f32.mrf.mxu0
    %1784 = vmatprep.mubr.f32.mxu0 0.0
    %1785 = vmatmul.mubr.f32.gmra.mxu0 %v1704
    %v1786 = vpop.f32.mrf.mxu0
    %v1787 = vadd.f32 0.0, %v1786
    %v1788 = vpop.f32.mrf.mxu0
    %1789 = vmatprep.mubr.f32.mxu0 0.0
    %1790 = vmatmul.mubr.f32.gmra.mxu0 %v1707
    %v1791 = vpop.f32.mrf.mxu0
    %v1792 = vadd.f32 0.0, %v1791
    %v1793 = vpop.f32.mrf.mxu0
    %1794 = vmatprep.mubr.f32.mxu0 0.0
    %1795 = vmatmul.mubr.f32.gmra.mxu0 %v1710
    %v1796 = vpop.f32.mrf.mxu0
    %v1797 = vadd.f32 0.0, %v1796
    %v1798 = vpop.f32.mrf.mxu0
    %1799 = vdwg.mxu0
    %v1801 = vsel %vm190, %v1696, 0
    %v1804 = vsel %vm190, %v1697, 0
    %v1807 = vsel %vm190, %v1698, 0
    %v1810 = vsel %vm190, %v1699, 0
    %v1813 = vsel %vm190, %v1610, 0
    %1815 = vmatprep.subr.mxu0 0.0
    %1816 = vmatpush1.xpose.msra.mxu0 0.0
    %1817 = vmatprep.subr.mxu0 0.0
    %1818 = vmatpush1.xpose.msra.mxu0 0.0
    %1819 = vmatprep.subr.mxu0 0.0
    %1820 = vmatpush1.xpose.msra.mxu0 0.0
    %1821 = vmatprep.subr.mxu0 0.0
    %1822 = vmatpush1.xpose.msra.mxu0 0.0
    %1823 = vmatprep.subr.mxu0 0.0
    %1824 = vmatpush1.xpose.msra.mxu0 0.0
    %1825 = vmatprep.subr.mxu0 0.0
    %1826 = vmatpush1.xpose.msra.mxu0 0.0
    %1827 = vmatprep.subr.mxu0 0.0
    %1828 = vmatpush1.xpose.msra.mxu0 0.0
    %1829 = vmatprep.subr.mxu0 0.0
    %1830 = vmatpush1.xpose.msra.mxu0 0.0
    %1831 = vmatprep.subr.mxu0 0.0
    %1832 = vmatpush1.xpose.msra.mxu0 0.0
    %1833 = vmatprep.subr.mxu0 0.0
    %1834 = vmatpush1.xpose.msra.mxu0 0.0
    %1835 = vmatprep.subr.mxu0 0.0
    %1836 = vmatpush1.xpose.msra.mxu0 0.0
    %1837 = vmatprep.subr.mxu0 0.0
    %1838 = vmatpush1.xpose.msra.mxu0 0.0
    %1839 = vmatprep.subr.mxu0 0.0
    %1840 = vmatpush1.xpose.msra.mxu0 0.0
    %1841 = vmatprep.subr.mxu0 0.0
    %1842 = vmatpush1.xpose.msra.mxu0 0.0
    %1843 = vmatprep.subr.mxu0 0.0
    %1844 = vmatpush1.xpose.msra.mxu0 0.0
    %1845 = vmatprep.subr.mxu0 0.0
    %1846 = vmatpush1.xpose.msra.mxu0 %v1813
    %1847 = vmatprep.subr.mxu0 0.0
    %1848 = vmatpush2.xpose.msra.mxu0 0.0
    %1849 = vmatprep.subr.mxu0 0.0
    %1850 = vmatpush2.xpose.msra.mxu0 0.0
    %1851 = vmatprep.subr.mxu0 0.0
    %1852 = vmatpush2.xpose.msra.mxu0 0.0
    %1853 = vmatprep.subr.mxu0 0.0
    %1854 = vmatpush2.xpose.msra.mxu0 0.0
    %1855 = vmatprep.subr.mxu0 0.0
    %1856 = vmatpush2.xpose.msra.mxu0 0.0
    %1857 = vmatprep.subr.mxu0 0.0
    %1858 = vmatpush2.xpose.msra.mxu0 0.0
    %1859 = vmatprep.subr.mxu0 0.0
    %1860 = vmatpush2.xpose.msra.mxu0 0.0
    %1861 = vmatprep.subr.mxu0 0.0
    %1862 = vmatpush2.xpose.msra.mxu0 0.0
    %1863 = vmatprep.subr.mxu0 0.0
    %1864 = vmatpush2.xpose.msra.mxu0 0.0
    %1865 = vmatprep.subr.mxu0 0.0
    %1866 = vmatpush2.xpose.msra.mxu0 0.0
    %1867 = vmatprep.subr.mxu0 0.0
    %1868 = vmatpush2.xpose.msra.mxu0 0.0
    %1869 = vmatprep.subr.mxu0 0.0
    %1870 = vmatpush2.xpose.msra.mxu0 0.0
    %1871 = vmatprep.subr.mxu0 0.0
    %1872 = vmatpush2.xpose.msra.mxu0 0.0
    %1873 = vmatprep.subr.mxu0 0.0
    %1874 = vmatpush2.xpose.msra.mxu0 0.0
    %1875 = vmatprep.subr.mxu0 0.0
    %1876 = vmatpush2.xpose.msra.mxu0 0.0
    %1877 = vmatprep.subr.mxu0 0.0
    %1878 = vmatpush2.xpose.msra.mxu0 0.0
    %1879 = vmatprep.mubr.f32.mxu0 0.0
    %1880 = vmatmul.mubr.f32.gmra.mxu0 %v1801
    %v1881 = vpop.f32.mrf.mxu0
    %v1882 = vadd.f32 0.0, %v1881
    %v1883 = vpop.f32.mrf.mxu0
    %1884 = vmatprep.mubr.f32.mxu0 0.0
    %1885 = vmatmul.mubr.f32.gmra.mxu0 %v1804
    %v1886 = vpop.f32.mrf.mxu0
    %v1887 = vadd.f32 0.0, %v1886
    %v1888 = vpop.f32.mrf.mxu0
    %1889 = vmatprep.mubr.f32.mxu0 0.0
    %1890 = vmatmul.mubr.f32.gmra.mxu0 %v1807
    %v1891 = vpop.f32.mrf.mxu0
    %v1892 = vadd.f32 0.0, %v1891
    %v1893 = vpop.f32.mrf.mxu0
    %1894 = vmatprep.mubr.f32.mxu0 0.0
    %1895 = vmatmul.mubr.f32.gmra.mxu0 %v1810
    %v1896 = vpop.f32.mrf.mxu0
    %v1897 = vadd.f32 0.0, %v1896
    %v1898 = vpop.f32.mrf.mxu0
    %1899 = vdwg.mxu0
    %v1900 = vmul.f32 %v1782, 0.35355338
    %v1901 = vmul.f32 %v1787, 0.35355338
    %v1902 = vmul.f32 %v1792, 0.35355338
    %v1903 = vmul.f32 %v1797, 0.35355338
    %v1904 = vmul.f32 %v1882, 0.35355338
    %v1905 = vmul.f32 %v1887, 0.35355338
    %v1906 = vmul.f32 %v1892, 0.35355338
    %v1907 = vmul.f32 %v1897, 0.35355338
    %v1908 = vsel %vm730, %v1900, -inf
    %1909 = vmax.xlane.f32.xlu0 %v1908
    %v1910 = vpop.xlane.xlu0 %1909
    %v1911 = vsel %vm730, %v1901, -inf
    %1912 = vmax.xlane.f32.xlu0 %v1911
    %v1913 = vpop.xlane.xlu0 %1912
    %v1914 = vsel %vm730, %v1902, -inf
    %1915 = vmax.xlane.f32.xlu0 %v1914
    %v1916 = vpop.xlane.xlu0 %1915
    %v1917 = vsel %vm730, %v1903, -inf
    %1918 = vmax.xlane.f32.xlu0 %v1917
    %v1919 = vpop.xlane.xlu0 %1918
    %v1920 = vsel %vm730, %v1904, -inf
    %1921 = vmax.xlane.f32.xlu0 %v1920
    %v1922 = vpop.xlane.xlu0 %1921
    %v1923 = vsel %vm730, %v1905, -inf
    %1924 = vmax.xlane.f32.xlu0 %v1923
    %v1925 = vpop.xlane.xlu0 %1924
    %v1926 = vsel %vm730, %v1906, -inf
    %1927 = vmax.xlane.f32.xlu0 %v1926
    %v1928 = vpop.xlane.xlu0 %1927
    %v1929 = vsel %vm730, %v1907, -inf
    %1930 = vmax.xlane.f32.xlu0 %v1929
    %v1931 = vpop.xlane.xlu0 %1930
    %v1932 = vsub.f32 %v1900, %v1910
    %v1933 = vsub.f32 %v1901, %v1913
    %v1934 = vsub.f32 %v1902, %v1916
    %v1935 = vsub.f32 %v1903, %v1919
    %v1936 = vsub.f32 %v1904, %v1922
    %v1937 = vsub.f32 %v1905, %v1925
    %v1938 = vsub.f32 %v1906, %v1928
    %v1939 = vsub.f32 %v1907, %v1931
    %v1940 = vmul.f32 %v1932, 1.442695
    %v1941 = vpow.pop %v1940
    %v1942 = vmul.f32 %v1933, 1.442695
    %v1943 = vpow.pop %v1942
    %v1944 = vmul.f32 %v1934, 1.442695
    %v1945 = vpow.pop %v1944
    %v1946 = vmul.f32 %v1935, 1.442695
    %v1947 = vpow.pop %v1946
    %v1948 = vmul.f32 %v1936, 1.442695
    %v1949 = vpow.pop %v1948
    %v1950 = vmul.f32 %v1937, 1.442695
    %v1951 = vpow.pop %v1950
    %v1952 = vmul.f32 %v1938, 1.442695
    %v1953 = vpow.pop %v1952
    %v1954 = vmul.f32 %v1939, 1.442695
    %v1955 = vpow.pop %v1954
    %v1956 = vsel %vm730, %v1941, 0.0
    %1957 = vadd.xlane.f32.xlu0 %v1956
    %v1958 = vpop.xlane.xlu0 %1957
    %v1959 = vsel %vm730, %v1943, 0.0
    %1960 = vadd.xlane.f32.xlu0 %v1959
    %v1961 = vpop.xlane.xlu0 %1960
    %v1962 = vsel %vm730, %v1945, 0.0
    %1963 = vadd.xlane.f32.xlu0 %v1962
    %v1964 = vpop.xlane.xlu0 %1963
    %v1965 = vsel %vm730, %v1947, 0.0
    %1966 = vadd.xlane.f32.xlu0 %v1965
    %v1967 = vpop.xlane.xlu0 %1966
    %v1968 = vsel %vm730, %v1949, 0.0
    %1969 = vadd.xlane.f32.xlu0 %v1968
    %v1970 = vpop.xlane.xlu0 %1969
    %v1971 = vsel %vm730, %v1951, 0.0
    %1972 = vadd.xlane.f32.xlu0 %v1971
    %v1973 = vpop.xlane.xlu0 %1972
    %v1974 = vsel %vm730, %v1953, 0.0
    %1975 = vadd.xlane.f32.xlu0 %v1974
    %v1976 = vpop.xlane.xlu0 %1975
    %v1977 = vsel %vm730, %v1955, 0.0
    %1978 = vadd.xlane.f32.xlu0 %v1977
    %v1979 = vpop.xlane.xlu0 %1978
    %v1980 = vrcp.pop %v1958
    %v1981 = vmul.f32 %v1941, %v1980
    %v1982 = vrcp.pop %v1961
    %v1983 = vmul.f32 %v1943, %v1982
    %v1984 = vrcp.pop %v1964
    %v1985 = vmul.f32 %v1945, %v1984
    %v1986 = vrcp.pop %v1967
    %v1987 = vmul.f32 %v1947, %v1986
    %v1988 = vrcp.pop %v1970
    %v1989 = vmul.f32 %v1949, %v1988
    %v1990 = vrcp.pop %v1973
    %v1991 = vmul.f32 %v1951, %v1990
    %v1992 = vrcp.pop %v1976
    %v1993 = vmul.f32 %v1953, %v1992
    %v1994 = vrcp.pop %v1979
    %v1995 = vmul.f32 %v1955, %v1994
    %v1997 = vsel %vm730, %v1981, 0
    %v2000 = vsel %vm730, %v1983, 0
    %v2003 = vsel %vm730, %v1985, 0
    %v2006 = vsel %vm730, %v1987, 0
    %2008 = vmatprep.subr.mxu0 0.0
    %2009 = vmatpush1.msra.mxu0 0.0
    %2010 = vmatprep.subr.mxu0 0.0
    %2011 = vmatpush1.msra.mxu0 0.0
    %2012 = vmatprep.subr.mxu0 0.0
    %2013 = vmatpush1.msra.mxu0 0.0
    %2014 = vmatprep.subr.mxu0 0.0
    %2015 = vmatpush1.msra.mxu0 0.0
    %2016 = vmatprep.subr.mxu0 0.0
    %2017 = vmatpush1.msra.mxu0 0.0
    %2018 = vmatprep.subr.mxu0 0.0
    %2019 = vmatpush1.msra.mxu0 0.0
    %2020 = vmatprep.subr.mxu0 0.0
    %2021 = vmatpush1.msra.mxu0 0.0
    %2022 = vmatprep.subr.mxu0 0.0
    %2023 = vmatpush1.msra.mxu0 0.0
    %2024 = vmatprep.subr.mxu0 0.0
    %2025 = vmatpush1.msra.mxu0 0.0
    %2026 = vmatprep.subr.mxu0 0.0
    %2027 = vmatpush1.msra.mxu0 0.0
    %2028 = vmatprep.subr.mxu0 0.0
    %2029 = vmatpush1.msra.mxu0 0.0
    %2030 = vmatprep.subr.mxu0 0.0
    %2031 = vmatpush1.msra.mxu0 0.0
    %2032 = vmatprep.subr.mxu0 0.0
    %2033 = vmatpush1.msra.mxu0 0.0
    %2034 = vmatprep.subr.mxu0 0.0
    %2035 = vmatpush1.msra.mxu0 0.0
    %2036 = vmatprep.subr.mxu0 0.0
    %2037 = vmatpush1.msra.mxu0 0.0
    %2038 = vmatprep.subr.mxu0 0.0
    %2039 = vmatpush1.msra.mxu0 %v1684
    %2040 = vmatprep.subr.mxu0 0.0
    %2041 = vmatpush2.msra.mxu0 0.0
    %2042 = vmatprep.subr.mxu0 0.0
    %2043 = vmatpush2.msra.mxu0 0.0
    %2044 = vmatprep.subr.mxu0 0.0
    %2045 = vmatpush2.msra.mxu0 0.0
    %2046 = vmatprep.subr.mxu0 0.0
    %2047 = vmatpush2.msra.mxu0 0.0
    %2048 = vmatprep.subr.mxu0 0.0
    %2049 = vmatpush2.msra.mxu0 0.0
    %2050 = vmatprep.subr.mxu0 0.0
    %2051 = vmatpush2.msra.mxu0 0.0
    %2052 = vmatprep.subr.mxu0 0.0
    %2053 = vmatpush2.msra.mxu0 0.0
    %2054 = vmatprep.subr.mxu0 0.0
    %2055 = vmatpush2.msra.mxu0 0.0
    %2056 = vmatprep.subr.mxu0 0.0
    %2057 = vmatpush2.msra.mxu0 0.0
    %2058 = vmatprep.subr.mxu0 0.0
    %2059 = vmatpush2.msra.mxu0 0.0
    %2060 = vmatprep.subr.mxu0 0.0
    %2061 = vmatpush2.msra.mxu0 0.0
    %2062 = vmatprep.subr.mxu0 0.0
    %2063 = vmatpush2.msra.mxu0 0.0
    %2064 = vmatprep.subr.mxu0 0.0
    %2065 = vmatpush2.msra.mxu0 0.0
    %2066 = vmatprep.subr.mxu0 0.0
    %2067 = vmatpush2.msra.mxu0 0.0
    %2068 = vmatprep.subr.mxu0 0.0
    %2069 = vmatpush2.msra.mxu0 0.0
    %2070 = vmatprep.subr.mxu0 0.0
    %2071 = vmatpush2.msra.mxu0 0.0
    %2072 = vmatprep.mubr.f32.mxu0 0.0
    %2073 = vmatmul.mubr.f32.gmra.mxu0 %v1997
    %v2074 = vpop.f32.mrf.mxu0
    %v2075 = vadd.f32 0.0, %v2074
    %v2076 = vpop.f32.mrf.mxu0
    %2077 = vmatprep.mubr.f32.mxu0 0.0
    %2078 = vmatmul.mubr.f32.gmra.mxu0 %v2000
    %v2079 = vpop.f32.mrf.mxu0
    %v2080 = vadd.f32 0.0, %v2079
    %v2081 = vpop.f32.mrf.mxu0
    %2082 = vmatprep.mubr.f32.mxu0 0.0
    %2083 = vmatmul.mubr.f32.gmra.mxu0 %v2003
    %v2084 = vpop.f32.mrf.mxu0
    %v2085 = vadd.f32 0.0, %v2084
    %v2086 = vpop.f32.mrf.mxu0
    %2087 = vmatprep.mubr.f32.mxu0 0.0
    %2088 = vmatmul.mubr.f32.gmra.mxu0 %v2006
    %v2089 = vpop.f32.mrf.mxu0
    %v2090 = vadd.f32 0.0, %v2089
    %v2091 = vpop.f32.mrf.mxu0
    %2092 = vdwg.mxu0
    %v2094 = vsel %vm730, %v1989, 0
    %v2097 = vsel %vm730, %v1991, 0
    %v2100 = vsel %vm730, %v1993, 0
    %v2103 = vsel %vm730, %v1995, 0
    %2105 = vmatprep.subr.mxu0 0.0
    %2106 = vmatpush1.msra.mxu0 0.0
    %2107 = vmatprep.subr.mxu0 0.0
    %2108 = vmatpush1.msra.mxu0 0.0
    %2109 = vmatprep.subr.mxu0 0.0
    %2110 = vmatpush1.msra.mxu0 0.0
    %2111 = vmatprep.subr.mxu0 0.0
    %2112 = vmatpush1.msra.mxu0 0.0
    %2113 = vmatprep.subr.mxu0 0.0
    %2114 = vmatpush1.msra.mxu0 0.0
    %2115 = vmatprep.subr.mxu0 0.0
    %2116 = vmatpush1.msra.mxu0 0.0
    %2117 = vmatprep.subr.mxu0 0.0
    %2118 = vmatpush1.msra.mxu0 0.0
    %2119 = vmatprep.subr.mxu0 0.0
    %2120 = vmatpush1.msra.mxu0 0.0
    %2121 = vmatprep.subr.mxu0 0.0
    %2122 = vmatpush1.msra.mxu0 0.0
    %2123 = vmatprep.subr.mxu0 0.0
    %2124 = vmatpush1.msra.mxu0 0.0
    %2125 = vmatprep.subr.mxu0 0.0
    %2126 = vmatpush1.msra.mxu0 0.0
    %2127 = vmatprep.subr.mxu0 0.0
    %2128 = vmatpush1.msra.mxu0 0.0
    %2129 = vmatprep.subr.mxu0 0.0
    %2130 = vmatpush1.msra.mxu0 0.0
    %2131 = vmatprep.subr.mxu0 0.0
    %2132 = vmatpush1.msra.mxu0 0.0
    %2133 = vmatprep.subr.mxu0 0.0
    %2134 = vmatpush1.msra.mxu0 0.0
    %2135 = vmatprep.subr.mxu0 0.0
    %2136 = vmatpush1.msra.mxu0 %v1689
    %2137 = vmatprep.subr.mxu0 0.0
    %2138 = vmatpush2.msra.mxu0 0.0
    %2139 = vmatprep.subr.mxu0 0.0
    %2140 = vmatpush2.msra.mxu0 0.0
    %2141 = vmatprep.subr.mxu0 0.0
    %2142 = vmatpush2.msra.mxu0 0.0
    %2143 = vmatprep.subr.mxu0 0.0
    %2144 = vmatpush2.msra.mxu0 0.0
    %2145 = vmatprep.subr.mxu0 0.0
    %2146 = vmatpush2.msra.mxu0 0.0
    %2147 = vmatprep.subr.mxu0 0.0
    %2148 = vmatpush2.msra.mxu0 0.0
    %2149 = vmatprep.subr.mxu0 0.0
    %2150 = vmatpush2.msra.mxu0 0.0
    %2151 = vmatprep.subr.mxu0 0.0
    %2152 = vmatpush2.msra.mxu0 0.0
    %2153 = vmatprep.subr.mxu0 0.0
    %2154 = vmatpush2.msra.mxu0 0.0
    %2155 = vmatprep.subr.mxu0 0.0
    %2156 = vmatpush2.msra.mxu0 0.0
    %2157 = vmatprep.subr.mxu0 0.0
    %2158 = vmatpush2.msra.mxu0 0.0
    %2159 = vmatprep.subr.mxu0 0.0
    %2160 = vmatpush2.msra.mxu0 0.0
    %2161 = vmatprep.subr.mxu0 0.0
    %2162 = vmatpush2.msra.mxu0 0.0
    %2163 = vmatprep.subr.mxu0 0.0
    %2164 = vmatpush2.msra.mxu0 0.0
    %2165 = vmatprep.subr.mxu0 0.0
    %2166 = vmatpush2.msra.mxu0 0.0
    %2167 = vmatprep.subr.mxu0 0.0
    %2168 = vmatpush2.msra.mxu0 0.0
    %2169 = vmatprep.mubr.f32.mxu0 0.0
    %2170 = vmatmul.mubr.f32.gmra.mxu0 %v2094
    %v2171 = vpop.f32.mrf.mxu0
    %v2172 = vadd.f32 0.0, %v2171
    %v2173 = vpop.f32.mrf.mxu0
    %2174 = vmatprep.mubr.f32.mxu0 0.0
    %2175 = vmatmul.mubr.f32.gmra.mxu0 %v2097
    %v2176 = vpop.f32.mrf.mxu0
    %v2177 = vadd.f32 0.0, %v2176
    %v2178 = vpop.f32.mrf.mxu0
    %2179 = vmatprep.mubr.f32.mxu0 0.0
    %2180 = vmatmul.mubr.f32.gmra.mxu0 %v2100
    %v2181 = vpop.f32.mrf.mxu0
    %v2182 = vadd.f32 0.0, %v2181
    %v2183 = vpop.f32.mrf.mxu0
    %2184 = vmatprep.mubr.f32.mxu0 0.0
    %2185 = vmatmul.mubr.f32.gmra.mxu0 %v2103
    %v2186 = vpop.f32.mrf.mxu0
    %v2187 = vadd.f32 0.0, %v2186
    %v2188 = vpop.f32.mrf.mxu0
    %2189 = vdwg.mxu0
    %v2190 = vmul.f32 %v2075, %v497
    %v2191 = vmul.f32 %v2080, %v501
    %v2192 = vmul.f32 %v2085, %v505
    %v2193 = vmul.f32 %v2090, %v509
    %v2194 = vmul.f32 %v2172, %v497
    %v2195 = vmul.f32 %v2177, %v501
    %v2196 = vmul.f32 %v2182, %v505
    %v2197 = vmul.f32 %v2187, %v509
    %v2198 = vsel %vm190, %v2190, 0.0
    %v2199 = vsel %vm190, %v2191, 0.0
    %v2200 = vadd.f32 %v2198, %v2199
    %v2201 = vsel %vm190, %v2192, 0.0
    %v2202 = vadd.f32 %v2200, %v2201
    %v2203 = vsel %vm190, %v2193, 0.0
    %v2204 = vadd.f32 %v2202, %v2203
    %v2205 = vsel %vm190, %v2194, 0.0
    %v2206 = vsel %vm190, %v2195, 0.0
    %v2207 = vadd.f32 %v2205, %v2206
    %v2208 = vsel %vm190, %v2196, 0.0
    %v2209 = vadd.f32 %v2207, %v2208
    %v2210 = vsel %vm190, %v2197, 0.0
    %v2211 = vadd.f32 %v2209, %v2210
    %v2213 = vsel %vm190, %v2204, 0
    %v2216 = vsel %vm190, %v2211, 0
    %2218 = vmatprep.subr.mxu0 0.0
    %2219 = vmatpush1.msra.mxu0 0.0
    %2220 = vmatprep.subr.mxu0 0.0
    %2221 = vmatpush1.msra.mxu0 0.0
    %2222 = vmatprep.subr.mxu0 0.0
    %2223 = vmatpush1.msra.mxu0 0.0
    %2224 = vmatprep.subr.mxu0 0.0
    %2225 = vmatpush1.msra.mxu0 0.0
    %2226 = vmatprep.subr.mxu0 0.0
    %2227 = vmatpush1.msra.mxu0 0.0
    %2228 = vmatprep.subr.mxu0 0.0
    %2229 = vmatpush1.msra.mxu0 0.0
    %2230 = vmatprep.subr.mxu0 0.0
    %2231 = vmatpush1.msra.mxu0 0.0
    %2232 = vmatprep.subr.mxu0 0.0
    %2233 = vmatpush1.msra.mxu0 0.0
    %2234 = vmatprep.subr.mxu0 0.0
    %2235 = vmatpush1.msra.mxu0 0.0
    %2236 = vmatprep.subr.mxu0 0.0
    %2237 = vmatpush1.msra.mxu0 0.0
    %2238 = vmatprep.subr.mxu0 0.0
    %2239 = vmatpush1.msra.mxu0 0.0
    %2240 = vmatprep.subr.mxu0 0.0
    %2241 = vmatpush1.msra.mxu0 0.0
    %2242 = vmatprep.subr.mxu0 0.0
    %2243 = vmatpush1.msra.mxu0 %v1372
    %2244 = vmatprep.subr.mxu0 0.0
    %2245 = vmatpush1.msra.mxu0 %v1371
    %2246 = vmatprep.subr.mxu0 0.0
    %2247 = vmatpush1.msra.mxu0 %v1370
    %2248 = vmatprep.subr.mxu0 0.0
    %2249 = vmatpush1.msra.mxu0 %v1369
    %2250 = vmatprep.subr.mxu0 0.0
    %2251 = vmatpush2.msra.mxu0 0.0
    %2252 = vmatprep.subr.mxu0 0.0
    %2253 = vmatpush2.msra.mxu0 0.0
    %2254 = vmatprep.subr.mxu0 0.0
    %2255 = vmatpush2.msra.mxu0 0.0
    %2256 = vmatprep.subr.mxu0 0.0
    %2257 = vmatpush2.msra.mxu0 0.0
    %2258 = vmatprep.subr.mxu0 0.0
    %2259 = vmatpush2.msra.mxu0 0.0
    %2260 = vmatprep.subr.mxu0 0.0
    %2261 = vmatpush2.msra.mxu0 0.0
    %2262 = vmatprep.subr.mxu0 0.0
    %2263 = vmatpush2.msra.mxu0 0.0
    %2264 = vmatprep.subr.mxu0 0.0
    %2265 = vmatpush2.msra.mxu0 0.0
    %2266 = vmatprep.subr.mxu0 0.0
    %2267 = vmatpush2.msra.mxu0 0.0
    %2268 = vmatprep.subr.mxu0 0.0
    %2269 = vmatpush2.msra.mxu0 0.0
    %2270 = vmatprep.subr.mxu0 0.0
    %2271 = vmatpush2.msra.mxu0 0.0
    %2272 = vmatprep.subr.mxu0 0.0
    %2273 = vmatpush2.msra.mxu0 0.0
    %2274 = vmatprep.subr.mxu0 0.0
    %2275 = vmatpush2.msra.mxu0 0.0
    %2276 = vmatprep.subr.mxu0 0.0
    %2277 = vmatpush2.msra.mxu0 0.0
    %2278 = vmatprep.subr.mxu0 0.0
    %2279 = vmatpush2.msra.mxu0 0.0
    %2280 = vmatprep.subr.mxu0 0.0
    %2281 = vmatpush2.msra.mxu0 0.0
    %2282 = vmatprep.mubr.f32.mxu0 0.0
    %2283 = vmatmul.mubr.f32.gmra.mxu0 %v2213
    %v2284 = vpop.f32.mrf.mxu0
    %v2285 = vadd.f32 0.0, %v2284
    %v2286 = vpop.f32.mrf.mxu0
    %2287 = vmatprep.mubr.f32.mxu0 0.0
    %2288 = vmatmul.mubr.f32.gmra.mxu0 %v2216
    %v2289 = vpop.f32.mrf.mxu0
    %v2290 = vadd.f32 0.0, %v2289
    %v2291 = vpop.f32.mrf.mxu0
    %2292 = vdwg.mxu0
    %v2293 = vadd.f32 %v1351, %v2285
    %v2294 = vadd.f32 %v1352, %v2290
    %v2295 = vlaneseq
    %v2296 = vshrl.u32 %v2295, 7
    %v2297 = vsub.s32 0, %v2296
    %v2298 = vrot.slane %v1390, %v2297
    %v2299 = vadd.f32 %v2293, %v2298
    %v2300 = vadd.f32 %v2294, %v2298
    %v2301 = vsel %vm190, %v2299, 0.0
    %2302 = vadd.xlane.f32.xlu0 %v2301
    %v2303 = vpop.xlane.xlu0 %2302
    %v2304 = vsel %vm190, %v2300, 0.0
    %2305 = vadd.xlane.f32.xlu0 %v2304
    %v2306 = vpop.xlane.xlu0 %2305
    %v2307 = vmul.f32 %v2303, %v197
    %v2308 = vmul.f32 %v2306, %v197
    %v2309 = vsub.f32 %v2299, %v2307
    %v2310 = vsub.f32 %v2300, %v2308
    %v2311 = vmul.f32 %v2309, %v2309
    %v2312 = vmul.f32 %v2310, %v2310
    %v2313 = vsel %vm190, %v2311, 0.0
    %2314 = vadd.xlane.f32.xlu0 %v2313
    %v2315 = vpop.xlane.xlu0 %2314
    %v2316 = vsel %vm190, %v2312, 0.0
    %2317 = vadd.xlane.f32.xlu0 %v2316
    %v2318 = vpop.xlane.xlu0 %2317
    %v2319 = vmul.f32 %v2315, %v210
    %v2320 = vmul.f32 %v2318, %v210
    %v2321 = vlaneseq
    %v2322 = vshrl.u32 %v2321, 7
    %v2323 = vsub.s32 0, %v2322
    %v2324 = vrot.slane %v1394, %v2323
    %v2325 = vmul.f32 %v2324, %v2309
    %v2326 = vmul.f32 %v2324, %v2310
    %v2327 = vrsqrt.pop %v2319
    %v2328 = vmul.f32 %v2319, %v2327
    %vm2329 = vcmp.eq.f32.partialorder %v2319, inf
    %v2330 = vsel %vm2329, %v2319, %v2328
    %vm2331 = vcmp.eq.f32.partialorder %v2319, 0.0
    %v2332 = vand.u32 %v2319, 2147483648
    %v2333 = vsel %vm2331, %v2332, %v2330
    %v2334 = vrsqrt.pop %v2320
    %v2335 = vmul.f32 %v2320, %v2334
    %vm2336 = vcmp.eq.f32.partialorder %v2320, inf
    %v2337 = vsel %vm2336, %v2320, %v2335
    %vm2338 = vcmp.eq.f32.partialorder %v2320, 0.0
    %v2339 = vand.u32 %v2320, 2147483648
    %v2340 = vsel %vm2338, %v2339, %v2337
    %v2341 = vadd.f32 %v2333, 1e-05
    %v2342 = vadd.f32 %v2340, 1e-05
    %v2343 = vrcp.pop %v2341
    %v2344 = vmul.f32 %v2325, %v2343
    %v2345 = vrcp.pop %v2342
    %v2346 = vmul.f32 %v2326, %v2345
    %v2347 = vlaneseq
    %v2348 = vshrl.u32 %v2347, 7
    %v2349 = vsub.s32 0, %v2348
    %v2350 = vrot.slane %v1395, %v2349
    %v2351 = vadd.f32 %v2344, %v2350
    %v2352 = vadd.f32 %v2346, %v2350
    %v2353 = vlaneseq
    %v2354 = vshrl.u32 %v2353, 7
    %v2355 = vsub.s32 0, %v2354
    %v2356 = vrot.slane %v1396, %v2355
    %v2358 = vsel %vm190, %v2351, 0
    %v2361 = vsel %vm190, %v2352, 0
    %2363 = vmatprep.subr.mxu0 0.0
    %2364 = vmatpush1.msra.mxu0 0.0
    %2365 = vmatprep.subr.mxu0 0.0
    %2366 = vmatpush1.msra.mxu0 0.0
    %2367 = vmatprep.subr.mxu0 0.0
    %2368 = vmatpush1.msra.mxu0 0.0
    %2369 = vmatprep.subr.mxu0 0.0
    %2370 = vmatpush1.msra.mxu0 0.0
    %2371 = vmatprep.subr.mxu0 0.0
    %2372 = vmatpush1.msra.mxu0 0.0
    %2373 = vmatprep.subr.mxu0 0.0
    %2374 = vmatpush1.msra.mxu0 0.0
    %2375 = vmatprep.subr.mxu0 0.0
    %2376 = vmatpush1.msra.mxu0 0.0
    %2377 = vmatprep.subr.mxu0 0.0
    %2378 = vmatpush1.msra.mxu0 0.0
    %2379 = vmatprep.subr.mxu0 0.0
    %2380 = vmatpush1.msra.mxu0 0.0
    %2381 = vmatprep.subr.mxu0 0.0
    %2382 = vmatpush1.msra.mxu0 0.0
    %2383 = vmatprep.subr.mxu0 0.0
    %2384 = vmatpush1.msra.mxu0 0.0
    %2385 = vmatprep.subr.mxu0 0.0
    %2386 = vmatpush1.msra.mxu0 0.0
    %2387 = vmatprep.subr.mxu0 0.0
    %2388 = vmatpush1.msra.mxu0 %v1377
    %2389 = vmatprep.subr.mxu0 0.0
    %2390 = vmatpush1.msra.mxu0 %v1376
    %2391 = vmatprep.subr.mxu0 0.0
    %2392 = vmatpush1.msra.mxu0 %v1375
    %2393 = vmatprep.subr.mxu0 0.0
    %2394 = vmatpush1.msra.mxu0 %v1374
    %2395 = vmatprep.subr.mxu0 0.0
    %2396 = vmatpush2.msra.mxu0 0.0
    %2397 = vmatprep.subr.mxu0 0.0
    %2398 = vmatpush2.msra.mxu0 0.0
    %2399 = vmatprep.subr.mxu0 0.0
    %2400 = vmatpush2.msra.mxu0 0.0
    %2401 = vmatprep.subr.mxu0 0.0
    %2402 = vmatpush2.msra.mxu0 0.0
    %2403 = vmatprep.subr.mxu0 0.0
    %2404 = vmatpush2.msra.mxu0 0.0
    %2405 = vmatprep.subr.mxu0 0.0
    %2406 = vmatpush2.msra.mxu0 0.0
    %2407 = vmatprep.subr.mxu0 0.0
    %2408 = vmatpush2.msra.mxu0 0.0
    %2409 = vmatprep.subr.mxu0 0.0
    %2410 = vmatpush2.msra.mxu0 0.0
    %2411 = vmatprep.subr.mxu0 0.0
    %2412 = vmatpush2.msra.mxu0 0.0
    %2413 = vmatprep.subr.mxu0 0.0
    %2414 = vmatpush2.msra.mxu0 0.0
    %2415 = vmatprep.subr.mxu0 0.0
    %2416 = vmatpush2.msra.mxu0 0.0
    %2417 = vmatprep.subr.mxu0 0.0
    %2418 = vmatpush2.msra.mxu0 0.0
    %2419 = vmatprep.subr.mxu0 0.0
    %2420 = vmatpush2.msra.mxu0 0.0
    %2421 = vmatprep.subr.mxu0 0.0
    %2422 = vmatpush2.msra.mxu0 0.0
    %2423 = vmatprep.subr.mxu0 0.0
    %2424 = vmatpush2.msra.mxu0 0.0
    %2425 = vmatprep.subr.mxu0 0.0
    %2426 = vmatpush2.msra.mxu0 0.0
    %2427 = vmatprep.mubr.f32.mxu0 0.0
    %2428 = vmatmul.mubr.f32.gmra.mxu0 %v2358
    %v2429 = vpop.f32.mrf.mxu0
    %v2430 = vadd.f32 %v2356, %v2429
    %v2431 = vpop.f32.mrf.mxu0
    %2432 = vmatprep.mubr.f32.mxu0 0.0
    %2433 = vmatmul.mubr.f32.gmra.mxu0 %v2361
    %v2434 = vpop.f32.mrf.mxu0
    %v2435 = vadd.f32 %v2356, %v2434
    %v2436 = vpop.f32.mrf.mxu0
    %2437 = vdwg.mxu0
    %v2438 = vmax.f32 %v2430, 0.0
    %v2439 = vmax.f32 %v2435, 0.0
    %v2441 = vsel %vm1263, %v2438, 0
    %v2444 = vsel %vm1263, %v2439, 0
    %2446 = vmatprep.subr.mxu0 0.0
    %2447 = vmatpush1.msra.mxu0 0.0
    %2448 = vmatprep.subr.mxu0 0.0
    %2449 = vmatpush1.msra.mxu0 0.0
    %2450 = vmatprep.subr.mxu0 0.0
    %2451 = vmatpush1.msra.mxu0 0.0
    %2452 = vmatprep.subr.mxu0 0.0
    %2453 = vmatpush1.msra.mxu0 0.0
    %2454 = vmatprep.subr.mxu0 0.0
    %2455 = vmatpush1.msra.mxu0 0.0
    %2456 = vmatprep.subr.mxu0 0.0
    %2457 = vmatpush1.msra.mxu0 0.0
    %2458 = vmatprep.subr.mxu0 0.0
    %2459 = vmatpush1.msra.mxu0 0.0
    %2460 = vmatprep.subr.mxu0 0.0
    %2461 = vmatpush1.msra.mxu0 0.0
    %2462 = vmatprep.subr.mxu0 0.0
    %2463 = vmatpush1.msra.mxu0 %v1386
    %2464 = vmatprep.subr.mxu0 0.0
    %2465 = vmatpush1.msra.mxu0 %v1385
    %2466 = vmatprep.subr.mxu0 0.0
    %2467 = vmatpush1.msra.mxu0 %v1384
    %2468 = vmatprep.subr.mxu0 0.0
    %2469 = vmatpush1.msra.mxu0 %v1383
    %2470 = vmatprep.subr.mxu0 0.0
    %2471 = vmatpush1.msra.mxu0 %v1382
    %2472 = vmatprep.subr.mxu0 0.0
    %2473 = vmatpush1.msra.mxu0 %v1381
    %2474 = vmatprep.subr.mxu0 0.0
    %2475 = vmatpush1.msra.mxu0 %v1380
    %2476 = vmatprep.subr.mxu0 0.0
    %2477 = vmatpush1.msra.mxu0 %v1379
    %2478 = vmatprep.subr.mxu0 0.0
    %2479 = vmatpush2.msra.mxu0 0.0
    %2480 = vmatprep.subr.mxu0 0.0
    %2481 = vmatpush2.msra.mxu0 0.0
    %2482 = vmatprep.subr.mxu0 0.0
    %2483 = vmatpush2.msra.mxu0 0.0
    %2484 = vmatprep.subr.mxu0 0.0
    %2485 = vmatpush2.msra.mxu0 0.0
    %2486 = vmatprep.subr.mxu0 0.0
    %2487 = vmatpush2.msra.mxu0 0.0
    %2488 = vmatprep.subr.mxu0 0.0
    %2489 = vmatpush2.msra.mxu0 0.0
    %2490 = vmatprep.subr.mxu0 0.0
    %2491 = vmatpush2.msra.mxu0 0.0
    %2492 = vmatprep.subr.mxu0 0.0
    %2493 = vmatpush2.msra.mxu0 0.0
    %2494 = vmatprep.subr.mxu0 0.0
    %2495 = vmatpush2.msra.mxu0 0.0
    %2496 = vmatprep.subr.mxu0 0.0
    %2497 = vmatpush2.msra.mxu0 0.0
    %2498 = vmatprep.subr.mxu0 0.0
    %2499 = vmatpush2.msra.mxu0 0.0
    %2500 = vmatprep.subr.mxu0 0.0
    %2501 = vmatpush2.msra.mxu0 0.0
    %2502 = vmatprep.subr.mxu0 0.0
    %2503 = vmatpush2.msra.mxu0 0.0
    %2504 = vmatprep.subr.mxu0 0.0
    %2505 = vmatpush2.msra.mxu0 0.0
    %2506 = vmatprep.subr.mxu0 0.0
    %2507 = vmatpush2.msra.mxu0 0.0
    %2508 = vmatprep.subr.mxu0 0.0
    %2509 = vmatpush2.msra.mxu0 0.0
    %2510 = vmatprep.mubr.f32.mxu0 0.0
    %2511 = vmatmul.mubr.f32.gmra.mxu0 %v2441
    %v2512 = vpop.f32.mrf.mxu0
    %v2513 = vadd.f32 0.0, %v2512
    %v2514 = vpop.f32.mrf.mxu0
    %2515 = vmatprep.mubr.f32.mxu0 0.0
    %2516 = vmatmul.mubr.f32.gmra.mxu0 %v2444
    %v2517 = vpop.f32.mrf.mxu0
    %v2518 = vadd.f32 0.0, %v2517
    %v2519 = vpop.f32.mrf.mxu0
    %2520 = vdwg.mxu0
    %v2521 = vadd.f32 %v2299, %v2513
    %v2522 = vadd.f32 %v2300, %v2518
    %v2523 = vlaneseq
    %v2524 = vshrl.u32 %v2523, 7
    %v2525 = vsub.s32 0, %v2524
    %v2526 = vrot.slane %v1391, %v2525
    %v2527 = vadd.f32 %v2521, %v2526
    %v2528 = vadd.f32 %v2522, %v2526
    %v2529 = vld [vmem:[#allocation11 + $0x12] sm:$0x1]
    %v2530 = vld [vmem:[#allocation11 + $0x13] sm:$0x1]
    %v2531 = vsel %vm190, %v2527, 0.0
    %2532 = vadd.xlane.f32.xlu0 %v2531
    %v2533 = vpop.xlane.xlu0 %2532
    %v2534 = vsel %vm190, %v2528, 0.0
    %2535 = vadd.xlane.f32.xlu0 %v2534
    %v2536 = vpop.xlane.xlu0 %2535
    %v2537 = vmul.f32 %v2533, %v197
    %v2538 = vmul.f32 %v2536, %v197
    %v2539 = vsub.f32 %v2527, %v2537
    %v2540 = vsub.f32 %v2528, %v2538
    %v2541 = vmul.f32 %v2539, %v2539
    %v2542 = vmul.f32 %v2540, %v2540
    %v2543 = vsel %vm190, %v2541, 0.0
    %2544 = vadd.xlane.f32.xlu0 %v2543
    %v2545 = vpop.xlane.xlu0 %2544
    %v2546 = vsel %vm190, %v2542, 0.0
    %2547 = vadd.xlane.f32.xlu0 %v2546
    %v2548 = vpop.xlane.xlu0 %2547
    %v2549 = vmul.f32 %v2545, %v210
    %v2550 = vmul.f32 %v2548, %v210
    %v2551 = vlaneseq
    %v2552 = vshrl.u32 %v2551, 7
    %v2553 = vsub.s32 0, %v2552
    %v2554 = vrot.slane %v2529, %v2553
    %v2555 = vmul.f32 %v2554, %v2539
    %v2556 = vmul.f32 %v2554, %v2540
    %v2557 = vrsqrt.pop %v2549
    %v2558 = vmul.f32 %v2549, %v2557
    %vm2559 = vcmp.eq.f32.partialorder %v2549, inf
    %v2560 = vsel %vm2559, %v2549, %v2558
    %vm2561 = vcmp.eq.f32.partialorder %v2549, 0.0
    %v2562 = vand.u32 %v2549, 2147483648
    %v2563 = vsel %vm2561, %v2562, %v2560
    %v2564 = vrsqrt.pop %v2550
    %v2565 = vmul.f32 %v2550, %v2564
    %vm2566 = vcmp.eq.f32.partialorder %v2550, inf
    %v2567 = vsel %vm2566, %v2550, %v2565
    %vm2568 = vcmp.eq.f32.partialorder %v2550, 0.0
    %v2569 = vand.u32 %v2550, 2147483648
    %v2570 = vsel %vm2568, %v2569, %v2567
    %v2571 = vadd.f32 %v2563, 1e-05
    %v2572 = vadd.f32 %v2570, 1e-05
    %v2573 = vrcp.pop %v2571
    %v2574 = vmul.f32 %v2555, %v2573
    %v2575 = vrcp.pop %v2572
    %v2576 = vmul.f32 %v2556, %v2575
    %v2577 = vlaneseq
    %v2578 = vshrl.u32 %v2577, 7
    %v2579 = vsub.s32 0, %v2578
    %v2580 = vrot.slane %v2530, %v2579
    %v2581 = vadd.f32 %v2574, %v2580
    %v2582 = vadd.f32 %v2576, %v2580
    %2583 = vst.msk [vmem:[#allocation13] sm:$0xff] %vm190, %v2581
    %2584 = vst.msk [vmem:[#allocation13 + $0x8] sm:$0xff] %vm190, %v2582
    %2585 = vst.msk [vmem:[#allocation14] sm:$0xff] %vm730, %v1981
    %2586 = vst.msk [vmem:[#allocation14 + $0x8] sm:$0xff] %vm730, %v1983
    %2587 = vst.msk [vmem:[#allocation14 + $0x10] sm:$0xff] %vm730, %v1985
    %2588 = vst.msk [vmem:[#allocation14 + $0x18] sm:$0xff] %vm730, %v1987
    %2589 = vst.msk [vmem:[#allocation14 + $0x20] sm:$0xff] %vm730, %v1989
    %2590 = vst.msk [vmem:[#allocation14 + $0x28] sm:$0xff] %vm730, %v1991
    %2591 = vst.msk [vmem:[#allocation14 + $0x30] sm:$0xff] %vm730, %v1993
    %2592 = vst.msk [vmem:[#allocation14 + $0x38] sm:$0xff] %vm730, %v1995
    // Predicated region
    $region70: #{tpu_custom_call.1} parent=1 // pred_check
      _
    $region71: #{tpu_custom_call.1} parent=1 // pred_check_branch
      %2594 = sbr.rel (0) target = $region73
    $region72: #{tpu_custom_call.1} parent=1 // pred_region
      %s2596 = ssub.s32 256, 256
      %2597 = vsyncadd [#allocation4], %s2596
      %s2598 = sshll.u32 [#allocation13], 4
      %s2599 = int_to_ptr.vmem [resolvable:$true] %s2598
      %2604 = dma.vmem_to_hbm [thread:$0]  %s2599, 256, %s11, [#allocation4], 128, 128, 8
    $region73: #{tpu_custom_call.1} parent=1 // pred_fallthru
      _
    // Predicated region
    $region74: #{tpu_custom_call.1} parent=1 // pred_check
      _
    $region75: #{tpu_custom_call.1} parent=1 // pred_check_branch
      %2606 = sbr.rel (0) target = $region77
    $region76: #{tpu_custom_call.1} parent=1 // pred_region
      %s2608 = ssub.s32 1024, 1024
      %2609 = vsyncadd [#allocation15], %s2608
      %s2610 = sshll.u32 [#allocation14], 4
      %s2611 = int_to_ptr.vmem [resolvable:$true] %s2610
      %2616 = dma.vmem_to_hbm [thread:$0]  %s2611, 1024, %s12, [#allocation15], 128, 128, 8
    $region77: #{tpu_custom_call.1} parent=1 // pred_fallthru
      _
    // Predicated region
    $region78: #{tpu_custom_call.1} parent=1 // pred_check
      _
    $region79: #{tpu_custom_call.1} parent=1 // pred_check_branch
      %2618 = sbr.rel (0) target = $region81
    $region80: #{tpu_custom_call.1} parent=1 // pred_region
      %2619 = dma.done [#allocation4], 256
    $region81: #{tpu_custom_call.1} parent=1 // pred_fallthru
      _
    // Predicated region
    $region82: #{tpu_custom_call.1} parent=1 // pred_check
      _
    $region83: #{tpu_custom_call.1} parent=1 // pred_check_branch
      %2621 = sbr.rel (0) target = $region85
    $region84: #{tpu_custom_call.1} parent=1 // pred_region
      %2622 = dma.done [#allocation15], 1024
    $region85: #{tpu_custom_call.1} parent=1 // pred_fallthru
      _
    %2623 = vsyncpa [#allocation3], 1
    %2624 = vsyncpa [#allocation6], 1
    %2625 = vsyncpa [#allocation9], 1
    %2626 = vsyncpa [#allocation12], 1
    %2627 = vsyncpa [#allocation4], 1
    %2628 = vsyncpa [#allocation15], 1

</llo_original>
